<compile_context>
chip_gen: v7x
topology: tpu7x:2x2x1
jax: 0.10.0
libtpu: 0.0.40
codegen_flags: <defaults>
</compile_context>

<pallas_src>
import functools

import jax
import jax.numpy as jnp
from jax.experimental import pallas as pl
from jax.experimental.pallas import tpu as pltpu


# ----------------------------------------------------------------------------
# Kernel
# ----------------------------------------------------------------------------
def gnn_fused_kernel(a_in_ref, a_out_ref, h_ref,
                     w_ein_ref, b_ein_ref, w_eout_ref, b_eout_ref,
                     b_iah_ref, b_oah_ref,
                     wg_in_ref, wg_out_ref, wg_h_ref, bg_ref,
                     out_ref, *, num_steps, compute_dtype):
    f32 = jnp.float32
    cd = compute_dtype
    BB, N, Hp = h_ref.shape
    M = BB * N

    # Load everything once; it stays resident in VMEM for all `num_steps` steps.
    a_in = a_in_ref[...]        # (BB, N, N)   compute_dtype
    a_out = a_out_ref[...]      # (BB, N, N)
    w_ein = w_ein_ref[...]      # (Hp, Hp)     compute_dtype
    w_eout = w_eout_ref[...]    # (Hp, Hp)
    wg_in = wg_in_ref[...]      # (Hp, 4*Hp)   compute_dtype
    wg_out = wg_out_ref[...]    # (Hp, 4*Hp)
    wg_h = wg_h_ref[...]        # (Hp, 4*Hp)
    b_ein = b_ein_ref[...]      # (1, Hp)      f32
    b_eout = b_eout_ref[...]    # (1, Hp)
    b_iah = b_iah_ref[...]      # (1, Hp)
    b_oah = b_oah_ref[...]      # (1, Hp)
    bg = bg_ref[...]            # (1, 4*Hp)    f32

    def cell(_, h_flat):        # h_flat: (M, Hp) float32 carry
        h_mm = h_flat.astype(cd)

        # linear_edge_in / linear_edge_out on the fused (BB*N)-row block.
        ein = jnp.dot(h_mm, w_ein, preferred_element_type=f32) + b_ein
        eout = jnp.dot(h_mm, w_eout, preferred_element_type=f32) + b_eout

        # Per-graph adjacency products (these stay batched on the MXU).
        inp_in = jnp.einsum('bij,bjh->bih', a_in,
                            ein.reshape(BB, N, Hp).astype(cd),
                            preferred_element_type=f32).reshape(M, Hp) + b_iah
        inp_out = jnp.einsum('bij,bjh->bih', a_out,
                             eout.reshape(BB, N, Hp).astype(cd),
                             preferred_element_type=f32).reshape(M, Hp) + b_oah

        # All gate linears fused into one (M, 4*Hp) result:
        #   g = [ (gi+gh)_r | (gi+gh)_i | gi_n | gh_n ]
        g = (jnp.dot(inp_in.astype(cd), wg_in, preferred_element_type=f32)
             + jnp.dot(inp_out.astype(cd), wg_out, preferred_element_type=f32)
             + jnp.dot(h_mm, wg_h, preferred_element_type=f32)
             + bg)

        # 128-aligned column slices (Hp is a multiple of 128) -> no relayout.
        s_r = g[:, 0 * Hp:1 * Hp]
        s_i = g[:, 1 * Hp:2 * Hp]
        gi_n = g[:, 2 * Hp:3 * Hp]
        gh_n = g[:, 3 * Hp:4 * Hp]

        resetgate = jax.nn.sigmoid(s_r)
        inputgate = jax.nn.sigmoid(s_i)
        newgate = jnp.tanh(gi_n + resetgate * gh_n)
        return newgate + inputgate * (h_flat - newgate)

    h0 = h_ref[...].reshape(M, Hp).astype(f32)
    if num_steps == 1:
        hT = cell(0, h0)
    else:
        hT = jax.lax.fori_loop(0, num_steps, cell, h0,
                               unroll=bool(num_steps <= 4))
    out_ref[...] = hT.reshape(BB, N, Hp).astype(out_ref.dtype)


# ----------------------------------------------------------------------------
# Host-side weight fusion / padding
# ----------------------------------------------------------------------------
def _round_up(x, m):
    return ((x + m - 1) // m) * m


def _pick_bb(B, N):
    """Batch-block size: BB*N ~ 128 rows per matmul, but keep >= 2 grid steps
    when possible so both TensorCores are used on v7x megacore."""
    target = max(1, 128 // max(N, 1))
    cap = min(B, target)
    if B >= 2:
        cap = min(cap, max(1, B // 2))
    for bb in range(cap, 0, -1):
        if B % bb == 0:
            return bb
    return 1


def _pack_params(p, H, Hp, compute_dtype):
    """Fuse + pad the raw GNN parameters for the kernel.

    Returns:
      (w_ein, b_ein, w_eout, b_eout, b_iah, b_oah, wg_in, wg_out, wg_h, bg)
    where wg_* are (Hp, 4*Hp) with column blocks [r(gi+gh), i(gi+gh), gi_n, gh_n].
    """
    f32 = jnp.float32

    def padw(w):                                   # 2-D -> (Hp, Hp) zero-padded
        w = jnp.asarray(w, f32)
        return jnp.pad(w, ((0, Hp - w.shape[0]), (0, Hp - w.shape[1])))

    def padb(b):                                   # 1-D -> (1, Hp) zero-padded
        b = jnp.asarray(b, f32)
        return jnp.pad(b, (0, Hp - b.shape[0]))[None, :]

    Tih = jnp.asarray(p["w_ih"], f32).T            # (2H, 3H)
    T1 = jnp.asarray(p["w_in1"], f32).T            # (3H, 3H)
    T2 = jnp.asarray(p["w_in2"], f32).T            # (3H, 3H)
    Thh = jnp.asarray(p["w_hh"], f32).T            # (H, 3H)

    Tih_a, Tih_b = Tih[:H], Tih[H:2 * H]
    T1_a, T1_b, T1_c = T1[:H], T1[H:2 * H], T1[2 * H:3 * H]
    T2_a, T2_b, T2_c = T2[:H], T2[H:2 * H], T2[2 * H:3 * H]

    # gi = in@gi_in + out@gi_out + h@gi_h + b_gi ;  gh likewise.
    gi_in, gi_out, gi_h = Tih_a + T1_a, Tih_b + T1_b, T1_c
    gh_in, gh_out, gh_h = T2_a, T2_b, Thh + T2_c
    b_gi = jnp.asarray(p["b_ih"], f32) + jnp.asarray(p["b_in1"], f32)
    b_gh = jnp.asarray(p["b_hh"], f32) + jnp.asarray(p["b_in2"], f32)

    r, i, n = slice(0, H), slice(H, 2 * H), slice(2 * H, 3 * H)

    def pack_w(wi, wh):
        blocks = [(wi + wh)[:, r], (wi + wh)[:, i], wi[:, n], wh[:, n]]
        return jnp.concatenate([padw(b) for b in blocks], axis=1)   # (Hp, 4*Hp)

    wg_in = pack_w(gi_in, gh_in)
    wg_out = pack_w(gi_out, gh_out)
    wg_h = pack_w(gi_h, gh_h)
    bg = jnp.concatenate([
        jnp.pad((b_gi + b_gh)[r], (0, Hp - H)),
        jnp.pad((b_gi + b_gh)[i], (0, Hp - H)),
        jnp.pad(b_gi[n], (0, Hp - H)),
        jnp.pad(b_gh[n], (0, Hp - H)),
    ])[None, :]                                                     # (1, 4*Hp)

    cd = compute_dtype
    return (
        padw(jnp.asarray(p["w_ein"], f32).T).astype(cd), padb(p["b_ein"]),
        padw(jnp.asarray(p["w_eout"], f32).T).astype(cd), padb(p["b_eout"]),
        padb(p["b_iah"]), padb(p["b_oah"]),
        wg_in.astype(cd), wg_out.astype(cd), wg_h.astype(cd), bg,
    )


def _const_spec(shape):
    nd = len(shape)
    return pl.BlockSpec(shape, lambda b, _nd=nd: (0,) * _nd)


# ----------------------------------------------------------------------------
# Forward wrapper
# ----------------------------------------------------------------------------
def gnn_forward(A, hidden, params, step=1, compute_dtype=jnp.float32):
    """Run `step` GNNCell iterations. `params` is the raw parameter dict."""
    B, N, H = hidden.shape
    assert A.shape == (B, N, 2 * N)
    Hp = _round_up(max(H, 1), 128)
    BB = _pick_bb(B, N)
    cd = compute_dtype

    # Host-side prep (fused into surrounding XLA; free relative to the kernel).
    A = A.astype(jnp.float32)
    A_in = A[:, :, :N].astype(cd)
    A_out = A[:, :, N:2 * N].astype(cd)
    h_p = jnp.pad(hidden.astype(jnp.float32), ((0, 0), (0, 0), (0, Hp - H)))
    packed = _pack_params(params, H, Hp, cd)

    in_specs = [
        pl.BlockSpec((BB, N, N), lambda b: (b, 0, 0)),
        pl.BlockSpec((BB, N, N), lambda b: (b, 0, 0)),
        pl.BlockSpec((BB, N, Hp), lambda b: (b, 0, 0)),
    ] + [_const_spec(p.shape) for p in packed]

    kernel = functools.partial(gnn_fused_kernel,
                               num_steps=int(step), compute_dtype=cd)

    out = pl.pallas_call(
        kernel,
        out_shape=jax.ShapeDtypeStruct((B, N, Hp), jnp.float32),
        grid=(B // BB,),
        in_specs=in_specs,
        out_specs=pl.BlockSpec((BB, N, Hp), lambda b: (b, 0, 0)),
        compiler_params=pltpu.CompilerParams(
            dimension_semantics=("parallel",),
            vmem_limit_bytes=48 * 1024 * 1024,
        ),
    )(A_in, A_out, h_p, *packed)

    return out[:, :, :H].astype(hidden.dtype)


# ----------------------------------------------------------------------------
# Parameters + pure-JAX reference (mirrors the PyTorch module)
# ----------------------------------------------------------------------------
def make_params(key, H):
    """Deterministic synthetic parameters (shapes per GNN.__init__).
    linear_edge_f exists in __init__ but is unused in forward -> omitted."""
    gate, inp = 3 * H, 2 * H
    ks = jax.random.split(key, 14)

    def rnd(k, shape, scale=0.1):
        return (scale * jax.random.normal(k, shape)).astype(jnp.float32)

    return dict(
        w_ein=rnd(ks[0], (H, H)), b_ein=rnd(ks[1], (H,)),
        w_eout=rnd(ks[2], (H, H)), b_eout=rnd(ks[3], (H,)),
        b_iah=rnd(ks[4], (H,)), b_oah=rnd(ks[5], (H,)),
        w_ih=rnd(ks[6], (gate, inp)), b_ih=rnd(ks[7], (gate,)),
        w_hh=rnd(ks[8], (gate, H)), b_hh=rnd(ks[9], (gate,)),
        w_in1=rnd(ks[10], (gate, gate)), b_in1=rnd(ks[11], (gate,)),
        w_in2=rnd(ks[12], (gate, gate)), b_in2=rnd(ks[13], (gate,)),
    )


def gnn_cell_ref(A, h, p):
    """Pure-JAX reference mirroring the PyTorch GNNCell."""
    N = A.shape[1]
    ein = h @ p["w_ein"].T + p["b_ein"]
    eout = h @ p["w_eout"].T + p["b_eout"]
    input_in = jnp.matmul(A[:, :, :N], ein) + p["b_iah"]
    input_out = jnp.matmul(A[:, :, N:2 * N], eout) + p["b_oah"]
    inputs = jnp.concatenate([input_in, input_out], axis=2)
    test = jnp.concatenate([inputs, h], axis=2)
    test1 = test @ p["w_in1"].T + p["b_in1"]
    test2 = test @ p["w_in2"].T + p["b_in2"]
    gi = inputs @ p["w_ih"].T + p["b_ih"] + test1
    gh = h @ p["w_hh"].T + p["b_hh"] + test2
    i_r, i_i, i_n = jnp.split(gi, 3, axis=2)
    h_r, h_i, h_n = jnp.split(gh, 3, axis=2)
    resetgate = jax.nn.sigmoid(i_r + h_r)
    inputgate = jax.nn.sigmoid(i_i + h_i)
    newgate = jnp.tanh(i_n + resetgate * h_n)
    return newgate + inputgate * (h - newgate)


if __name__ == "__main__":
    B, N, H, STEP = 16, 8, 32, 2

    key = jax.random.PRNGKey(0)
    k_a, k_h, k_p = jax.random.split(key, 3)
    A = jax.random.uniform(k_a, (B, N, 2 * N), dtype=jnp.float32)
    hidden = jax.random.normal(k_h, (B, N, H), dtype=jnp.float32)
    params = make_params(k_p, H)

    out = gnn_forward(A, hidden, params, step=STEP)
    out = jax.block_until_ready(out)

    # Verify against the pure-JAX reference.
    ref = hidden
    for _ in range(STEP):
        ref = gnn_cell_ref(A, ref, params)
    assert out.shape == (B, N, H)
    max_err = float(jnp.max(jnp.abs(out - ref)))
    assert jnp.allclose(out, ref, atol=3e-4, rtol=3e-4), f"mismatch vs reference ({max_err})"

    print("KERNEL_OK")
</pallas_src>

<mosaic_0001>
module attributes {stable_mosaic.version = 11 : i64} {
  func.func @gnn_fused_kernel(%arg0: i32, %arg1: memref<8x8x8xf32, #tpu.memory_space<vmem>>, %arg2: memref<8x8x8xf32, #tpu.memory_space<vmem>>, %arg3: memref<8x8x128xf32, #tpu.memory_space<vmem>>, %arg4: memref<128x128xf32, #tpu.memory_space<vmem>>, %arg5: memref<1x128xf32, #tpu.memory_space<vmem>>, %arg6: memref<128x128xf32, #tpu.memory_space<vmem>>, %arg7: memref<1x128xf32, #tpu.memory_space<vmem>>, %arg8: memref<1x128xf32, #tpu.memory_space<vmem>>, %arg9: memref<1x128xf32, #tpu.memory_space<vmem>>, %arg10: memref<128x512xf32, #tpu.memory_space<vmem>>, %arg11: memref<128x512xf32, #tpu.memory_space<vmem>>, %arg12: memref<128x512xf32, #tpu.memory_space<vmem>>, %arg13: memref<1x512xf32, #tpu.memory_space<vmem>>, %arg14: memref<8x8x128xf32, #tpu.memory_space<vmem>>) attributes {dimension_semantics = [#tpu.dimension_semantics<parallel>], iteration_bounds = array<i64: 2>, scalar_prefetch = 0 : i64, scratch_operands = 0 : i64, tpu.core_type = #tpu.core_type<tc>, window_params = [{transform_indices = @transform_0, window_bounds = array<i64: 8, 8, 8>}, {transform_indices = @transform_1, window_bounds = array<i64: 8, 8, 8>}, {transform_indices = @transform_2, window_bounds = array<i64: 8, 8, 128>}, {pipeline_mode = #tpu.pipeline_mode<synchronous>, transform_indices = @transform_3, window_bounds = array<i64: 128, 128>}, {pipeline_mode = #tpu.pipeline_mode<synchronous>, transform_indices = @transform_4, window_bounds = array<i64: 1, 128>}, {pipeline_mode = #tpu.pipeline_mode<synchronous>, transform_indices = @transform_5, window_bounds = array<i64: 128, 128>}, {pipeline_mode = #tpu.pipeline_mode<synchronous>, transform_indices = @transform_6, window_bounds = array<i64: 1, 128>}, {pipeline_mode = #tpu.pipeline_mode<synchronous>, transform_indices = @transform_7, window_bounds = array<i64: 1, 128>}, {pipeline_mode = #tpu.pipeline_mode<synchronous>, transform_indices = @transform_8, window_bounds = array<i64: 1, 128>}, {pipeline_mode = #tpu.pipeline_mode<synchronous>, transform_indices = @transform_9, window_bounds = array<i64: 128, 512>}, {pipeline_mode = #tpu.pipeline_mode<synchronous>, transform_indices = @transform_10, window_bounds = array<i64: 128, 512>}, {pipeline_mode = #tpu.pipeline_mode<synchronous>, transform_indices = @transform_11, window_bounds = array<i64: 128, 512>}, {pipeline_mode = #tpu.pipeline_mode<synchronous>, transform_indices = @transform_12, window_bounds = array<i64: 1, 512>}, {transform_indices = @transform_13, window_bounds = array<i64: 8, 8, 128>}]} {
    %c0 = arith.constant 0 : index
    %c0_0 = arith.constant 0 : index
    %c0_1 = arith.constant 0 : index
    %0 = vector.load %arg1[%c0, %c0_0, %c0_1] : memref<8x8x8xf32, #tpu.memory_space<vmem>>, vector<8x8x8xf32>
    %c0_2 = arith.constant 0 : index
    %c0_3 = arith.constant 0 : index
    %c0_4 = arith.constant 0 : index
    %1 = vector.load %arg2[%c0_2, %c0_3, %c0_4] : memref<8x8x8xf32, #tpu.memory_space<vmem>>, vector<8x8x8xf32>
    %c0_5 = arith.constant 0 : index
    %c0_6 = arith.constant 0 : index
    %2 = vector.load %arg4[%c0_5, %c0_6] : memref<128x128xf32, #tpu.memory_space<vmem>>, vector<128x128xf32>
    %c0_7 = arith.constant 0 : index
    %c0_8 = arith.constant 0 : index
    %3 = vector.load %arg6[%c0_7, %c0_8] : memref<128x128xf32, #tpu.memory_space<vmem>>, vector<128x128xf32>
    %c0_9 = arith.constant 0 : index
    %c0_10 = arith.constant 0 : index
    %4 = vector.load %arg10[%c0_9, %c0_10] : memref<128x512xf32, #tpu.memory_space<vmem>>, vector<128x512xf32>
    %c0_11 = arith.constant 0 : index
    %c0_12 = arith.constant 0 : index
    %5 = vector.load %arg11[%c0_11, %c0_12] : memref<128x512xf32, #tpu.memory_space<vmem>>, vector<128x512xf32>
    %c0_13 = arith.constant 0 : index
    %c0_14 = arith.constant 0 : index
    %6 = vector.load %arg12[%c0_13, %c0_14] : memref<128x512xf32, #tpu.memory_space<vmem>>, vector<128x512xf32>
    %c0_15 = arith.constant 0 : index
    %c0_16 = arith.constant 0 : index
    %7 = vector.load %arg5[%c0_15, %c0_16] : memref<1x128xf32, #tpu.memory_space<vmem>>, vector<1x128xf32>
    %c0_17 = arith.constant 0 : index
    %c0_18 = arith.constant 0 : index
    %8 = vector.load %arg7[%c0_17, %c0_18] : memref<1x128xf32, #tpu.memory_space<vmem>>, vector<1x128xf32>
    %c0_19 = arith.constant 0 : index
    %c0_20 = arith.constant 0 : index
    %9 = vector.load %arg8[%c0_19, %c0_20] : memref<1x128xf32, #tpu.memory_space<vmem>>, vector<1x128xf32>
    %c0_21 = arith.constant 0 : index
    %c0_22 = arith.constant 0 : index
    %10 = vector.load %arg9[%c0_21, %c0_22] : memref<1x128xf32, #tpu.memory_space<vmem>>, vector<1x128xf32>
    %c0_23 = arith.constant 0 : index
    %c0_24 = arith.constant 0 : index
    %11 = vector.load %arg13[%c0_23, %c0_24] : memref<1x512xf32, #tpu.memory_space<vmem>>, vector<1x512xf32>
    %c0_25 = arith.constant 0 : index
    %c0_26 = arith.constant 0 : index
    %c0_27 = arith.constant 0 : index
    %12 = vector.load %arg3[%c0_25, %c0_26, %c0_27] : memref<8x8x128xf32, #tpu.memory_space<vmem>>, vector<8x8x128xf32>
    %13 = vector.shape_cast %12 : vector<8x8x128xf32> to vector<64x128xf32>
    %c0_i32 = arith.constant 0 : i32
    %cst = arith.constant dense<0.000000e+00> : vector<64x128xf32>
    %14 = tpu.matmul %13, %2, %cst {dimension_numbers = #tpu.dot_dimension_numbers<[1], [0], [0], [1], [0, 0, 1, 1], [], []>} : vector<64x128xf32>, vector<128x128xf32>, vector<64x128xf32> -> vector<64x128xf32>
    %15 = vector.broadcast %7 : vector<1x128xf32> to vector<64x128xf32>
    %16 = arith.addf %14, %15 : vector<64x128xf32>
    %cst_28 = arith.constant dense<0.000000e+00> : vector<64x128xf32>
    %17 = tpu.matmul %13, %3, %cst_28 {dimension_numbers = #tpu.dot_dimension_numbers<[1], [0], [0], [1], [0, 0, 1, 1], [], []>} : vector<64x128xf32>, vector<128x128xf32>, vector<64x128xf32> -> vector<64x128xf32>
    %18 = vector.broadcast %8 : vector<1x128xf32> to vector<64x128xf32>
    %19 = arith.addf %17, %18 : vector<64x128xf32>
    %20 = vector.shape_cast %16 : vector<64x128xf32> to vector<8x8x128xf32>
    "tpu.trace_start"() <{level = 10 : i32, message = "bij,bjh->bih"}> : () -> ()
    %cst_29 = arith.constant dense<0.000000e+00> : vector<8x8x128xf32>
    %21 = tpu.matmul %0, %20, %cst_29 {dimension_numbers = #tpu.dot_dimension_numbers<[2], [1], [1], [2], [0, 0, 0, 1, 1, 2], [0], [0]>} : vector<8x8x8xf32>, vector<8x8x128xf32>, vector<8x8x128xf32> -> vector<8x8x128xf32>
    "tpu.trace_stop"() : () -> ()
    %22 = vector.shape_cast %21 : vector<8x8x128xf32> to vector<64x128xf32>
    %23 = vector.broadcast %9 : vector<1x128xf32> to vector<64x128xf32>
    %24 = arith.addf %22, %23 : vector<64x128xf32>
    %25 = vector.shape_cast %19 : vector<64x128xf32> to vector<8x8x128xf32>
    "tpu.trace_start"() <{level = 10 : i32, message = "bij,bjh->bih"}> : () -> ()
    %cst_30 = arith.constant dense<0.000000e+00> : vector<8x8x128xf32>
    %26 = tpu.matmul %1, %25, %cst_30 {dimension_numbers = #tpu.dot_dimension_numbers<[2], [1], [1], [2], [0, 0, 0, 1, 1, 2], [0], [0]>} : vector<8x8x8xf32>, vector<8x8x128xf32>, vector<8x8x128xf32> -> vector<8x8x128xf32>
    "tpu.trace_stop"() : () -> ()
    %27 = vector.shape_cast %26 : vector<8x8x128xf32> to vector<64x128xf32>
    %28 = vector.broadcast %10 : vector<1x128xf32> to vector<64x128xf32>
    %29 = arith.addf %27, %28 : vector<64x128xf32>
    %cst_31 = arith.constant dense<0.000000e+00> : vector<64x512xf32>
    %30 = tpu.matmul %24, %4, %cst_31 {dimension_numbers = #tpu.dot_dimension_numbers<[1], [0], [0], [1], [0, 0, 1, 1], [], []>} : vector<64x128xf32>, vector<128x512xf32>, vector<64x512xf32> -> vector<64x512xf32>
    %cst_32 = arith.constant dense<0.000000e+00> : vector<64x512xf32>
    %31 = tpu.matmul %29, %5, %cst_32 {dimension_numbers = #tpu.dot_dimension_numbers<[1], [0], [0], [1], [0, 0, 1, 1], [], []>} : vector<64x128xf32>, vector<128x512xf32>, vector<64x512xf32> -> vector<64x512xf32>
    %32 = arith.addf %30, %31 : vector<64x512xf32>
    %cst_33 = arith.constant dense<0.000000e+00> : vector<64x512xf32>
    %33 = tpu.matmul %13, %6, %cst_33 {dimension_numbers = #tpu.dot_dimension_numbers<[1], [0], [0], [1], [0, 0, 1, 1], [], []>} : vector<64x128xf32>, vector<128x512xf32>, vector<64x512xf32> -> vector<64x512xf32>
    %34 = arith.addf %32, %33 : vector<64x512xf32>
    %35 = vector.broadcast %11 : vector<1x512xf32> to vector<64x512xf32>
    %36 = arith.addf %34, %35 : vector<64x512xf32>
    %37 = vector.extract_strided_slice %36 {offsets = [0, 0], sizes = [64, 128], strides = [1, 1]} : vector<64x512xf32> to vector<64x128xf32>
    %38 = vector.extract_strided_slice %36 {offsets = [0, 128], sizes = [64, 128], strides = [1, 1]} : vector<64x512xf32> to vector<64x128xf32>
    %39 = vector.extract_strided_slice %36 {offsets = [0, 256], sizes = [64, 128], strides = [1, 1]} : vector<64x512xf32> to vector<64x128xf32>
    %40 = vector.extract_strided_slice %36 {offsets = [0, 384], sizes = [64, 128], strides = [1, 1]} : vector<64x512xf32> to vector<64x128xf32>
    %41 = arith.negf %37 : vector<64x128xf32>
    %42 = math.exp %41 : vector<64x128xf32>
    %cst_34 = arith.constant 1.000000e+00 : f32
    %43 = vector.broadcast %cst_34 : f32 to vector<64x128xf32>
    %44 = arith.addf %43, %42 : vector<64x128xf32>
    %45 = arith.divf %43, %44 : vector<64x128xf32>
    %46 = arith.negf %38 : vector<64x128xf32>
    %47 = math.exp %46 : vector<64x128xf32>
    %cst_35 = arith.constant 1.000000e+00 : f32
    %48 = vector.broadcast %cst_35 : f32 to vector<64x128xf32>
    %49 = arith.addf %48, %47 : vector<64x128xf32>
    %50 = arith.divf %48, %49 : vector<64x128xf32>
    %51 = arith.mulf %45, %40 : vector<64x128xf32>
    %52 = arith.addf %39, %51 : vector<64x128xf32>
    %53 = math.tanh %52 : vector<64x128xf32>
    %54 = arith.subf %13, %53 : vector<64x128xf32>
    %55 = arith.mulf %50, %54 : vector<64x128xf32>
    %56 = arith.addf %53, %55 : vector<64x128xf32>
    %c1_i32 = arith.constant 1 : i32
    %cst_36 = arith.constant dense<0.000000e+00> : vector<64x128xf32>
    %57 = tpu.matmul %56, %2, %cst_36 {dimension_numbers = #tpu.dot_dimension_numbers<[1], [0], [0], [1], [0, 0, 1, 1], [], []>} : vector<64x128xf32>, vector<128x128xf32>, vector<64x128xf32> -> vector<64x128xf32>
    %58 = vector.broadcast %7 : vector<1x128xf32> to vector<64x128xf32>
    %59 = arith.addf %57, %58 : vector<64x128xf32>
    %cst_37 = arith.constant dense<0.000000e+00> : vector<64x128xf32>
    %60 = tpu.matmul %56, %3, %cst_37 {dimension_numbers = #tpu.dot_dimension_numbers<[1], [0], [0], [1], [0, 0, 1, 1], [], []>} : vector<64x128xf32>, vector<128x128xf32>, vector<64x128xf32> -> vector<64x128xf32>
    %61 = vector.broadcast %8 : vector<1x128xf32> to vector<64x128xf32>
    %62 = arith.addf %60, %61 : vector<64x128xf32>
    %63 = vector.shape_cast %59 : vector<64x128xf32> to vector<8x8x128xf32>
    "tpu.trace_start"() <{level = 10 : i32, message = "bij,bjh->bih"}> : () -> ()
    %cst_38 = arith.constant dense<0.000000e+00> : vector<8x8x128xf32>
    %64 = tpu.matmul %0, %63, %cst_38 {dimension_numbers = #tpu.dot_dimension_numbers<[2], [1], [1], [2], [0, 0, 0, 1, 1, 2], [0], [0]>} : vector<8x8x8xf32>, vector<8x8x128xf32>, vector<8x8x128xf32> -> vector<8x8x128xf32>
    "tpu.trace_stop"() : () -> ()
    %65 = vector.shape_cast %64 : vector<8x8x128xf32> to vector<64x128xf32>
    %66 = vector.broadcast %9 : vector<1x128xf32> to vector<64x128xf32>
    %67 = arith.addf %65, %66 : vector<64x128xf32>
    %68 = vector.shape_cast %62 : vector<64x128xf32> to vector<8x8x128xf32>
    "tpu.trace_start"() <{level = 10 : i32, message = "bij,bjh->bih"}> : () -> ()
    %cst_39 = arith.constant dense<0.000000e+00> : vector<8x8x128xf32>
    %69 = tpu.matmul %1, %68, %cst_39 {dimension_numbers = #tpu.dot_dimension_numbers<[2], [1], [1], [2], [0, 0, 0, 1, 1, 2], [0], [0]>} : vector<8x8x8xf32>, vector<8x8x128xf32>, vector<8x8x128xf32> -> vector<8x8x128xf32>
    "tpu.trace_stop"() : () -> ()
    %70 = vector.shape_cast %69 : vector<8x8x128xf32> to vector<64x128xf32>
    %71 = vector.broadcast %10 : vector<1x128xf32> to vector<64x128xf32>
    %72 = arith.addf %70, %71 : vector<64x128xf32>
    %cst_40 = arith.constant dense<0.000000e+00> : vector<64x512xf32>
    %73 = tpu.matmul %67, %4, %cst_40 {dimension_numbers = #tpu.dot_dimension_numbers<[1], [0], [0], [1], [0, 0, 1, 1], [], []>} : vector<64x128xf32>, vector<128x512xf32>, vector<64x512xf32> -> vector<64x512xf32>
    %cst_41 = arith.constant dense<0.000000e+00> : vector<64x512xf32>
    %74 = tpu.matmul %72, %5, %cst_41 {dimension_numbers = #tpu.dot_dimension_numbers<[1], [0], [0], [1], [0, 0, 1, 1], [], []>} : vector<64x128xf32>, vector<128x512xf32>, vector<64x512xf32> -> vector<64x512xf32>
    %75 = arith.addf %73, %74 : vector<64x512xf32>
    %cst_42 = arith.constant dense<0.000000e+00> : vector<64x512xf32>
    %76 = tpu.matmul %56, %6, %cst_42 {dimension_numbers = #tpu.dot_dimension_numbers<[1], [0], [0], [1], [0, 0, 1, 1], [], []>} : vector<64x128xf32>, vector<128x512xf32>, vector<64x512xf32> -> vector<64x512xf32>
    %77 = arith.addf %75, %76 : vector<64x512xf32>
    %78 = vector.broadcast %11 : vector<1x512xf32> to vector<64x512xf32>
    %79 = arith.addf %77, %78 : vector<64x512xf32>
    %80 = vector.extract_strided_slice %79 {offsets = [0, 0], sizes = [64, 128], strides = [1, 1]} : vector<64x512xf32> to vector<64x128xf32>
    %81 = vector.extract_strided_slice %79 {offsets = [0, 128], sizes = [64, 128], strides = [1, 1]} : vector<64x512xf32> to vector<64x128xf32>
    %82 = vector.extract_strided_slice %79 {offsets = [0, 256], sizes = [64, 128], strides = [1, 1]} : vector<64x512xf32> to vector<64x128xf32>
    %83 = vector.extract_strided_slice %79 {offsets = [0, 384], sizes = [64, 128], strides = [1, 1]} : vector<64x512xf32> to vector<64x128xf32>
    %84 = arith.negf %80 : vector<64x128xf32>
    %85 = math.exp %84 : vector<64x128xf32>
    %cst_43 = arith.constant 1.000000e+00 : f32
    %86 = vector.broadcast %cst_43 : f32 to vector<64x128xf32>
    %87 = arith.addf %86, %85 : vector<64x128xf32>
    %88 = arith.divf %86, %87 : vector<64x128xf32>
    %89 = arith.negf %81 : vector<64x128xf32>
    %90 = math.exp %89 : vector<64x128xf32>
    %cst_44 = arith.constant 1.000000e+00 : f32
    %91 = vector.broadcast %cst_44 : f32 to vector<64x128xf32>
    %92 = arith.addf %91, %90 : vector<64x128xf32>
    %93 = arith.divf %91, %92 : vector<64x128xf32>
    %94 = arith.mulf %88, %83 : vector<64x128xf32>
    %95 = arith.addf %82, %94 : vector<64x128xf32>
    %96 = math.tanh %95 : vector<64x128xf32>
    %97 = arith.subf %56, %96 : vector<64x128xf32>
    %98 = arith.mulf %93, %97 : vector<64x128xf32>
    %99 = arith.addf %96, %98 : vector<64x128xf32>
    %100 = vector.shape_cast %99 : vector<64x128xf32> to vector<8x8x128xf32>
    %c0_45 = arith.constant 0 : index
    %c0_46 = arith.constant 0 : index
    %c0_47 = arith.constant 0 : index
    %101 = vector.load %arg14[%c0_45, %c0_46, %c0_47] : memref<8x8x128xf32, #tpu.memory_space<vmem>>, vector<8x8x128xf32>
    tpu.vector_store %arg14[%c0_45, %c0_46, %c0_47], %100 {strides = array<i32>} : memref<8x8x128xf32, #tpu.memory_space<vmem>>, vector<8x8x128xf32>,
    return
  }
  func.func @transform_0(%arg0: i32) -> (i32, i32, i32) {
    %c0_i32 = arith.constant 0 : i32
    %c0_i32_0 = arith.constant 0 : i32
    %c0_i32_1 = arith.constant 0 : i32
    return %arg0, %c0_i32, %c0_i32_0 : i32, i32, i32
  }
  func.func @transform_1(%arg0: i32) -> (i32, i32, i32) {
    %c0_i32 = arith.constant 0 : i32
    %c0_i32_0 = arith.constant 0 : i32
    %c0_i32_1 = arith.constant 0 : i32
    return %arg0, %c0_i32, %c0_i32_0 : i32, i32, i32
  }
  func.func @transform_2(%arg0: i32) -> (i32, i32, i32) {
    %c0_i32 = arith.constant 0 : i32
    %c0_i32_0 = arith.constant 0 : i32
    %c0_i32_1 = arith.constant 0 : i32
    return %arg0, %c0_i32, %c0_i32_0 : i32, i32, i32
  }
  func.func @transform_3(%arg0: i32) -> (i32, i32) {
    %c0_i32 = arith.constant 0 : i32
    %c0_i32_0 = arith.constant 0 : i32
    %c0_i32_1 = arith.constant 0 : i32
    return %c0_i32, %c0_i32_0 : i32, i32
  }
  func.func @transform_4(%arg0: i32) -> (i32, i32) {
    %c0_i32 = arith.constant 0 : i32
    %c0_i32_0 = arith.constant 0 : i32
    %c0_i32_1 = arith.constant 0 : i32
    return %c0_i32, %c0_i32_0 : i32, i32
  }
  func.func @transform_5(%arg0: i32) -> (i32, i32) {
    %c0_i32 = arith.constant 0 : i32
    %c0_i32_0 = arith.constant 0 : i32
    %c0_i32_1 = arith.constant 0 : i32
    return %c0_i32, %c0_i32_0 : i32, i32
  }
  func.func @transform_6(%arg0: i32) -> (i32, i32) {
    %c0_i32 = arith.constant 0 : i32
    %c0_i32_0 = arith.constant 0 : i32
    %c0_i32_1 = arith.constant 0 : i32
    return %c0_i32, %c0_i32_0 : i32, i32
  }
  func.func @transform_7(%arg0: i32) -> (i32, i32) {
    %c0_i32 = arith.constant 0 : i32
    %c0_i32_0 = arith.constant 0 : i32
    %c0_i32_1 = arith.constant 0 : i32
    return %c0_i32, %c0_i32_0 : i32, i32
  }
  func.func @transform_8(%arg0: i32) -> (i32, i32) {
    %c0_i32 = arith.constant 0 : i32
    %c0_i32_0 = arith.constant 0 : i32
    %c0_i32_1 = arith.constant 0 : i32
    return %c0_i32, %c0_i32_0 : i32, i32
  }
  func.func @transform_9(%arg0: i32) -> (i32, i32) {
    %c0_i32 = arith.constant 0 : i32
    %c0_i32_0 = arith.constant 0 : i32
    %c0_i32_1 = arith.constant 0 : i32
    return %c0_i32, %c0_i32_0 : i32, i32
  }
  func.func @transform_10(%arg0: i32) -> (i32, i32) {
    %c0_i32 = arith.constant 0 : i32
    %c0_i32_0 = arith.constant 0 : i32
    %c0_i32_1 = arith.constant 0 : i32
    return %c0_i32, %c0_i32_0 : i32, i32
  }
  func.func @transform_11(%arg0: i32) -> (i32, i32) {
    %c0_i32 = arith.constant 0 : i32
    %c0_i32_0 = arith.constant 0 : i32
    %c0_i32_1 = arith.constant 0 : i32
    return %c0_i32, %c0_i32_0 : i32, i32
  }
  func.func @transform_12(%arg0: i32) -> (i32, i32) {
    %c0_i32 = arith.constant 0 : i32
    %c0_i32_0 = arith.constant 0 : i32
    %c0_i32_1 = arith.constant 0 : i32
    return %c0_i32, %c0_i32_0 : i32, i32
  }
  func.func @transform_13(%arg0: i32) -> (i32, i32, i32) {
    %c0_i32 = arith.constant 0 : i32
    %c0_i32_0 = arith.constant 0 : i32
    %c0_i32_1 = arith.constant 0 : i32
    return %arg0, %c0_i32, %c0_i32_0 : i32, i32, i32
  }
}

</mosaic_0001>

<llo_original>
// kernel: tpu_custom_call.1
$region0: #{tpu_custom_call.1}
  #allocation0 [shape = 'u32[]', space=smem, size = 0x4, offset = 0x4, fixed_abs, tag = 'smem constant byte address 0x4 - core index']
  #allocation1 [shape = 'u32[144,128]{1,0:T(1,128)}', space=vmem, size = 0x12000, scoped, tag = 'internal scratch']
  %s0 = inlined_call_operand.vmem [shape: f32[16,8,8], index: 0, kind: input, shape index: {}]
  %s1 = inlined_call_operand.vmem [shape: f32[16,8,8], index: 1, kind: input, shape index: {}]
  %s2 = inlined_call_operand.vmem [shape: f32[16,8,128], index: 2, kind: input, shape index: {}]
  %s3 = inlined_call_operand.vmem [shape: f32[128,128], index: 3, kind: input, shape index: {}]
  %s4 = inlined_call_operand.vmem [shape: f32[1,128], index: 4, kind: input, shape index: {}]
  %s5 = inlined_call_operand.vmem [shape: f32[128,128], index: 5, kind: input, shape index: {}]
  %s6 = inlined_call_operand.vmem [shape: f32[1,128], index: 6, kind: input, shape index: {}]
  %s7 = inlined_call_operand.vmem [shape: f32[1,128], index: 7, kind: input, shape index: {}]
  %s8 = inlined_call_operand.vmem [shape: f32[1,128], index: 8, kind: input, shape index: {}]
  %s9 = inlined_call_operand.hbm [shape: f32[128,512], index: 9, kind: input, shape index: {}]
  %s10 = inlined_call_operand.hbm [shape: f32[128,512], index: 10, kind: input, shape index: {}]
  %s11 = inlined_call_operand.hbm [shape: f32[128,512], index: 11, kind: input, shape index: {}]
  %s12 = inlined_call_operand.vmem [shape: f32[1,512], index: 12, kind: input, shape index: {}]
  %s13 = inlined_call_operand.hbm [shape: f32[16,8,128], index: 13, kind: output, shape index: {}]
  %s14 = sld [smem:[#allocation0]]
  $region97: #{tpu_custom_call.1} parent=0
    _
  %s16 = ssub.s32 1, %s14
  %s17 = scalar_select 0, %s16, %s14
  $region1: #{tpu_custom_call.1} parent=0
    #allocation2 [shape = 'u8[262144]{0}', space=vmem, size = 0x40000, scoped, tag = 'input window, operand 9, single buffered']
    #allocation3 [shape = 's32[2]{0}', space=sflag, size = 0x8, scoped, tag = 'scoped memory for tpu_custom_call.1']
    #allocation4 [shape = 's32[2]{0}', space=sflag, size = 0x8, scoped, tag = 'scoped memory for tpu_custom_call.1']
    #allocation5 [shape = 'u8[262144]{0}', space=vmem, size = 0x40000, scoped, tag = 'input window, operand 10, single buffered']
    #allocation6 [shape = 's32[1]{0}', space=sflag, size = 0x4, scoped, tag = 'scoped memory for tpu_custom_call.1']
    #allocation7 [shape = 'u8[262144]{0}', space=vmem, size = 0x40000, scoped, tag = 'input window, operand 11, single buffered']
    #allocation8 [shape = 'u8[65536]{0}', space=vmem, size = 0x10000, scoped, tag = 'output window, operand 0']
    %18 = vsyncpa [#allocation3], 0
    %19 = vsyncpa [#allocation6], 0
    %20 = vsyncpa [#allocation4], 0
    %s21 = scalar_lea.sflag [#allocation4], 1
    %22 = vsyncpa %s21, 0
    loop: start=0, step=1, limit=4
    $region2: #{tpu_custom_call.1} parent=1 // loop_pre_header
      _
    $region3: #{tpu_custom_call.1} parent=1 // loop_header
      %s24 = sphi 0, %s28
      %p25 = scmp.ge.s32.totalorder %s24, 4
      %s34 = sphi 0, %s36
      %s37 = sphi 0, %s34
      %s38 = sphi 0, %s37
      %s54 = sphi 0, %s38
      %s60 = sphi 0, %s62
      %s63 = sphi 0, %s60
      %s64 = sphi 0, %s63
      %s80 = sphi 0, %s64
      %s86 = sphi 0, %s88
      %s89 = sphi 0, %s86
      %s90 = sphi 0, %s89
      %s106 = sphi 0, %s90
      %s110 = sphi 0, %s110
      %s112 = sphi 0, %s110
      %s113 = sphi 0, %s112
      %s127 = sphi 0, %s113
      %s131 = sphi 0, %s131
      %s133 = sphi 0, %s131
      %s134 = sphi 0, %s133
      %s148 = sphi 0, %s134
      %s152 = sphi 0, %s152
      %s154 = sphi 0, %s152
      %s155 = sphi 0, %s154
      %s169 = sphi 0, %s155
      %s173 = sphi 0, %s173
      %s175 = sphi 0, %s173
      %s176 = sphi 0, %s175
      %s190 = sphi 0, %s176
      %s194 = sphi 0, %s194
      %s196 = sphi 0, %s194
      %s197 = sphi 0, %s196
      %s211 = sphi 0, %s197
      %s215 = sphi 0, %s215
      %s217 = sphi 0, %s215
      %s218 = sphi 0, %s217
      %s232 = sphi 0, %s218
      %s236 = sphi 0, %s236
      %s238 = sphi 0, %s236
      %s239 = sphi 0, %s238
      %s253 = sphi 0, %s239
      %s257 = sphi 0, %s257
      %s259 = sphi 0, %s257
      %s260 = sphi 0, %s259
      %s274 = sphi 0, %s260
      %s278 = sphi 0, %s278
      %s280 = sphi 0, %s278
      %s281 = sphi 0, %s280
      %s295 = sphi 0, %s281
      %s299 = sphi 0, %s299
      %s301 = sphi 0, %s299
      %s302 = sphi 0, %s301
      %s316 = sphi 0, %s302
      %s322 = sphi 0, %s324
      %s325 = sphi 0, %s322
      %s326 = sphi 0, %s325
      %s342 = sphi 0, %s326
    $region4: #{tpu_custom_call.1} parent=1 // loop_header_branch
      %27 = sbr.rel (%p25) target = $region8
    $region5: #{tpu_custom_call.1} parent=1 // loop_body
      %s29 = ssub.s32 %s24, 1
      %s30 = ssub.s32 %s24, 2
      %s31 = sadd.s32 %s24, 1
      %s32 = ssub.s32 %s24, %s31
      %p33 = scmp.eq.s32.totalorder %s32, 0
      %s35 = sadd.s32 %s34, 1
      %s36 = scalar_select %p33, %s34, %s35
      %p39 = pneg %p33
      %p40 = scmp.eq.s32.totalorder %s24, 1
      %p41 = por %p39, %p40
      %p42 = scmp.ne.s32.totalorder %s34, %s37
      %p43 = scmp.eq.s32.totalorder %s24, 0
      %p44 = por %p42, %p43
      %p45 = scmp.ne.s32.totalorder %s34, %s37
      %p46 = scmp.eq.s32.totalorder %s29, 1
      %p47 = por %p45, %p46
      %p48 = scmp.ne.s32.totalorder %s37, %s38
      %p49 = scmp.eq.s32.totalorder %s29, 0
      %p50 = por %p48, %p49
      %p51 = scmp.ne.s32.totalorder %s37, %s38
      %p52 = scmp.eq.s32.totalorder %s30, 1
      %p53 = por %p51, %p52
      %p55 = scmp.ne.s32.totalorder %s38, %s54
      %p56 = scmp.eq.s32.totalorder %s30, 0
      %p57 = por %p55, %p56
      %s58 = ssub.s32 %s24, %s31
      %p59 = scmp.eq.s32.totalorder %s58, 0
      %s61 = sadd.s32 %s60, 1
      %s62 = scalar_select %p59, %s60, %s61
      %p65 = pneg %p59
      %p66 = scmp.eq.s32.totalorder %s24, 1
      %p67 = por %p65, %p66
      %p68 = scmp.ne.s32.totalorder %s60, %s63
      %p69 = scmp.eq.s32.totalorder %s24, 0
      %p70 = por %p68, %p69
      %p71 = scmp.ne.s32.totalorder %s60, %s63
      %p72 = scmp.eq.s32.totalorder %s29, 1
      %p73 = por %p71, %p72
      %p74 = scmp.ne.s32.totalorder %s63, %s64
      %p75 = scmp.eq.s32.totalorder %s29, 0
      %p76 = por %p74, %p75
      %p77 = scmp.ne.s32.totalorder %s63, %s64
      %p78 = scmp.eq.s32.totalorder %s30, 1
      %p79 = por %p77, %p78
      %p81 = scmp.ne.s32.totalorder %s64, %s80
      %p82 = scmp.eq.s32.totalorder %s30, 0
      %p83 = por %p81, %p82
      %s84 = ssub.s32 %s24, %s31
      %p85 = scmp.eq.s32.totalorder %s84, 0
      %s87 = sadd.s32 %s86, 1
      %s88 = scalar_select %p85, %s86, %s87
      %p91 = pneg %p85
      %p92 = scmp.eq.s32.totalorder %s24, 1
      %p93 = por %p91, %p92
      %p94 = scmp.ne.s32.totalorder %s86, %s89
      %p95 = scmp.eq.s32.totalorder %s24, 0
      %p96 = por %p94, %p95
      %p97 = scmp.ne.s32.totalorder %s86, %s89
      %p98 = scmp.eq.s32.totalorder %s29, 1
      %p99 = por %p97, %p98
      %p100 = scmp.ne.s32.totalorder %s89, %s90
      %p101 = scmp.eq.s32.totalorder %s29, 0
      %p102 = por %p100, %p101
      %p103 = scmp.ne.s32.totalorder %s89, %s90
      %p104 = scmp.eq.s32.totalorder %s30, 1
      %p105 = por %p103, %p104
      %p107 = scmp.ne.s32.totalorder %s90, %s106
      %p108 = scmp.eq.s32.totalorder %s30, 0
      %p109 = por %p107, %p108
      %s111 = sadd.s32 %s110, 1
      %p114 = scmp.eq.s32.totalorder %s24, 1
      %p115 = scmp.ne.s32.totalorder %s110, %s112
      %p116 = scmp.eq.s32.totalorder %s24, 0
      %p117 = por %p115, %p116
      %p118 = scmp.ne.s32.totalorder %s110, %s112
      %p119 = scmp.eq.s32.totalorder %s29, 1
      %p120 = por %p118, %p119
      %p121 = scmp.ne.s32.totalorder %s112, %s113
      %p122 = scmp.eq.s32.totalorder %s29, 0
      %p123 = por %p121, %p122
      %p124 = scmp.ne.s32.totalorder %s112, %s113
      %p125 = scmp.eq.s32.totalorder %s30, 1
      %p126 = por %p124, %p125
      %p128 = scmp.ne.s32.totalorder %s113, %s127
      %p129 = scmp.eq.s32.totalorder %s30, 0
      %p130 = por %p128, %p129
      %s132 = sadd.s32 %s131, 1
      %p135 = scmp.eq.s32.totalorder %s24, 1
      %p136 = scmp.ne.s32.totalorder %s131, %s133
      %p137 = scmp.eq.s32.totalorder %s24, 0
      %p138 = por %p136, %p137
      %p139 = scmp.ne.s32.totalorder %s131, %s133
      %p140 = scmp.eq.s32.totalorder %s29, 1
      %p141 = por %p139, %p140
      %p142 = scmp.ne.s32.totalorder %s133, %s134
      %p143 = scmp.eq.s32.totalorder %s29, 0
      %p144 = por %p142, %p143
      %p145 = scmp.ne.s32.totalorder %s133, %s134
      %p146 = scmp.eq.s32.totalorder %s30, 1
      %p147 = por %p145, %p146
      %p149 = scmp.ne.s32.totalorder %s134, %s148
      %p150 = scmp.eq.s32.totalorder %s30, 0
      %p151 = por %p149, %p150
      %s153 = sadd.s32 %s152, 1
      %p156 = scmp.eq.s32.totalorder %s24, 1
      %p157 = scmp.ne.s32.totalorder %s152, %s154
      %p158 = scmp.eq.s32.totalorder %s24, 0
      %p159 = por %p157, %p158
      %p160 = scmp.ne.s32.totalorder %s152, %s154
      %p161 = scmp.eq.s32.totalorder %s29, 1
      %p162 = por %p160, %p161
      %p163 = scmp.ne.s32.totalorder %s154, %s155
      %p164 = scmp.eq.s32.totalorder %s29, 0
      %p165 = por %p163, %p164
      %p166 = scmp.ne.s32.totalorder %s154, %s155
      %p167 = scmp.eq.s32.totalorder %s30, 1
      %p168 = por %p166, %p167
      %p170 = scmp.ne.s32.totalorder %s155, %s169
      %p171 = scmp.eq.s32.totalorder %s30, 0
      %p172 = por %p170, %p171
      %s174 = sadd.s32 %s173, 1
      %p177 = scmp.eq.s32.totalorder %s24, 1
      %p178 = scmp.ne.s32.totalorder %s173, %s175
      %p179 = scmp.eq.s32.totalorder %s24, 0
      %p180 = por %p178, %p179
      %p181 = scmp.ne.s32.totalorder %s173, %s175
      %p182 = scmp.eq.s32.totalorder %s29, 1
      %p183 = por %p181, %p182
      %p184 = scmp.ne.s32.totalorder %s175, %s176
      %p185 = scmp.eq.s32.totalorder %s29, 0
      %p186 = por %p184, %p185
      %p187 = scmp.ne.s32.totalorder %s175, %s176
      %p188 = scmp.eq.s32.totalorder %s30, 1
      %p189 = por %p187, %p188
      %p191 = scmp.ne.s32.totalorder %s176, %s190
      %p192 = scmp.eq.s32.totalorder %s30, 0
      %p193 = por %p191, %p192
      %s195 = sadd.s32 %s194, 1
      %p198 = scmp.eq.s32.totalorder %s24, 1
      %p199 = scmp.ne.s32.totalorder %s194, %s196
      %p200 = scmp.eq.s32.totalorder %s24, 0
      %p201 = por %p199, %p200
      %p202 = scmp.ne.s32.totalorder %s194, %s196
      %p203 = scmp.eq.s32.totalorder %s29, 1
      %p204 = por %p202, %p203
      %p205 = scmp.ne.s32.totalorder %s196, %s197
      %p206 = scmp.eq.s32.totalorder %s29, 0
      %p207 = por %p205, %p206
      %p208 = scmp.ne.s32.totalorder %s196, %s197
      %p209 = scmp.eq.s32.totalorder %s30, 1
      %p210 = por %p208, %p209
      %p212 = scmp.ne.s32.totalorder %s197, %s211
      %p213 = scmp.eq.s32.totalorder %s30, 0
      %p214 = por %p212, %p213
      %s216 = sadd.s32 %s215, 1
      %p219 = scmp.eq.s32.totalorder %s24, 1
      %p220 = scmp.ne.s32.totalorder %s215, %s217
      %p221 = scmp.eq.s32.totalorder %s24, 0
      %p222 = por %p220, %p221
      %p223 = scmp.ne.s32.totalorder %s215, %s217
      %p224 = scmp.eq.s32.totalorder %s29, 1
      %p225 = por %p223, %p224
      %p226 = scmp.ne.s32.totalorder %s217, %s218
      %p227 = scmp.eq.s32.totalorder %s29, 0
      %p228 = por %p226, %p227
      %p229 = scmp.ne.s32.totalorder %s217, %s218
      %p230 = scmp.eq.s32.totalorder %s30, 1
      %p231 = por %p229, %p230
      %p233 = scmp.ne.s32.totalorder %s218, %s232
      %p234 = scmp.eq.s32.totalorder %s30, 0
      %p235 = por %p233, %p234
      %s237 = sadd.s32 %s236, 1
      %p240 = scmp.eq.s32.totalorder %s24, 1
      %p241 = scmp.ne.s32.totalorder %s236, %s238
      %p242 = scmp.eq.s32.totalorder %s24, 0
      %p243 = por %p241, %p242
      %p244 = scmp.ne.s32.totalorder %s236, %s238
      %p245 = scmp.eq.s32.totalorder %s29, 1
      %p246 = por %p244, %p245
      %p247 = scmp.ne.s32.totalorder %s238, %s239
      %p248 = scmp.eq.s32.totalorder %s29, 0
      %p249 = por %p247, %p248
      %p250 = scmp.ne.s32.totalorder %s238, %s239
      %p251 = scmp.eq.s32.totalorder %s30, 1
      %p252 = por %p250, %p251
      %p254 = scmp.ne.s32.totalorder %s239, %s253
      %p255 = scmp.eq.s32.totalorder %s30, 0
      %p256 = por %p254, %p255
      %s258 = sadd.s32 %s257, 1
      %p261 = scmp.eq.s32.totalorder %s24, 1
      %p262 = scmp.ne.s32.totalorder %s257, %s259
      %p263 = scmp.eq.s32.totalorder %s24, 0
      %p264 = por %p262, %p263
      %p265 = scmp.ne.s32.totalorder %s257, %s259
      %p266 = scmp.eq.s32.totalorder %s29, 1
      %p267 = por %p265, %p266
      %p268 = scmp.ne.s32.totalorder %s259, %s260
      %p269 = scmp.eq.s32.totalorder %s29, 0
      %p270 = por %p268, %p269
      %p271 = scmp.ne.s32.totalorder %s259, %s260
      %p272 = scmp.eq.s32.totalorder %s30, 1
      %p273 = por %p271, %p272
      %p275 = scmp.ne.s32.totalorder %s260, %s274
      %p276 = scmp.eq.s32.totalorder %s30, 0
      %p277 = por %p275, %p276
      %s279 = sadd.s32 %s278, 1
      %p282 = scmp.eq.s32.totalorder %s24, 1
      %p283 = scmp.ne.s32.totalorder %s278, %s280
      %p284 = scmp.eq.s32.totalorder %s24, 0
      %p285 = por %p283, %p284
      %p286 = scmp.ne.s32.totalorder %s278, %s280
      %p287 = scmp.eq.s32.totalorder %s29, 1
      %p288 = por %p286, %p287
      %p289 = scmp.ne.s32.totalorder %s280, %s281
      %p290 = scmp.eq.s32.totalorder %s29, 0
      %p291 = por %p289, %p290
      %p292 = scmp.ne.s32.totalorder %s280, %s281
      %p293 = scmp.eq.s32.totalorder %s30, 1
      %p294 = por %p292, %p293
      %p296 = scmp.ne.s32.totalorder %s281, %s295
      %p297 = scmp.eq.s32.totalorder %s30, 0
      %p298 = por %p296, %p297
      %s300 = sadd.s32 %s299, 1
      %p303 = scmp.eq.s32.totalorder %s24, 1
      %p304 = scmp.ne.s32.totalorder %s299, %s301
      %p305 = scmp.eq.s32.totalorder %s24, 0
      %p306 = por %p304, %p305
      %p307 = scmp.ne.s32.totalorder %s299, %s301
      %p308 = scmp.eq.s32.totalorder %s29, 1
      %p309 = por %p307, %p308
      %p310 = scmp.ne.s32.totalorder %s301, %s302
      %p311 = scmp.eq.s32.totalorder %s29, 0
      %p312 = por %p310, %p311
      %p313 = scmp.ne.s32.totalorder %s301, %s302
      %p314 = scmp.eq.s32.totalorder %s30, 1
      %p315 = por %p313, %p314
      %p317 = scmp.ne.s32.totalorder %s302, %s316
      %p318 = scmp.eq.s32.totalorder %s30, 0
      %p319 = por %p317, %p318
      %s320 = ssub.s32 %s24, %s31
      %p321 = scmp.eq.s32.totalorder %s320, 0
      %s323 = sadd.s32 %s322, 1
      %s324 = scalar_select %p321, %s322, %s323
      %p327 = pneg %p321
      %p328 = scmp.eq.s32.totalorder %s24, 1
      %p329 = por %p327, %p328
      %p330 = scmp.ne.s32.totalorder %s322, %s325
      %p331 = scmp.eq.s32.totalorder %s24, 0
      %p332 = por %p330, %p331
      %p333 = scmp.ne.s32.totalorder %s322, %s325
      %p334 = scmp.eq.s32.totalorder %s29, 1
      %p335 = por %p333, %p334
      %p336 = scmp.ne.s32.totalorder %s325, %s326
      %p337 = scmp.eq.s32.totalorder %s29, 0
      %p338 = por %p336, %p337
      %p339 = scmp.ne.s32.totalorder %s325, %s326
      %p340 = scmp.eq.s32.totalorder %s30, 1
      %p341 = por %p339, %p340
      %p343 = scmp.ne.s32.totalorder %s326, %s342
      %p344 = scmp.eq.s32.totalorder %s30, 0
      %p345 = por %p343, %p344
      %p346 = scmp.le.s32.totalorder 1, %s24
      %p347 = scmp.lt.s32.totalorder %s24, 3
      %p348 = pnand %p346, %p347
      %p349 = pneg %p348
      // Predicated region
      $region9: #{tpu_custom_call.1} parent=5 // pred_check
        _
      $region10: #{tpu_custom_call.1} parent=5 // pred_check_branch
        %351 = sbr.rel (%p348) target = $region12
      $region11: #{tpu_custom_call.1} parent=5 // pred_region
        %s352 = ssub.s32 %s24, 1
        // Predicated region
        $region13: #{tpu_custom_call.1} parent=11 // pred_check
          %p353 = pneg %p123
        $region14: #{tpu_custom_call.1} parent=11 // pred_check_branch
          %355 = sbr.rel (%p353) target = $region16
        $region15: #{tpu_custom_call.1} parent=11 // pred_region
          _
        $region16: #{tpu_custom_call.1} parent=11 // pred_fallthru
          _
        // Predicated region
        $region17: #{tpu_custom_call.1} parent=11 // pred_check
          %p356 = pneg %p144
        $region18: #{tpu_custom_call.1} parent=11 // pred_check_branch
          %358 = sbr.rel (%p356) target = $region20
        $region19: #{tpu_custom_call.1} parent=11 // pred_region
          _
        $region20: #{tpu_custom_call.1} parent=11 // pred_fallthru
          _
        // Predicated region
        $region21: #{tpu_custom_call.1} parent=11 // pred_check
          %p359 = pneg %p165
        $region22: #{tpu_custom_call.1} parent=11 // pred_check_branch
          %361 = sbr.rel (%p359) target = $region24
        $region23: #{tpu_custom_call.1} parent=11 // pred_region
          _
        $region24: #{tpu_custom_call.1} parent=11 // pred_fallthru
          _
        // Predicated region
        $region25: #{tpu_custom_call.1} parent=11 // pred_check
          %p362 = pneg %p186
        $region26: #{tpu_custom_call.1} parent=11 // pred_check_branch
          %364 = sbr.rel (%p362) target = $region28
        $region27: #{tpu_custom_call.1} parent=11 // pred_region
          _
        $region28: #{tpu_custom_call.1} parent=11 // pred_fallthru
          _
        // Predicated region
        $region29: #{tpu_custom_call.1} parent=11 // pred_check
          %p365 = pneg %p207
        $region30: #{tpu_custom_call.1} parent=11 // pred_check_branch
          %367 = sbr.rel (%p365) target = $region32
        $region31: #{tpu_custom_call.1} parent=11 // pred_region
          _
        $region32: #{tpu_custom_call.1} parent=11 // pred_fallthru
          _
        // Predicated region
        $region33: #{tpu_custom_call.1} parent=11 // pred_check
          %p368 = pneg %p228
        $region34: #{tpu_custom_call.1} parent=11 // pred_check_branch
          %370 = sbr.rel (%p368) target = $region36
        $region35: #{tpu_custom_call.1} parent=11 // pred_region
          _
        $region36: #{tpu_custom_call.1} parent=11 // pred_fallthru
          _
        // Predicated region
        $region37: #{tpu_custom_call.1} parent=11 // pred_check
          %p371 = pneg %p249
        $region38: #{tpu_custom_call.1} parent=11 // pred_check_branch
          %373 = sbr.rel (%p371) target = $region40
        $region39: #{tpu_custom_call.1} parent=11 // pred_region
          %s375 = ssub.s32 8192, 8192
          %376 = vsyncadd [#allocation3], %s375
          %s377 = sshll.u32 [#allocation2], 4
          %s378 = int_to_ptr.vmem [resolvable:$true] %s377
          %383 = dma.hbm_to_vmem [thread:$0]  %s9, 8192, %s378, [#allocation3], 512, 512, 32
        $region40: #{tpu_custom_call.1} parent=11 // pred_fallthru
          _
        // Predicated region
        $region41: #{tpu_custom_call.1} parent=11 // pred_check
          %p384 = pneg %p270
        $region42: #{tpu_custom_call.1} parent=11 // pred_check_branch
          %386 = sbr.rel (%p384) target = $region44
        $region43: #{tpu_custom_call.1} parent=11 // pred_region
          %s388 = ssub.s32 8192, 8192
          %389 = vsyncadd [#allocation6], %s388
          %s390 = sshll.u32 [#allocation5], 4
          %s391 = int_to_ptr.vmem [resolvable:$true] %s390
          %396 = dma.hbm_to_vmem [thread:$0]  %s10, 8192, %s391, [#allocation6], 512, 512, 32
        $region44: #{tpu_custom_call.1} parent=11 // pred_fallthru
          _
        // Predicated region
        $region45: #{tpu_custom_call.1} parent=11 // pred_check
          %p397 = pneg %p291
        $region46: #{tpu_custom_call.1} parent=11 // pred_check_branch
          %399 = sbr.rel (%p397) target = $region48
        $region47: #{tpu_custom_call.1} parent=11 // pred_region
          %s401 = ssub.s32 8192, 8192
          %402 = vsyncadd [#allocation6], %s401
          %s403 = sshll.u32 [#allocation7], 4
          %s404 = int_to_ptr.vmem [resolvable:$true] %s403
          %409 = dma.hbm_to_vmem [thread:$0]  %s11, 8192, %s404, [#allocation6], 512, 512, 32
        $region48: #{tpu_custom_call.1} parent=11 // pred_fallthru
          _
        // Predicated region
        $region49: #{tpu_custom_call.1} parent=11 // pred_check
          %p410 = pneg %p312
        $region50: #{tpu_custom_call.1} parent=11 // pred_check_branch
          %412 = sbr.rel (%p410) target = $region52
        $region51: #{tpu_custom_call.1} parent=11 // pred_region
          _
        $region52: #{tpu_custom_call.1} parent=11 // pred_fallthru
          _
      $region12: #{tpu_custom_call.1} parent=5 // pred_fallthru
        _
      %p413 = scmp.lt.s32.totalorder %s24, 2
      // Predicated region
      $region53: #{tpu_custom_call.1} parent=5 // pred_check
        %p414 = pneg %p413
      $region54: #{tpu_custom_call.1} parent=5 // pred_check_branch
        %416 = sbr.rel (%p414) target = $region56
      $region55: #{tpu_custom_call.1} parent=5 // pred_region
        // Predicated region
        $region57: #{tpu_custom_call.1} parent=55 // pred_check
          %p417 = pneg %p44
        $region58: #{tpu_custom_call.1} parent=55 // pred_check_branch
          %419 = sbr.rel (%p417) target = $region60
        $region59: #{tpu_custom_call.1} parent=55 // pred_region
          %s420 = smul.u32 8, %s24
          %p421 = scmp.lt.s32.totalorder %s420, 15
          %s422 = scalar_select %p421, %s420, 15
          %s423 = smul.addr %s422, 8
          %s424 = scalar_lea.vmem %s0, %s423
          %s425 = smul.u32 8, %s24
        $region60: #{tpu_custom_call.1} parent=55 // pred_fallthru
          _
        // Predicated region
        $region61: #{tpu_custom_call.1} parent=55 // pred_check
          %p426 = pneg %p70
        $region62: #{tpu_custom_call.1} parent=55 // pred_check_branch
          %428 = sbr.rel (%p426) target = $region64
        $region63: #{tpu_custom_call.1} parent=55 // pred_region
          %s429 = smul.u32 8, %s24
          %p430 = scmp.lt.s32.totalorder %s429, 15
          %s431 = scalar_select %p430, %s429, 15
          %s432 = smul.addr %s431, 8
          %s433 = scalar_lea.vmem %s1, %s432
          %s434 = smul.u32 8, %s24
        $region64: #{tpu_custom_call.1} parent=55 // pred_fallthru
          _
        // Predicated region
        $region65: #{tpu_custom_call.1} parent=55 // pred_check
          %p435 = pneg %p96
        $region66: #{tpu_custom_call.1} parent=55 // pred_check_branch
          %437 = sbr.rel (%p435) target = $region68
        $region67: #{tpu_custom_call.1} parent=55 // pred_region
          %s438 = smul.u32 8, %s24
          %p439 = scmp.lt.s32.totalorder %s438, 15
          %s440 = scalar_select %p439, %s438, 15
          %s441 = smul.addr %s440, 8
          %s442 = scalar_lea.vmem %s2, %s441
          %s443 = smul.u32 8, %s24
        $region68: #{tpu_custom_call.1} parent=55 // pred_fallthru
          _
      $region56: #{tpu_custom_call.1} parent=5 // pred_fallthru
        _
      %p444 = scmp.le.s32.totalorder 1, %s24
      %p445 = scmp.lt.s32.totalorder %s24, 3
      %p446 = pnand %p444, %p445
      %p447 = pneg %p446
      // Predicated region
      $region69: #{tpu_custom_call.1} parent=5 // pred_check
        _
      $region70: #{tpu_custom_call.1} parent=5 // pred_check_branch
        %449 = sbr.rel (%p446) target = $region72
      $region71: #{tpu_custom_call.1} parent=5 // pred_region
        %s450 = ssub.s32 %s24, 1
        // Predicated region
        $region73: #{tpu_custom_call.1} parent=71 // pred_check
          %p451 = pneg %p249
        $region74: #{tpu_custom_call.1} parent=71 // pred_check_branch
          %453 = sbr.rel (%p451) target = $region76
        $region75: #{tpu_custom_call.1} parent=71 // pred_region
          %454 = dma.done [#allocation3], 8192
        $region76: #{tpu_custom_call.1} parent=71 // pred_fallthru
          _
        // Predicated region
        $region77: #{tpu_custom_call.1} parent=71 // pred_check
          %p455 = pneg %p270
        $region78: #{tpu_custom_call.1} parent=71 // pred_check_branch
          %457 = sbr.rel (%p455) target = $region80
        $region79: #{tpu_custom_call.1} parent=71 // pred_region
          %458 = dma.done [#allocation6], 8192
        $region80: #{tpu_custom_call.1} parent=71 // pred_fallthru
          _
        // Predicated region
        $region81: #{tpu_custom_call.1} parent=71 // pred_check
          %p459 = pneg %p291
        $region82: #{tpu_custom_call.1} parent=71 // pred_check_branch
          %461 = sbr.rel (%p459) target = $region84
        $region83: #{tpu_custom_call.1} parent=71 // pred_region
          %462 = dma.done [#allocation6], 8192
        $region84: #{tpu_custom_call.1} parent=71 // pred_fallthru
          _
        %s463 = smul.u32 8, %s29
        %p464 = scmp.lt.s32.totalorder %s463, 15
        %s465 = scalar_select %p464, %s463, 15
        %s466 = smul.addr %s465, 8
        %s467 = scalar_lea.vmem %s0, %s466
        %p468 = pneg %p50
        %p469 = pneg %p47
        %s470 = smul.u32 8, %s29
        %p471 = scmp.lt.s32.totalorder %s470, 15
        %s472 = scalar_select %p471, %s470, 15
        %s473 = smul.addr %s472, 8
        %s474 = scalar_lea.vmem %s1, %s473
        %p475 = pneg %p76
        %p476 = pneg %p73
        %s477 = smul.u32 8, %s29
        %p478 = scmp.lt.s32.totalorder %s477, 15
        %s479 = scalar_select %p478, %s477, 15
        %s480 = smul.addr %s479, 8
        %s481 = scalar_lea.vmem %s2, %s480
        %p482 = pneg %p102
        %p483 = pneg %p99
        %p484 = pneg %p123
        %p485 = pneg %p120
        %p486 = pneg %p144
        %p487 = pneg %p141
        %p488 = pneg %p165
        %p489 = pneg %p162
        %p490 = pneg %p186
        %p491 = pneg %p183
        %p492 = pneg %p207
        %p493 = pneg %p204
        %p494 = pneg %p228
        %p495 = pneg %p225
        %p496 = pneg %p249
        %p497 = pneg %p246
        %p498 = pneg %p270
        %p499 = pneg %p267
        %p500 = pneg %p291
        %p501 = pneg %p288
        %p502 = pneg %p312
        %p503 = pneg %p309
        %p504 = pneg %p338
        %p505 = pneg %p335
        %s506 = sand.u32 %s325, 1
        %s507 = scalar_lea.sflag [#allocation4], %s506
        %s508 = sand.u32 %s325, 1
        %s509 = smul.addr %s508, 64
        %s510 = scalar_lea.vmem [#allocation8], %s509
        %s511 = smul.u32 8, %s29
        %p512 = scmp.lt.s32.totalorder %s511, 15
        %s513 = scalar_select %p512, %s511, 15
        %s514 = smul.addr %s513, 8
        %s515 = scalar_lea.vmem %s0, %s514
        %s516 = smul.u32 8, %s29
        %s517 = smul.u32 8, %s29
        %p518 = scmp.lt.s32.totalorder %s517, 15
        %s519 = scalar_select %p518, %s517, 15
        %s520 = smul.addr %s519, 8
        %s521 = scalar_lea.vmem %s1, %s520
        %s522 = smul.u32 8, %s29
        %s523 = smul.u32 8, %s29
        %p524 = scmp.lt.s32.totalorder %s523, 15
        %s525 = scalar_select %p524, %s523, 15
        %s526 = smul.addr %s525, 8
        %s527 = scalar_lea.vmem %s2, %s526
        %s528 = smul.u32 8, %s29
        %s529 = smul.u32 8, %s29
        %v530 = vld [vmem:[%s515] sm:$0xff]
        %v531 = vld [vmem:[%s515 + $0x8] sm:$0xff]
        %v532 = vld [vmem:[%s515 + $0x10] sm:$0xff]
        %v533 = vld [vmem:[%s515 + $0x18] sm:$0xff]
        %v534 = vld [vmem:[%s515 + $0x20] sm:$0xff]
        %v535 = vld [vmem:[%s515 + $0x28] sm:$0xff]
        %v536 = vld [vmem:[%s515 + $0x30] sm:$0xff]
        %v537 = vld [vmem:[%s515 + $0x38] sm:$0xff]
        %v538 = vld [vmem:[%s521] sm:$0xff]
        %v539 = vld [vmem:[%s521 + $0x8] sm:$0xff]
        %v540 = vld [vmem:[%s521 + $0x10] sm:$0xff]
        %v541 = vld [vmem:[%s521 + $0x18] sm:$0xff]
        %v542 = vld [vmem:[%s521 + $0x20] sm:$0xff]
        %v543 = vld [vmem:[%s521 + $0x28] sm:$0xff]
        %v544 = vld [vmem:[%s521 + $0x30] sm:$0xff]
        %v545 = vld [vmem:[%s521 + $0x38] sm:$0xff]
        %v546 = vld [vmem:[%s3] sm:$0xff]
        %v547 = vld [vmem:[%s3 + $0x8] sm:$0xff]
        %v548 = vld [vmem:[%s3 + $0x10] sm:$0xff]
        %v549 = vld [vmem:[%s3 + $0x18] sm:$0xff]
        %v550 = vld [vmem:[%s3 + $0x20] sm:$0xff]
        %v551 = vld [vmem:[%s3 + $0x28] sm:$0xff]
        %v552 = vld [vmem:[%s3 + $0x30] sm:$0xff]
        %v553 = vld [vmem:[%s3 + $0x38] sm:$0xff]
        %v554 = vld [vmem:[%s3 + $0x40] sm:$0xff]
        %v555 = vld [vmem:[%s3 + $0x48] sm:$0xff]
        %v556 = vld [vmem:[%s3 + $0x50] sm:$0xff]
        %v557 = vld [vmem:[%s3 + $0x58] sm:$0xff]
        %v558 = vld [vmem:[%s3 + $0x60] sm:$0xff]
        %v559 = vld [vmem:[%s3 + $0x68] sm:$0xff]
        %v560 = vld [vmem:[%s3 + $0x70] sm:$0xff]
        %v561 = vld [vmem:[%s3 + $0x78] sm:$0xff]
        %v562 = vld [vmem:[%s5] sm:$0xff]
        %v563 = vld [vmem:[%s5 + $0x8] sm:$0xff]
        %v564 = vld [vmem:[%s5 + $0x10] sm:$0xff]
        %v565 = vld [vmem:[%s5 + $0x18] sm:$0xff]
        %v566 = vld [vmem:[%s5 + $0x20] sm:$0xff]
        %v567 = vld [vmem:[%s5 + $0x28] sm:$0xff]
        %v568 = vld [vmem:[%s5 + $0x30] sm:$0xff]
        %v569 = vld [vmem:[%s5 + $0x38] sm:$0xff]
        %v570 = vld [vmem:[%s5 + $0x40] sm:$0xff]
        %v571 = vld [vmem:[%s5 + $0x48] sm:$0xff]
        %v572 = vld [vmem:[%s5 + $0x50] sm:$0xff]
        %v573 = vld [vmem:[%s5 + $0x58] sm:$0xff]
        %v574 = vld [vmem:[%s5 + $0x60] sm:$0xff]
        %v575 = vld [vmem:[%s5 + $0x68] sm:$0xff]
        %v576 = vld [vmem:[%s5 + $0x70] sm:$0xff]
        %v577 = vld [vmem:[%s5 + $0x78] sm:$0xff]
        %v578 = vld [vmem:[#allocation2] sm:$0xff]
        %v579 = vld [vmem:[#allocation2 + $0x8] sm:$0xff]
        %v580 = vld [vmem:[#allocation2 + $0x10] sm:$0xff]
        %v581 = vld [vmem:[#allocation2 + $0x18] sm:$0xff]
        %v582 = vld [vmem:[#allocation2 + $0x20] sm:$0xff]
        %v583 = vld [vmem:[#allocation2 + $0x28] sm:$0xff]
        %v584 = vld [vmem:[#allocation2 + $0x30] sm:$0xff]
        %v585 = vld [vmem:[#allocation2 + $0x38] sm:$0xff]
        %v586 = vld [vmem:[#allocation2 + $0x40] sm:$0xff]
        %v587 = vld [vmem:[#allocation2 + $0x48] sm:$0xff]
        %v588 = vld [vmem:[#allocation2 + $0x50] sm:$0xff]
        %v589 = vld [vmem:[#allocation2 + $0x58] sm:$0xff]
        %v590 = vld [vmem:[#allocation2 + $0x60] sm:$0xff]
        %v591 = vld [vmem:[#allocation2 + $0x68] sm:$0xff]
        %v592 = vld [vmem:[#allocation2 + $0x70] sm:$0xff]
        %v593 = vld [vmem:[#allocation2 + $0x78] sm:$0xff]
        %v594 = vld [vmem:[#allocation2 + $0x80] sm:$0xff]
        %v595 = vld [vmem:[#allocation2 + $0x88] sm:$0xff]
        %v596 = vld [vmem:[#allocation2 + $0x90] sm:$0xff]
        %v597 = vld [vmem:[#allocation2 + $0x98] sm:$0xff]
        %v598 = vld [vmem:[#allocation2 + $0xa0] sm:$0xff]
        %v599 = vld [vmem:[#allocation2 + $0xa8] sm:$0xff]
        %v600 = vld [vmem:[#allocation2 + $0xb0] sm:$0xff]
        %v601 = vld [vmem:[#allocation2 + $0xb8] sm:$0xff]
        %v602 = vld [vmem:[#allocation2 + $0xc0] sm:$0xff]
        %v603 = vld [vmem:[#allocation2 + $0xc8] sm:$0xff]
        %v604 = vld [vmem:[#allocation2 + $0xd0] sm:$0xff]
        %v605 = vld [vmem:[#allocation2 + $0xd8] sm:$0xff]
        %v606 = vld [vmem:[#allocation2 + $0xe0] sm:$0xff]
        %v607 = vld [vmem:[#allocation2 + $0xe8] sm:$0xff]
        %v608 = vld [vmem:[#allocation2 + $0xf0] sm:$0xff]
        %v609 = vld [vmem:[#allocation2 + $0xf8] sm:$0xff]
        %v610 = vld [vmem:[#allocation2 + $0x100] sm:$0xff]
        %v611 = vld [vmem:[#allocation2 + $0x108] sm:$0xff]
        %v612 = vld [vmem:[#allocation2 + $0x110] sm:$0xff]
        %v613 = vld [vmem:[#allocation2 + $0x118] sm:$0xff]
        %v614 = vld [vmem:[#allocation2 + $0x120] sm:$0xff]
        %v615 = vld [vmem:[#allocation2 + $0x128] sm:$0xff]
        %v616 = vld [vmem:[#allocation2 + $0x130] sm:$0xff]
        %v617 = vld [vmem:[#allocation2 + $0x138] sm:$0xff]
        %v618 = vld [vmem:[#allocation2 + $0x140] sm:$0xff]
        %v619 = vld [vmem:[#allocation2 + $0x148] sm:$0xff]
        %v620 = vld [vmem:[#allocation2 + $0x150] sm:$0xff]
        %v621 = vld [vmem:[#allocation2 + $0x158] sm:$0xff]
        %v622 = vld [vmem:[#allocation2 + $0x160] sm:$0xff]
        %v623 = vld [vmem:[#allocation2 + $0x168] sm:$0xff]
        %v624 = vld [vmem:[#allocation2 + $0x170] sm:$0xff]
        %v625 = vld [vmem:[#allocation2 + $0x178] sm:$0xff]
        %v626 = vld [vmem:[#allocation2 + $0x180] sm:$0xff]
        %v627 = vld [vmem:[#allocation2 + $0x188] sm:$0xff]
        %v628 = vld [vmem:[#allocation2 + $0x190] sm:$0xff]
        %v629 = vld [vmem:[#allocation2 + $0x198] sm:$0xff]
        %v630 = vld [vmem:[#allocation2 + $0x1a0] sm:$0xff]
        %v631 = vld [vmem:[#allocation2 + $0x1a8] sm:$0xff]
        %v632 = vld [vmem:[#allocation2 + $0x1b0] sm:$0xff]
        %v633 = vld [vmem:[#allocation2 + $0x1b8] sm:$0xff]
        %v634 = vld [vmem:[#allocation2 + $0x1c0] sm:$0xff]
        %v635 = vld [vmem:[#allocation2 + $0x1c8] sm:$0xff]
        %v636 = vld [vmem:[#allocation2 + $0x1d0] sm:$0xff]
        %v637 = vld [vmem:[#allocation2 + $0x1d8] sm:$0xff]
        %v638 = vld [vmem:[#allocation2 + $0x1e0] sm:$0xff]
        %v639 = vld [vmem:[#allocation2 + $0x1e8] sm:$0xff]
        %v640 = vld [vmem:[#allocation2 + $0x1f0] sm:$0xff]
        %v641 = vld [vmem:[#allocation2 + $0x1f8] sm:$0xff]
        %v642 = vld [vmem:[#allocation5] sm:$0xff]
        %v643 = vld [vmem:[#allocation5 + $0x8] sm:$0xff]
        %v644 = vld [vmem:[#allocation5 + $0x10] sm:$0xff]
        %v645 = vld [vmem:[#allocation5 + $0x18] sm:$0xff]
        %v646 = vld [vmem:[#allocation5 + $0x20] sm:$0xff]
        %v647 = vld [vmem:[#allocation5 + $0x28] sm:$0xff]
        %v648 = vld [vmem:[#allocation5 + $0x30] sm:$0xff]
        %v649 = vld [vmem:[#allocation5 + $0x38] sm:$0xff]
        %v650 = vld [vmem:[#allocation5 + $0x40] sm:$0xff]
        %v651 = vld [vmem:[#allocation5 + $0x48] sm:$0xff]
        %v652 = vld [vmem:[#allocation5 + $0x50] sm:$0xff]
        %v653 = vld [vmem:[#allocation5 + $0x58] sm:$0xff]
        %v654 = vld [vmem:[#allocation5 + $0x60] sm:$0xff]
        %v655 = vld [vmem:[#allocation5 + $0x68] sm:$0xff]
        %v656 = vld [vmem:[#allocation5 + $0x70] sm:$0xff]
        %v657 = vld [vmem:[#allocation5 + $0x78] sm:$0xff]
        %v658 = vld [vmem:[#allocation5 + $0x80] sm:$0xff]
        %v659 = vld [vmem:[#allocation5 + $0x88] sm:$0xff]
        %v660 = vld [vmem:[#allocation5 + $0x90] sm:$0xff]
        %v661 = vld [vmem:[#allocation5 + $0x98] sm:$0xff]
        %v662 = vld [vmem:[#allocation5 + $0xa0] sm:$0xff]
        %v663 = vld [vmem:[#allocation5 + $0xa8] sm:$0xff]
        %v664 = vld [vmem:[#allocation5 + $0xb0] sm:$0xff]
        %v665 = vld [vmem:[#allocation5 + $0xb8] sm:$0xff]
        %v666 = vld [vmem:[#allocation5 + $0xc0] sm:$0xff]
        %v667 = vld [vmem:[#allocation5 + $0xc8] sm:$0xff]
        %v668 = vld [vmem:[#allocation5 + $0xd0] sm:$0xff]
        %v669 = vld [vmem:[#allocation5 + $0xd8] sm:$0xff]
        %v670 = vld [vmem:[#allocation5 + $0xe0] sm:$0xff]
        %v671 = vld [vmem:[#allocation5 + $0xe8] sm:$0xff]
        %v672 = vld [vmem:[#allocation5 + $0xf0] sm:$0xff]
        %v673 = vld [vmem:[#allocation5 + $0xf8] sm:$0xff]
        %v674 = vld [vmem:[#allocation5 + $0x100] sm:$0xff]
        %v675 = vld [vmem:[#allocation5 + $0x108] sm:$0xff]
        %v676 = vld [vmem:[#allocation5 + $0x110] sm:$0xff]
        %v677 = vld [vmem:[#allocation5 + $0x118] sm:$0xff]
        %v678 = vld [vmem:[#allocation5 + $0x120] sm:$0xff]
        %v679 = vld [vmem:[#allocation5 + $0x128] sm:$0xff]
        %v680 = vld [vmem:[#allocation5 + $0x130] sm:$0xff]
        %v681 = vld [vmem:[#allocation5 + $0x138] sm:$0xff]
        %v682 = vld [vmem:[#allocation5 + $0x140] sm:$0xff]
        %v683 = vld [vmem:[#allocation5 + $0x148] sm:$0xff]
        %v684 = vld [vmem:[#allocation5 + $0x150] sm:$0xff]
        %v685 = vld [vmem:[#allocation5 + $0x158] sm:$0xff]
        %v686 = vld [vmem:[#allocation5 + $0x160] sm:$0xff]
        %v687 = vld [vmem:[#allocation5 + $0x168] sm:$0xff]
        %v688 = vld [vmem:[#allocation5 + $0x170] sm:$0xff]
        %v689 = vld [vmem:[#allocation5 + $0x178] sm:$0xff]
        %v690 = vld [vmem:[#allocation5 + $0x180] sm:$0xff]
        %v691 = vld [vmem:[#allocation5 + $0x188] sm:$0xff]
        %v692 = vld [vmem:[#allocation5 + $0x190] sm:$0xff]
        %v693 = vld [vmem:[#allocation5 + $0x198] sm:$0xff]
        %v694 = vld [vmem:[#allocation5 + $0x1a0] sm:$0xff]
        %v695 = vld [vmem:[#allocation5 + $0x1a8] sm:$0xff]
        %v696 = vld [vmem:[#allocation5 + $0x1b0] sm:$0xff]
        %v697 = vld [vmem:[#allocation5 + $0x1b8] sm:$0xff]
        %v698 = vld [vmem:[#allocation5 + $0x1c0] sm:$0xff]
        %v699 = vld [vmem:[#allocation5 + $0x1c8] sm:$0xff]
        %v700 = vld [vmem:[#allocation5 + $0x1d0] sm:$0xff]
        %v701 = vld [vmem:[#allocation5 + $0x1d8] sm:$0xff]
        %v702 = vld [vmem:[#allocation5 + $0x1e0] sm:$0xff]
        %v703 = vld [vmem:[#allocation5 + $0x1e8] sm:$0xff]
        %v704 = vld [vmem:[#allocation5 + $0x1f0] sm:$0xff]
        %v705 = vld [vmem:[#allocation5 + $0x1f8] sm:$0xff]
        %v706 = vld [vmem:[#allocation7] sm:$0xff]
        %v707 = vld [vmem:[#allocation7 + $0x8] sm:$0xff]
        %v708 = vld [vmem:[#allocation7 + $0x10] sm:$0xff]
        %v709 = vld [vmem:[#allocation7 + $0x18] sm:$0xff]
        %v710 = vld [vmem:[#allocation7 + $0x20] sm:$0xff]
        %v711 = vld [vmem:[#allocation7 + $0x28] sm:$0xff]
        %v712 = vld [vmem:[#allocation7 + $0x30] sm:$0xff]
        %v713 = vld [vmem:[#allocation7 + $0x38] sm:$0xff]
        %v714 = vld [vmem:[#allocation7 + $0x40] sm:$0xff]
        %v715 = vld [vmem:[#allocation7 + $0x48] sm:$0xff]
        %v716 = vld [vmem:[#allocation7 + $0x50] sm:$0xff]
        %v717 = vld [vmem:[#allocation7 + $0x58] sm:$0xff]
        %v718 = vld [vmem:[#allocation7 + $0x60] sm:$0xff]
        %v719 = vld [vmem:[#allocation7 + $0x68] sm:$0xff]
        %v720 = vld [vmem:[#allocation7 + $0x70] sm:$0xff]
        %v721 = vld [vmem:[#allocation7 + $0x78] sm:$0xff]
        %v722 = vld [vmem:[#allocation7 + $0x80] sm:$0xff]
        %v723 = vld [vmem:[#allocation7 + $0x88] sm:$0xff]
        %v724 = vld [vmem:[#allocation7 + $0x90] sm:$0xff]
        %v725 = vld [vmem:[#allocation7 + $0x98] sm:$0xff]
        %v726 = vld [vmem:[#allocation7 + $0xa0] sm:$0xff]
        %v727 = vld [vmem:[#allocation7 + $0xa8] sm:$0xff]
        %v728 = vld [vmem:[#allocation7 + $0xb0] sm:$0xff]
        %v729 = vld [vmem:[#allocation7 + $0xb8] sm:$0xff]
        %v730 = vld [vmem:[#allocation7 + $0xc0] sm:$0xff]
        %v731 = vld [vmem:[#allocation7 + $0xc8] sm:$0xff]
        %v732 = vld [vmem:[#allocation7 + $0xd0] sm:$0xff]
        %v733 = vld [vmem:[#allocation7 + $0xd8] sm:$0xff]
        %v734 = vld [vmem:[#allocation7 + $0xe0] sm:$0xff]
        %v735 = vld [vmem:[#allocation7 + $0xe8] sm:$0xff]
        %v736 = vld [vmem:[#allocation7 + $0xf0] sm:$0xff]
        %v737 = vld [vmem:[#allocation7 + $0xf8] sm:$0xff]
        %v738 = vld [vmem:[#allocation7 + $0x100] sm:$0xff]
        %v739 = vld [vmem:[#allocation7 + $0x108] sm:$0xff]
        %v740 = vld [vmem:[#allocation7 + $0x110] sm:$0xff]
        %v741 = vld [vmem:[#allocation7 + $0x118] sm:$0xff]
        %v742 = vld [vmem:[#allocation7 + $0x120] sm:$0xff]
        %v743 = vld [vmem:[#allocation7 + $0x128] sm:$0xff]
        %v744 = vld [vmem:[#allocation7 + $0x130] sm:$0xff]
        %v745 = vld [vmem:[#allocation7 + $0x138] sm:$0xff]
        %v746 = vld [vmem:[#allocation7 + $0x140] sm:$0xff]
        %v747 = vld [vmem:[#allocation7 + $0x148] sm:$0xff]
        %v748 = vld [vmem:[#allocation7 + $0x150] sm:$0xff]
        %v749 = vld [vmem:[#allocation7 + $0x158] sm:$0xff]
        %v750 = vld [vmem:[#allocation7 + $0x160] sm:$0xff]
        %v751 = vld [vmem:[#allocation7 + $0x168] sm:$0xff]
        %v752 = vld [vmem:[#allocation7 + $0x170] sm:$0xff]
        %v753 = vld [vmem:[#allocation7 + $0x178] sm:$0xff]
        %v754 = vld [vmem:[#allocation7 + $0x180] sm:$0xff]
        %v755 = vld [vmem:[#allocation7 + $0x188] sm:$0xff]
        %v756 = vld [vmem:[#allocation7 + $0x190] sm:$0xff]
        %v757 = vld [vmem:[#allocation7 + $0x198] sm:$0xff]
        %v758 = vld [vmem:[#allocation7 + $0x1a0] sm:$0xff]
        %v759 = vld [vmem:[#allocation7 + $0x1a8] sm:$0xff]
        %v760 = vld [vmem:[#allocation7 + $0x1b0] sm:$0xff]
        %v761 = vld [vmem:[#allocation7 + $0x1b8] sm:$0xff]
        %v762 = vld [vmem:[#allocation7 + $0x1c0] sm:$0xff]
        %v763 = vld [vmem:[#allocation7 + $0x1c8] sm:$0xff]
        %v764 = vld [vmem:[#allocation7 + $0x1d0] sm:$0xff]
        %v765 = vld [vmem:[#allocation7 + $0x1d8] sm:$0xff]
        %v766 = vld [vmem:[#allocation7 + $0x1e0] sm:$0xff]
        %v767 = vld [vmem:[#allocation7 + $0x1e8] sm:$0xff]
        %v768 = vld [vmem:[#allocation7 + $0x1f0] sm:$0xff]
        %v769 = vld [vmem:[#allocation7 + $0x1f8] sm:$0xff]
        %v770 = vld [vmem:[%s4] sm:$0x1]
        %v771 = vld [vmem:[%s6] sm:$0x1]
        %v772 = vld [vmem:[%s7] sm:$0x1]
        %v773 = vld [vmem:[%s8] sm:$0x1]
        %v774 = vld [vmem:[%s12] sm:$0xf]
        %v775 = vld [vmem:[%s527] sm:$0xff]
        %v776 = vld [vmem:[%s527 + $0x8] sm:$0xff]
        %v777 = vld [vmem:[%s527 + $0x10] sm:$0xff]
        %v778 = vld [vmem:[%s527 + $0x18] sm:$0xff]
        %v779 = vld [vmem:[%s527 + $0x20] sm:$0xff]
        %v780 = vld [vmem:[%s527 + $0x28] sm:$0xff]
        %v781 = vld [vmem:[%s527 + $0x30] sm:$0xff]
        %v782 = vld [vmem:[%s527 + $0x38] sm:$0xff]
        %v784 = vlaneseq
        %v785 = vshrl.u32 %v784, 7
        %v786 = vsub.s32 0, %v785
        %v787 = vrot.slane %v770, %v786
        %789 = vmatprep.subr.mxu0 0.0
        %790 = vmatpush1.msra.mxu0 %v546
        %791 = vmatprep.subr.mxu0 0.0
        %792 = vmatpush1.msra.mxu0 %v547
        %793 = vmatprep.subr.mxu0 0.0
        %794 = vmatpush1.msra.mxu0 %v548
        %795 = vmatprep.subr.mxu0 0.0
        %796 = vmatpush1.msra.mxu0 %v549
        %797 = vmatprep.subr.mxu0 0.0
        %798 = vmatpush1.msra.mxu0 %v550
        %799 = vmatprep.subr.mxu0 0.0
        %800 = vmatpush1.msra.mxu0 %v551
        %801 = vmatprep.subr.mxu0 0.0
        %802 = vmatpush1.msra.mxu0 %v552
        %803 = vmatprep.subr.mxu0 0.0
        %804 = vmatpush1.msra.mxu0 %v553
        %805 = vmatprep.subr.mxu0 0.0
        %806 = vmatpush1.msra.mxu0 %v554
        %807 = vmatprep.subr.mxu0 0.0
        %808 = vmatpush1.msra.mxu0 %v555
        %809 = vmatprep.subr.mxu0 0.0
        %810 = vmatpush1.msra.mxu0 %v556
        %811 = vmatprep.subr.mxu0 0.0
        %812 = vmatpush1.msra.mxu0 %v557
        %813 = vmatprep.subr.mxu0 0.0
        %814 = vmatpush1.msra.mxu0 %v558
        %815 = vmatprep.subr.mxu0 0.0
        %816 = vmatpush1.msra.mxu0 %v559
        %817 = vmatprep.subr.mxu0 0.0
        %818 = vmatpush1.msra.mxu0 %v560
        %819 = vmatprep.subr.mxu0 0.0
        %820 = vmatpush1.msra.mxu0 %v561
        %821 = vmatprep.subr.mxu0 0.0
        %822 = vmatpush1.msra.mxu0 0.0
        %823 = vmatprep.subr.mxu0 0.0
        %824 = vmatpush1.msra.mxu0 0.0
        %825 = vmatprep.subr.mxu0 0.0
        %826 = vmatpush1.msra.mxu0 0.0
        %827 = vmatprep.subr.mxu0 0.0
        %828 = vmatpush1.msra.mxu0 0.0
        %829 = vmatprep.subr.mxu0 0.0
        %830 = vmatpush1.msra.mxu0 0.0
        %831 = vmatprep.subr.mxu0 0.0
        %832 = vmatpush1.msra.mxu0 0.0
        %833 = vmatprep.subr.mxu0 0.0
        %834 = vmatpush1.msra.mxu0 0.0
        %835 = vmatprep.subr.mxu0 0.0
        %836 = vmatpush1.msra.mxu0 0.0
        %837 = vmatprep.subr.mxu0 0.0
        %838 = vmatpush1.msra.mxu0 0.0
        %839 = vmatprep.subr.mxu0 0.0
        %840 = vmatpush1.msra.mxu0 0.0
        %841 = vmatprep.subr.mxu0 0.0
        %842 = vmatpush1.msra.mxu0 0.0
        %843 = vmatprep.subr.mxu0 0.0
        %844 = vmatpush1.msra.mxu0 0.0
        %845 = vmatprep.subr.mxu0 0.0
        %846 = vmatpush1.msra.mxu0 0.0
        %847 = vmatprep.subr.mxu0 0.0
        %848 = vmatpush1.msra.mxu0 0.0
        %849 = vmatprep.subr.mxu0 0.0
        %850 = vmatpush1.msra.mxu0 0.0
        %851 = vmatprep.subr.mxu0 0.0
        %852 = vmatpush1.msra.mxu0 0.0
        %853 = vmatprep.mubr.f32.mxu0 0.0
        %854 = vmatmul.mubr.f32.gmra.mrb[0].mxu0 %v775
        %v855 = vpop.f32.mrb[0].mxu0
        %v856 = vadd.f32 %v787, %v855
        %v857 = vpop.f32.mrb[0].mxu0
        %858 = vmatprep.mubr.f32.mxu0 0.0
        %859 = vmatmul.mubr.f32.gmra.mrb[0].mxu0 %v776
        %v860 = vpop.f32.mrb[0].mxu0
        %v861 = vadd.f32 %v787, %v860
        %v862 = vpop.f32.mrb[0].mxu0
        %863 = vmatprep.mubr.f32.mxu0 0.0
        %864 = vmatmul.mubr.f32.gmra.mrb[0].mxu0 %v777
        %v865 = vpop.f32.mrb[0].mxu0
        %v866 = vadd.f32 %v787, %v865
        %v867 = vpop.f32.mrb[0].mxu0
        %868 = vmatprep.mubr.f32.mxu0 0.0
        %869 = vmatmul.mubr.f32.gmra.mrb[0].mxu0 %v778
        %v870 = vpop.f32.mrb[0].mxu0
        %v871 = vadd.f32 %v787, %v870
        %v872 = vpop.f32.mrb[0].mxu0
        %873 = vmatprep.mubr.f32.mxu0 0.0
        %874 = vmatmul.mubr.f32.gmra.mrb[0].mxu0 %v779
        %v875 = vpop.f32.mrb[0].mxu0
        %v876 = vadd.f32 %v787, %v875
        %v877 = vpop.f32.mrb[0].mxu0
        %878 = vmatprep.mubr.f32.mxu0 0.0
        %879 = vmatmul.mubr.f32.gmra.mrb[0].mxu0 %v780
        %v880 = vpop.f32.mrb[0].mxu0
        %v881 = vadd.f32 %v787, %v880
        %v882 = vpop.f32.mrb[0].mxu0
        %883 = vmatprep.mubr.f32.mxu0 0.0
        %884 = vmatmul.mubr.f32.gmra.mrb[0].mxu0 %v781
        %v885 = vpop.f32.mrb[0].mxu0
        %v886 = vadd.f32 %v787, %v885
        %v887 = vpop.f32.mrb[0].mxu0
        %888 = vmatprep.mubr.f32.mxu0 0.0
        %889 = vmatmul.mubr.f32.gmra.mrb[0].mxu0 %v782
        %v890 = vpop.f32.mrb[0].mxu0
        %v891 = vadd.f32 %v787, %v890
        %v892 = vpop.f32.mrb[0].mxu0
        %893 = vdwg.mxu0
        %v895 = vlaneseq
        %v896 = vshrl.u32 %v895, 7
        %v897 = vsub.s32 0, %v896
        %v898 = vrot.slane %v771, %v897
        %900 = vmatprep.subr.mxu0 0.0
        %901 = vmatpush1.msra.mxu0 %v562
        %902 = vmatprep.subr.mxu0 0.0
        %903 = vmatpush1.msra.mxu0 %v563
        %904 = vmatprep.subr.mxu0 0.0
        %905 = vmatpush1.msra.mxu0 %v564
        %906 = vmatprep.subr.mxu0 0.0
        %907 = vmatpush1.msra.mxu0 %v565
        %908 = vmatprep.subr.mxu0 0.0
        %909 = vmatpush1.msra.mxu0 %v566
        %910 = vmatprep.subr.mxu0 0.0
        %911 = vmatpush1.msra.mxu0 %v567
        %912 = vmatprep.subr.mxu0 0.0
        %913 = vmatpush1.msra.mxu0 %v568
        %914 = vmatprep.subr.mxu0 0.0
        %915 = vmatpush1.msra.mxu0 %v569
        %916 = vmatprep.subr.mxu0 0.0
        %917 = vmatpush1.msra.mxu0 %v570
        %918 = vmatprep.subr.mxu0 0.0
        %919 = vmatpush1.msra.mxu0 %v571
        %920 = vmatprep.subr.mxu0 0.0
        %921 = vmatpush1.msra.mxu0 %v572
        %922 = vmatprep.subr.mxu0 0.0
        %923 = vmatpush1.msra.mxu0 %v573
        %924 = vmatprep.subr.mxu0 0.0
        %925 = vmatpush1.msra.mxu0 %v574
        %926 = vmatprep.subr.mxu0 0.0
        %927 = vmatpush1.msra.mxu0 %v575
        %928 = vmatprep.subr.mxu0 0.0
        %929 = vmatpush1.msra.mxu0 %v576
        %930 = vmatprep.subr.mxu0 0.0
        %931 = vmatpush1.msra.mxu0 %v577
        %932 = vmatprep.subr.mxu0 0.0
        %933 = vmatpush1.msra.mxu0 0.0
        %934 = vmatprep.subr.mxu0 0.0
        %935 = vmatpush1.msra.mxu0 0.0
        %936 = vmatprep.subr.mxu0 0.0
        %937 = vmatpush1.msra.mxu0 0.0
        %938 = vmatprep.subr.mxu0 0.0
        %939 = vmatpush1.msra.mxu0 0.0
        %940 = vmatprep.subr.mxu0 0.0
        %941 = vmatpush1.msra.mxu0 0.0
        %942 = vmatprep.subr.mxu0 0.0
        %943 = vmatpush1.msra.mxu0 0.0
        %944 = vmatprep.subr.mxu0 0.0
        %945 = vmatpush1.msra.mxu0 0.0
        %946 = vmatprep.subr.mxu0 0.0
        %947 = vmatpush1.msra.mxu0 0.0
        %948 = vmatprep.subr.mxu0 0.0
        %949 = vmatpush1.msra.mxu0 0.0
        %950 = vmatprep.subr.mxu0 0.0
        %951 = vmatpush1.msra.mxu0 0.0
        %952 = vmatprep.subr.mxu0 0.0
        %953 = vmatpush1.msra.mxu0 0.0
        %954 = vmatprep.subr.mxu0 0.0
        %955 = vmatpush1.msra.mxu0 0.0
        %956 = vmatprep.subr.mxu0 0.0
        %957 = vmatpush1.msra.mxu0 0.0
        %958 = vmatprep.subr.mxu0 0.0
        %959 = vmatpush1.msra.mxu0 0.0
        %960 = vmatprep.subr.mxu0 0.0
        %961 = vmatpush1.msra.mxu0 0.0
        %962 = vmatprep.subr.mxu0 0.0
        %963 = vmatpush1.msra.mxu0 0.0
        %964 = vmatprep.mubr.f32.mxu0 0.0
        %965 = vmatmul.mubr.f32.gmra.mrb[0].mxu0 %v775
        %v966 = vpop.f32.mrb[0].mxu0
        %v967 = vadd.f32 %v898, %v966
        %v968 = vpop.f32.mrb[0].mxu0
        %969 = vmatprep.mubr.f32.mxu0 0.0
        %970 = vmatmul.mubr.f32.gmra.mrb[0].mxu0 %v776
        %v971 = vpop.f32.mrb[0].mxu0
        %v972 = vadd.f32 %v898, %v971
        %v973 = vpop.f32.mrb[0].mxu0
        %974 = vmatprep.mubr.f32.mxu0 0.0
        %975 = vmatmul.mubr.f32.gmra.mrb[0].mxu0 %v777
        %v976 = vpop.f32.mrb[0].mxu0
        %v977 = vadd.f32 %v898, %v976
        %v978 = vpop.f32.mrb[0].mxu0
        %979 = vmatprep.mubr.f32.mxu0 0.0
        %980 = vmatmul.mubr.f32.gmra.mrb[0].mxu0 %v778
        %v981 = vpop.f32.mrb[0].mxu0
        %v982 = vadd.f32 %v898, %v981
        %v983 = vpop.f32.mrb[0].mxu0
        %984 = vmatprep.mubr.f32.mxu0 0.0
        %985 = vmatmul.mubr.f32.gmra.mrb[0].mxu0 %v779
        %v986 = vpop.f32.mrb[0].mxu0
        %v987 = vadd.f32 %v898, %v986
        %v988 = vpop.f32.mrb[0].mxu0
        %989 = vmatprep.mubr.f32.mxu0 0.0
        %990 = vmatmul.mubr.f32.gmra.mrb[0].mxu0 %v780
        %v991 = vpop.f32.mrb[0].mxu0
        %v992 = vadd.f32 %v898, %v991
        %v993 = vpop.f32.mrb[0].mxu0
        %994 = vmatprep.mubr.f32.mxu0 0.0
        %995 = vmatmul.mubr.f32.gmra.mrb[0].mxu0 %v781
        %v996 = vpop.f32.mrb[0].mxu0
        %v997 = vadd.f32 %v898, %v996
        %v998 = vpop.f32.mrb[0].mxu0
        %999 = vmatprep.mubr.f32.mxu0 0.0
        %1000 = vmatmul.mubr.f32.gmra.mrb[0].mxu0 %v782
        %v1001 = vpop.f32.mrb[0].mxu0
        %v1002 = vadd.f32 %v898, %v1001
        %v1003 = vpop.f32.mrb[0].mxu0
        %1004 = vdwg.mxu0
        %vm1005 = vcmask 64512
        %v1007 = vsel %vm1005, %v530, 0
        %1009 = vmatprep.subr.mxu0 0.0
        %1010 = vmatpush1.msra.mxu0 %v856
        %1011 = vmatprep.subr.mxu0 0.0
        %1012 = vmatpush1.msra.mxu0 0.0
        %1013 = vmatprep.subr.mxu0 0.0
        %1014 = vmatpush1.msra.mxu0 0.0
        %1015 = vmatprep.subr.mxu0 0.0
        %1016 = vmatpush1.msra.mxu0 0.0
        %1017 = vmatprep.subr.mxu0 0.0
        %1018 = vmatpush1.msra.mxu0 0.0
        %1019 = vmatprep.subr.mxu0 0.0
        %1020 = vmatpush1.msra.mxu0 0.0
        %1021 = vmatprep.subr.mxu0 0.0
        %1022 = vmatpush1.msra.mxu0 0.0
        %1023 = vmatprep.subr.mxu0 0.0
        %1024 = vmatpush1.msra.mxu0 0.0
        %1025 = vmatprep.subr.mxu0 0.0
        %1026 = vmatpush1.msra.mxu0 0.0
        %1027 = vmatprep.subr.mxu0 0.0
        %1028 = vmatpush1.msra.mxu0 0.0
        %1029 = vmatprep.subr.mxu0 0.0
        %1030 = vmatpush1.msra.mxu0 0.0
        %1031 = vmatprep.subr.mxu0 0.0
        %1032 = vmatpush1.msra.mxu0 0.0
        %1033 = vmatprep.subr.mxu0 0.0
        %1034 = vmatpush1.msra.mxu0 0.0
        %1035 = vmatprep.subr.mxu0 0.0
        %1036 = vmatpush1.msra.mxu0 0.0
        %1037 = vmatprep.subr.mxu0 0.0
        %1038 = vmatpush1.msra.mxu0 0.0
        %1039 = vmatprep.subr.mxu0 0.0
        %1040 = vmatpush1.msra.mxu0 0.0
        %1041 = vmatprep.subr.mxu0 0.0
        %1042 = vmatpush1.msra.mxu0 0.0
        %1043 = vmatprep.subr.mxu0 0.0
        %1044 = vmatpush1.msra.mxu0 0.0
        %1045 = vmatprep.subr.mxu0 0.0
        %1046 = vmatpush1.msra.mxu0 0.0
        %1047 = vmatprep.subr.mxu0 0.0
        %1048 = vmatpush1.msra.mxu0 0.0
        %1049 = vmatprep.subr.mxu0 0.0
        %1050 = vmatpush1.msra.mxu0 0.0
        %1051 = vmatprep.subr.mxu0 0.0
        %1052 = vmatpush1.msra.mxu0 0.0
        %1053 = vmatprep.subr.mxu0 0.0
        %1054 = vmatpush1.msra.mxu0 0.0
        %1055 = vmatprep.subr.mxu0 0.0
        %1056 = vmatpush1.msra.mxu0 0.0
        %1057 = vmatprep.subr.mxu0 0.0
        %1058 = vmatpush1.msra.mxu0 0.0
        %1059 = vmatprep.subr.mxu0 0.0
        %1060 = vmatpush1.msra.mxu0 0.0
        %1061 = vmatprep.subr.mxu0 0.0
        %1062 = vmatpush1.msra.mxu0 0.0
        %1063 = vmatprep.subr.mxu0 0.0
        %1064 = vmatpush1.msra.mxu0 0.0
        %1065 = vmatprep.subr.mxu0 0.0
        %1066 = vmatpush1.msra.mxu0 0.0
        %1067 = vmatprep.subr.mxu0 0.0
        %1068 = vmatpush1.msra.mxu0 0.0
        %1069 = vmatprep.subr.mxu0 0.0
        %1070 = vmatpush1.msra.mxu0 0.0
        %1071 = vmatprep.subr.mxu0 0.0
        %1072 = vmatpush1.msra.mxu0 0.0
        %1073 = vmatprep.mubr.f32.mxu0 0.0
        %1074 = vmatmul.mubr.f32.gmra.mrb[0].mxu0 %v1007
        %v1075 = vpop.f32.mrb[0].mxu0
        %v1076 = vadd.f32 0.0, %v1075
        %v1077 = vpop.f32.mrb[0].mxu0
        %1078 = vdwg.mxu0
        %v1080 = vsel %vm1005, %v531, 0
        %1082 = vmatprep.subr.mxu0 0.0
        %1083 = vmatpush1.msra.mxu0 %v861
        %1084 = vmatprep.subr.mxu0 0.0
        %1085 = vmatpush1.msra.mxu0 0.0
        %1086 = vmatprep.subr.mxu0 0.0
        %1087 = vmatpush1.msra.mxu0 0.0
        %1088 = vmatprep.subr.mxu0 0.0
        %1089 = vmatpush1.msra.mxu0 0.0
        %1090 = vmatprep.subr.mxu0 0.0
        %1091 = vmatpush1.msra.mxu0 0.0
        %1092 = vmatprep.subr.mxu0 0.0
        %1093 = vmatpush1.msra.mxu0 0.0
        %1094 = vmatprep.subr.mxu0 0.0
        %1095 = vmatpush1.msra.mxu0 0.0
        %1096 = vmatprep.subr.mxu0 0.0
        %1097 = vmatpush1.msra.mxu0 0.0
        %1098 = vmatprep.subr.mxu0 0.0
        %1099 = vmatpush1.msra.mxu0 0.0
        %1100 = vmatprep.subr.mxu0 0.0
        %1101 = vmatpush1.msra.mxu0 0.0
        %1102 = vmatprep.subr.mxu0 0.0
        %1103 = vmatpush1.msra.mxu0 0.0
        %1104 = vmatprep.subr.mxu0 0.0
        %1105 = vmatpush1.msra.mxu0 0.0
        %1106 = vmatprep.subr.mxu0 0.0
        %1107 = vmatpush1.msra.mxu0 0.0
        %1108 = vmatprep.subr.mxu0 0.0
        %1109 = vmatpush1.msra.mxu0 0.0
        %1110 = vmatprep.subr.mxu0 0.0
        %1111 = vmatpush1.msra.mxu0 0.0
        %1112 = vmatprep.subr.mxu0 0.0
        %1113 = vmatpush1.msra.mxu0 0.0
        %1114 = vmatprep.subr.mxu0 0.0
        %1115 = vmatpush1.msra.mxu0 0.0
        %1116 = vmatprep.subr.mxu0 0.0
        %1117 = vmatpush1.msra.mxu0 0.0
        %1118 = vmatprep.subr.mxu0 0.0
        %1119 = vmatpush1.msra.mxu0 0.0
        %1120 = vmatprep.subr.mxu0 0.0
        %1121 = vmatpush1.msra.mxu0 0.0
        %1122 = vmatprep.subr.mxu0 0.0
        %1123 = vmatpush1.msra.mxu0 0.0
        %1124 = vmatprep.subr.mxu0 0.0
        %1125 = vmatpush1.msra.mxu0 0.0
        %1126 = vmatprep.subr.mxu0 0.0
        %1127 = vmatpush1.msra.mxu0 0.0
        %1128 = vmatprep.subr.mxu0 0.0
        %1129 = vmatpush1.msra.mxu0 0.0
        %1130 = vmatprep.subr.mxu0 0.0
        %1131 = vmatpush1.msra.mxu0 0.0
        %1132 = vmatprep.subr.mxu0 0.0
        %1133 = vmatpush1.msra.mxu0 0.0
        %1134 = vmatprep.subr.mxu0 0.0
        %1135 = vmatpush1.msra.mxu0 0.0
        %1136 = vmatprep.subr.mxu0 0.0
        %1137 = vmatpush1.msra.mxu0 0.0
        %1138 = vmatprep.subr.mxu0 0.0
        %1139 = vmatpush1.msra.mxu0 0.0
        %1140 = vmatprep.subr.mxu0 0.0
        %1141 = vmatpush1.msra.mxu0 0.0
        %1142 = vmatprep.subr.mxu0 0.0
        %1143 = vmatpush1.msra.mxu0 0.0
        %1144 = vmatprep.subr.mxu0 0.0
        %1145 = vmatpush1.msra.mxu0 0.0
        %1146 = vmatprep.mubr.f32.mxu0 0.0
        %1147 = vmatmul.mubr.f32.gmra.mrb[0].mxu0 %v1080
        %v1148 = vpop.f32.mrb[0].mxu0
        %v1149 = vadd.f32 0.0, %v1148
        %v1150 = vpop.f32.mrb[0].mxu0
        %1151 = vdwg.mxu0
        %v1153 = vsel %vm1005, %v532, 0
        %1155 = vmatprep.subr.mxu0 0.0
        %1156 = vmatpush1.msra.mxu0 %v866
        %1157 = vmatprep.subr.mxu0 0.0
        %1158 = vmatpush1.msra.mxu0 0.0
        %1159 = vmatprep.subr.mxu0 0.0
        %1160 = vmatpush1.msra.mxu0 0.0
        %1161 = vmatprep.subr.mxu0 0.0
        %1162 = vmatpush1.msra.mxu0 0.0
        %1163 = vmatprep.subr.mxu0 0.0
        %1164 = vmatpush1.msra.mxu0 0.0
        %1165 = vmatprep.subr.mxu0 0.0
        %1166 = vmatpush1.msra.mxu0 0.0
        %1167 = vmatprep.subr.mxu0 0.0
        %1168 = vmatpush1.msra.mxu0 0.0
        %1169 = vmatprep.subr.mxu0 0.0
        %1170 = vmatpush1.msra.mxu0 0.0
        %1171 = vmatprep.subr.mxu0 0.0
        %1172 = vmatpush1.msra.mxu0 0.0
        %1173 = vmatprep.subr.mxu0 0.0
        %1174 = vmatpush1.msra.mxu0 0.0
        %1175 = vmatprep.subr.mxu0 0.0
        %1176 = vmatpush1.msra.mxu0 0.0
        %1177 = vmatprep.subr.mxu0 0.0
        %1178 = vmatpush1.msra.mxu0 0.0
        %1179 = vmatprep.subr.mxu0 0.0
        %1180 = vmatpush1.msra.mxu0 0.0
        %1181 = vmatprep.subr.mxu0 0.0
        %1182 = vmatpush1.msra.mxu0 0.0
        %1183 = vmatprep.subr.mxu0 0.0
        %1184 = vmatpush1.msra.mxu0 0.0
        %1185 = vmatprep.subr.mxu0 0.0
        %1186 = vmatpush1.msra.mxu0 0.0
        %1187 = vmatprep.subr.mxu0 0.0
        %1188 = vmatpush1.msra.mxu0 0.0
        %1189 = vmatprep.subr.mxu0 0.0
        %1190 = vmatpush1.msra.mxu0 0.0
        %1191 = vmatprep.subr.mxu0 0.0
        %1192 = vmatpush1.msra.mxu0 0.0
        %1193 = vmatprep.subr.mxu0 0.0
        %1194 = vmatpush1.msra.mxu0 0.0
        %1195 = vmatprep.subr.mxu0 0.0
        %1196 = vmatpush1.msra.mxu0 0.0
        %1197 = vmatprep.subr.mxu0 0.0
        %1198 = vmatpush1.msra.mxu0 0.0
        %1199 = vmatprep.subr.mxu0 0.0
        %1200 = vmatpush1.msra.mxu0 0.0
        %1201 = vmatprep.subr.mxu0 0.0
        %1202 = vmatpush1.msra.mxu0 0.0
        %1203 = vmatprep.subr.mxu0 0.0
        %1204 = vmatpush1.msra.mxu0 0.0
        %1205 = vmatprep.subr.mxu0 0.0
        %1206 = vmatpush1.msra.mxu0 0.0
        %1207 = vmatprep.subr.mxu0 0.0
        %1208 = vmatpush1.msra.mxu0 0.0
        %1209 = vmatprep.subr.mxu0 0.0
        %1210 = vmatpush1.msra.mxu0 0.0
        %1211 = vmatprep.subr.mxu0 0.0
        %1212 = vmatpush1.msra.mxu0 0.0
        %1213 = vmatprep.subr.mxu0 0.0
        %1214 = vmatpush1.msra.mxu0 0.0
        %1215 = vmatprep.subr.mxu0 0.0
        %1216 = vmatpush1.msra.mxu0 0.0
        %1217 = vmatprep.subr.mxu0 0.0
        %1218 = vmatpush1.msra.mxu0 0.0
        %1219 = vmatprep.mubr.f32.mxu0 0.0
        %1220 = vmatmul.mubr.f32.gmra.mrb[0].mxu0 %v1153
        %v1221 = vpop.f32.mrb[0].mxu0
        %v1222 = vadd.f32 0.0, %v1221
        %v1223 = vpop.f32.mrb[0].mxu0
        %1224 = vdwg.mxu0
        %v1226 = vsel %vm1005, %v533, 0
        %1228 = vmatprep.subr.mxu0 0.0
        %1229 = vmatpush1.msra.mxu0 %v871
        %1230 = vmatprep.subr.mxu0 0.0
        %1231 = vmatpush1.msra.mxu0 0.0
        %1232 = vmatprep.subr.mxu0 0.0
        %1233 = vmatpush1.msra.mxu0 0.0
        %1234 = vmatprep.subr.mxu0 0.0
        %1235 = vmatpush1.msra.mxu0 0.0
        %1236 = vmatprep.subr.mxu0 0.0
        %1237 = vmatpush1.msra.mxu0 0.0
        %1238 = vmatprep.subr.mxu0 0.0
        %1239 = vmatpush1.msra.mxu0 0.0
        %1240 = vmatprep.subr.mxu0 0.0
        %1241 = vmatpush1.msra.mxu0 0.0
        %1242 = vmatprep.subr.mxu0 0.0
        %1243 = vmatpush1.msra.mxu0 0.0
        %1244 = vmatprep.subr.mxu0 0.0
        %1245 = vmatpush1.msra.mxu0 0.0
        %1246 = vmatprep.subr.mxu0 0.0
        %1247 = vmatpush1.msra.mxu0 0.0
        %1248 = vmatprep.subr.mxu0 0.0
        %1249 = vmatpush1.msra.mxu0 0.0
        %1250 = vmatprep.subr.mxu0 0.0
        %1251 = vmatpush1.msra.mxu0 0.0
        %1252 = vmatprep.subr.mxu0 0.0
        %1253 = vmatpush1.msra.mxu0 0.0
        %1254 = vmatprep.subr.mxu0 0.0
        %1255 = vmatpush1.msra.mxu0 0.0
        %1256 = vmatprep.subr.mxu0 0.0
        %1257 = vmatpush1.msra.mxu0 0.0
        %1258 = vmatprep.subr.mxu0 0.0
        %1259 = vmatpush1.msra.mxu0 0.0
        %1260 = vmatprep.subr.mxu0 0.0
        %1261 = vmatpush1.msra.mxu0 0.0
        %1262 = vmatprep.subr.mxu0 0.0
        %1263 = vmatpush1.msra.mxu0 0.0
        %1264 = vmatprep.subr.mxu0 0.0
        %1265 = vmatpush1.msra.mxu0 0.0
        %1266 = vmatprep.subr.mxu0 0.0
        %1267 = vmatpush1.msra.mxu0 0.0
        %1268 = vmatprep.subr.mxu0 0.0
        %1269 = vmatpush1.msra.mxu0 0.0
        %1270 = vmatprep.subr.mxu0 0.0
        %1271 = vmatpush1.msra.mxu0 0.0
        %1272 = vmatprep.subr.mxu0 0.0
        %1273 = vmatpush1.msra.mxu0 0.0
        %1274 = vmatprep.subr.mxu0 0.0
        %1275 = vmatpush1.msra.mxu0 0.0
        %1276 = vmatprep.subr.mxu0 0.0
        %1277 = vmatpush1.msra.mxu0 0.0
        %1278 = vmatprep.subr.mxu0 0.0
        %1279 = vmatpush1.msra.mxu0 0.0
        %1280 = vmatprep.subr.mxu0 0.0
        %1281 = vmatpush1.msra.mxu0 0.0
        %1282 = vmatprep.subr.mxu0 0.0
        %1283 = vmatpush1.msra.mxu0 0.0
        %1284 = vmatprep.subr.mxu0 0.0
        %1285 = vmatpush1.msra.mxu0 0.0
        %1286 = vmatprep.subr.mxu0 0.0
        %1287 = vmatpush1.msra.mxu0 0.0
        %1288 = vmatprep.subr.mxu0 0.0
        %1289 = vmatpush1.msra.mxu0 0.0
        %1290 = vmatprep.subr.mxu0 0.0
        %1291 = vmatpush1.msra.mxu0 0.0
        %1292 = vmatprep.mubr.f32.mxu0 0.0
        %1293 = vmatmul.mubr.f32.gmra.mrb[0].mxu0 %v1226
        %v1294 = vpop.f32.mrb[0].mxu0
        %v1295 = vadd.f32 0.0, %v1294
        %v1296 = vpop.f32.mrb[0].mxu0
        %1297 = vdwg.mxu0
        %v1299 = vsel %vm1005, %v534, 0
        %1301 = vmatprep.subr.mxu0 0.0
        %1302 = vmatpush1.msra.mxu0 %v876
        %1303 = vmatprep.subr.mxu0 0.0
        %1304 = vmatpush1.msra.mxu0 0.0
        %1305 = vmatprep.subr.mxu0 0.0
        %1306 = vmatpush1.msra.mxu0 0.0
        %1307 = vmatprep.subr.mxu0 0.0
        %1308 = vmatpush1.msra.mxu0 0.0
        %1309 = vmatprep.subr.mxu0 0.0
        %1310 = vmatpush1.msra.mxu0 0.0
        %1311 = vmatprep.subr.mxu0 0.0
        %1312 = vmatpush1.msra.mxu0 0.0
        %1313 = vmatprep.subr.mxu0 0.0
        %1314 = vmatpush1.msra.mxu0 0.0
        %1315 = vmatprep.subr.mxu0 0.0
        %1316 = vmatpush1.msra.mxu0 0.0
        %1317 = vmatprep.subr.mxu0 0.0
        %1318 = vmatpush1.msra.mxu0 0.0
        %1319 = vmatprep.subr.mxu0 0.0
        %1320 = vmatpush1.msra.mxu0 0.0
        %1321 = vmatprep.subr.mxu0 0.0
        %1322 = vmatpush1.msra.mxu0 0.0
        %1323 = vmatprep.subr.mxu0 0.0
        %1324 = vmatpush1.msra.mxu0 0.0
        %1325 = vmatprep.subr.mxu0 0.0
        %1326 = vmatpush1.msra.mxu0 0.0
        %1327 = vmatprep.subr.mxu0 0.0
        %1328 = vmatpush1.msra.mxu0 0.0
        %1329 = vmatprep.subr.mxu0 0.0
        %1330 = vmatpush1.msra.mxu0 0.0
        %1331 = vmatprep.subr.mxu0 0.0
        %1332 = vmatpush1.msra.mxu0 0.0
        %1333 = vmatprep.subr.mxu0 0.0
        %1334 = vmatpush1.msra.mxu0 0.0
        %1335 = vmatprep.subr.mxu0 0.0
        %1336 = vmatpush1.msra.mxu0 0.0
        %1337 = vmatprep.subr.mxu0 0.0
        %1338 = vmatpush1.msra.mxu0 0.0
        %1339 = vmatprep.subr.mxu0 0.0
        %1340 = vmatpush1.msra.mxu0 0.0
        %1341 = vmatprep.subr.mxu0 0.0
        %1342 = vmatpush1.msra.mxu0 0.0
        %1343 = vmatprep.subr.mxu0 0.0
        %1344 = vmatpush1.msra.mxu0 0.0
        %1345 = vmatprep.subr.mxu0 0.0
        %1346 = vmatpush1.msra.mxu0 0.0
        %1347 = vmatprep.subr.mxu0 0.0
        %1348 = vmatpush1.msra.mxu0 0.0
        %1349 = vmatprep.subr.mxu0 0.0
        %1350 = vmatpush1.msra.mxu0 0.0
        %1351 = vmatprep.subr.mxu0 0.0
        %1352 = vmatpush1.msra.mxu0 0.0
        %1353 = vmatprep.subr.mxu0 0.0
        %1354 = vmatpush1.msra.mxu0 0.0
        %1355 = vmatprep.subr.mxu0 0.0
        %1356 = vmatpush1.msra.mxu0 0.0
        %1357 = vmatprep.subr.mxu0 0.0
        %1358 = vmatpush1.msra.mxu0 0.0
        %1359 = vmatprep.subr.mxu0 0.0
        %1360 = vmatpush1.msra.mxu0 0.0
        %1361 = vmatprep.subr.mxu0 0.0
        %1362 = vmatpush1.msra.mxu0 0.0
        %1363 = vmatprep.subr.mxu0 0.0
        %1364 = vmatpush1.msra.mxu0 0.0
        %1365 = vmatprep.mubr.f32.mxu0 0.0
        %1366 = vmatmul.mubr.f32.gmra.mrb[0].mxu0 %v1299
        %v1367 = vpop.f32.mrb[0].mxu0
        %v1368 = vadd.f32 0.0, %v1367
        %v1369 = vpop.f32.mrb[0].mxu0
        %1370 = vdwg.mxu0
        %v1372 = vsel %vm1005, %v535, 0
        %1374 = vmatprep.subr.mxu0 0.0
        %1375 = vmatpush1.msra.mxu0 %v881
        %1376 = vmatprep.subr.mxu0 0.0
        %1377 = vmatpush1.msra.mxu0 0.0
        %1378 = vmatprep.subr.mxu0 0.0
        %1379 = vmatpush1.msra.mxu0 0.0
        %1380 = vmatprep.subr.mxu0 0.0
        %1381 = vmatpush1.msra.mxu0 0.0
        %1382 = vmatprep.subr.mxu0 0.0
        %1383 = vmatpush1.msra.mxu0 0.0
        %1384 = vmatprep.subr.mxu0 0.0
        %1385 = vmatpush1.msra.mxu0 0.0
        %1386 = vmatprep.subr.mxu0 0.0
        %1387 = vmatpush1.msra.mxu0 0.0
        %1388 = vmatprep.subr.mxu0 0.0
        %1389 = vmatpush1.msra.mxu0 0.0
        %1390 = vmatprep.subr.mxu0 0.0
        %1391 = vmatpush1.msra.mxu0 0.0
        %1392 = vmatprep.subr.mxu0 0.0
        %1393 = vmatpush1.msra.mxu0 0.0
        %1394 = vmatprep.subr.mxu0 0.0
        %1395 = vmatpush1.msra.mxu0 0.0
        %1396 = vmatprep.subr.mxu0 0.0
        %1397 = vmatpush1.msra.mxu0 0.0
        %1398 = vmatprep.subr.mxu0 0.0
        %1399 = vmatpush1.msra.mxu0 0.0
        %1400 = vmatprep.subr.mxu0 0.0
        %1401 = vmatpush1.msra.mxu0 0.0
        %1402 = vmatprep.subr.mxu0 0.0
        %1403 = vmatpush1.msra.mxu0 0.0
        %1404 = vmatprep.subr.mxu0 0.0
        %1405 = vmatpush1.msra.mxu0 0.0
        %1406 = vmatprep.subr.mxu0 0.0
        %1407 = vmatpush1.msra.mxu0 0.0
        %1408 = vmatprep.subr.mxu0 0.0
        %1409 = vmatpush1.msra.mxu0 0.0
        %1410 = vmatprep.subr.mxu0 0.0
        %1411 = vmatpush1.msra.mxu0 0.0
        %1412 = vmatprep.subr.mxu0 0.0
        %1413 = vmatpush1.msra.mxu0 0.0
        %1414 = vmatprep.subr.mxu0 0.0
        %1415 = vmatpush1.msra.mxu0 0.0
        %1416 = vmatprep.subr.mxu0 0.0
        %1417 = vmatpush1.msra.mxu0 0.0
        %1418 = vmatprep.subr.mxu0 0.0
        %1419 = vmatpush1.msra.mxu0 0.0
        %1420 = vmatprep.subr.mxu0 0.0
        %1421 = vmatpush1.msra.mxu0 0.0
        %1422 = vmatprep.subr.mxu0 0.0
        %1423 = vmatpush1.msra.mxu0 0.0
        %1424 = vmatprep.subr.mxu0 0.0
        %1425 = vmatpush1.msra.mxu0 0.0
        %1426 = vmatprep.subr.mxu0 0.0
        %1427 = vmatpush1.msra.mxu0 0.0
        %1428 = vmatprep.subr.mxu0 0.0
        %1429 = vmatpush1.msra.mxu0 0.0
        %1430 = vmatprep.subr.mxu0 0.0
        %1431 = vmatpush1.msra.mxu0 0.0
        %1432 = vmatprep.subr.mxu0 0.0
        %1433 = vmatpush1.msra.mxu0 0.0
        %1434 = vmatprep.subr.mxu0 0.0
        %1435 = vmatpush1.msra.mxu0 0.0
        %1436 = vmatprep.subr.mxu0 0.0
        %1437 = vmatpush1.msra.mxu0 0.0
        %1438 = vmatprep.mubr.f32.mxu0 0.0
        %1439 = vmatmul.mubr.f32.gmra.mrb[0].mxu0 %v1372
        %v1440 = vpop.f32.mrb[0].mxu0
        %v1441 = vadd.f32 0.0, %v1440
        %v1442 = vpop.f32.mrb[0].mxu0
        %1443 = vdwg.mxu0
        %v1445 = vsel %vm1005, %v536, 0
        %1447 = vmatprep.subr.mxu0 0.0
        %1448 = vmatpush1.msra.mxu0 %v886
        %1449 = vmatprep.subr.mxu0 0.0
        %1450 = vmatpush1.msra.mxu0 0.0
        %1451 = vmatprep.subr.mxu0 0.0
        %1452 = vmatpush1.msra.mxu0 0.0
        %1453 = vmatprep.subr.mxu0 0.0
        %1454 = vmatpush1.msra.mxu0 0.0
        %1455 = vmatprep.subr.mxu0 0.0
        %1456 = vmatpush1.msra.mxu0 0.0
        %1457 = vmatprep.subr.mxu0 0.0
        %1458 = vmatpush1.msra.mxu0 0.0
        %1459 = vmatprep.subr.mxu0 0.0
        %1460 = vmatpush1.msra.mxu0 0.0
        %1461 = vmatprep.subr.mxu0 0.0
        %1462 = vmatpush1.msra.mxu0 0.0
        %1463 = vmatprep.subr.mxu0 0.0
        %1464 = vmatpush1.msra.mxu0 0.0
        %1465 = vmatprep.subr.mxu0 0.0
        %1466 = vmatpush1.msra.mxu0 0.0
        %1467 = vmatprep.subr.mxu0 0.0
        %1468 = vmatpush1.msra.mxu0 0.0
        %1469 = vmatprep.subr.mxu0 0.0
        %1470 = vmatpush1.msra.mxu0 0.0
        %1471 = vmatprep.subr.mxu0 0.0
        %1472 = vmatpush1.msra.mxu0 0.0
        %1473 = vmatprep.subr.mxu0 0.0
        %1474 = vmatpush1.msra.mxu0 0.0
        %1475 = vmatprep.subr.mxu0 0.0
        %1476 = vmatpush1.msra.mxu0 0.0
        %1477 = vmatprep.subr.mxu0 0.0
        %1478 = vmatpush1.msra.mxu0 0.0
        %1479 = vmatprep.subr.mxu0 0.0
        %1480 = vmatpush1.msra.mxu0 0.0
        %1481 = vmatprep.subr.mxu0 0.0
        %1482 = vmatpush1.msra.mxu0 0.0
        %1483 = vmatprep.subr.mxu0 0.0
        %1484 = vmatpush1.msra.mxu0 0.0
        %1485 = vmatprep.subr.mxu0 0.0
        %1486 = vmatpush1.msra.mxu0 0.0
        %1487 = vmatprep.subr.mxu0 0.0
        %1488 = vmatpush1.msra.mxu0 0.0
        %1489 = vmatprep.subr.mxu0 0.0
        %1490 = vmatpush1.msra.mxu0 0.0
        %1491 = vmatprep.subr.mxu0 0.0
        %1492 = vmatpush1.msra.mxu0 0.0
        %1493 = vmatprep.subr.mxu0 0.0
        %1494 = vmatpush1.msra.mxu0 0.0
        %1495 = vmatprep.subr.mxu0 0.0
        %1496 = vmatpush1.msra.mxu0 0.0
        %1497 = vmatprep.subr.mxu0 0.0
        %1498 = vmatpush1.msra.mxu0 0.0
        %1499 = vmatprep.subr.mxu0 0.0
        %1500 = vmatpush1.msra.mxu0 0.0
        %1501 = vmatprep.subr.mxu0 0.0
        %1502 = vmatpush1.msra.mxu0 0.0
        %1503 = vmatprep.subr.mxu0 0.0
        %1504 = vmatpush1.msra.mxu0 0.0
        %1505 = vmatprep.subr.mxu0 0.0
        %1506 = vmatpush1.msra.mxu0 0.0
        %1507 = vmatprep.subr.mxu0 0.0
        %1508 = vmatpush1.msra.mxu0 0.0
        %1509 = vmatprep.subr.mxu0 0.0
        %1510 = vmatpush1.msra.mxu0 0.0
        %1511 = vmatprep.mubr.f32.mxu0 0.0
        %1512 = vmatmul.mubr.f32.gmra.mrb[0].mxu0 %v1445
        %v1513 = vpop.f32.mrb[0].mxu0
        %v1514 = vadd.f32 0.0, %v1513
        %v1515 = vpop.f32.mrb[0].mxu0
        %1516 = vdwg.mxu0
        %v1518 = vsel %vm1005, %v537, 0
        %1520 = vmatprep.subr.mxu0 0.0
        %1521 = vmatpush1.msra.mxu0 %v891
        %1522 = vmatprep.subr.mxu0 0.0
        %1523 = vmatpush1.msra.mxu0 0.0
        %1524 = vmatprep.subr.mxu0 0.0
        %1525 = vmatpush1.msra.mxu0 0.0
        %1526 = vmatprep.subr.mxu0 0.0
        %1527 = vmatpush1.msra.mxu0 0.0
        %1528 = vmatprep.subr.mxu0 0.0
        %1529 = vmatpush1.msra.mxu0 0.0
        %1530 = vmatprep.subr.mxu0 0.0
        %1531 = vmatpush1.msra.mxu0 0.0
        %1532 = vmatprep.subr.mxu0 0.0
        %1533 = vmatpush1.msra.mxu0 0.0
        %1534 = vmatprep.subr.mxu0 0.0
        %1535 = vmatpush1.msra.mxu0 0.0
        %1536 = vmatprep.subr.mxu0 0.0
        %1537 = vmatpush1.msra.mxu0 0.0
        %1538 = vmatprep.subr.mxu0 0.0
        %1539 = vmatpush1.msra.mxu0 0.0
        %1540 = vmatprep.subr.mxu0 0.0
        %1541 = vmatpush1.msra.mxu0 0.0
        %1542 = vmatprep.subr.mxu0 0.0
        %1543 = vmatpush1.msra.mxu0 0.0
        %1544 = vmatprep.subr.mxu0 0.0
        %1545 = vmatpush1.msra.mxu0 0.0
        %1546 = vmatprep.subr.mxu0 0.0
        %1547 = vmatpush1.msra.mxu0 0.0
        %1548 = vmatprep.subr.mxu0 0.0
        %1549 = vmatpush1.msra.mxu0 0.0
        %1550 = vmatprep.subr.mxu0 0.0
        %1551 = vmatpush1.msra.mxu0 0.0
        %1552 = vmatprep.subr.mxu0 0.0
        %1553 = vmatpush1.msra.mxu0 0.0
        %1554 = vmatprep.subr.mxu0 0.0
        %1555 = vmatpush1.msra.mxu0 0.0
        %1556 = vmatprep.subr.mxu0 0.0
        %1557 = vmatpush1.msra.mxu0 0.0
        %1558 = vmatprep.subr.mxu0 0.0
        %1559 = vmatpush1.msra.mxu0 0.0
        %1560 = vmatprep.subr.mxu0 0.0
        %1561 = vmatpush1.msra.mxu0 0.0
        %1562 = vmatprep.subr.mxu0 0.0
        %1563 = vmatpush1.msra.mxu0 0.0
        %1564 = vmatprep.subr.mxu0 0.0
        %1565 = vmatpush1.msra.mxu0 0.0
        %1566 = vmatprep.subr.mxu0 0.0
        %1567 = vmatpush1.msra.mxu0 0.0
        %1568 = vmatprep.subr.mxu0 0.0
        %1569 = vmatpush1.msra.mxu0 0.0
        %1570 = vmatprep.subr.mxu0 0.0
        %1571 = vmatpush1.msra.mxu0 0.0
        %1572 = vmatprep.subr.mxu0 0.0
        %1573 = vmatpush1.msra.mxu0 0.0
        %1574 = vmatprep.subr.mxu0 0.0
        %1575 = vmatpush1.msra.mxu0 0.0
        %1576 = vmatprep.subr.mxu0 0.0
        %1577 = vmatpush1.msra.mxu0 0.0
        %1578 = vmatprep.subr.mxu0 0.0
        %1579 = vmatpush1.msra.mxu0 0.0
        %1580 = vmatprep.subr.mxu0 0.0
        %1581 = vmatpush1.msra.mxu0 0.0
        %1582 = vmatprep.subr.mxu0 0.0
        %1583 = vmatpush1.msra.mxu0 0.0
        %1584 = vmatprep.mubr.f32.mxu0 0.0
        %1585 = vmatmul.mubr.f32.gmra.mrb[0].mxu0 %v1518
        %v1586 = vpop.f32.mrb[0].mxu0
        %v1587 = vadd.f32 0.0, %v1586
        %v1588 = vpop.f32.mrb[0].mxu0
        %1589 = vdwg.mxu0
        %v1591 = vlaneseq
        %v1592 = vshrl.u32 %v1591, 7
        %v1593 = vsub.s32 0, %v1592
        %v1594 = vrot.slane %v772, %v1593
        %v1596 = vadd.f32 %v1076, %v1594
        %v1597 = vadd.f32 %v1149, %v1594
        %v1598 = vadd.f32 %v1222, %v1594
        %v1599 = vadd.f32 %v1295, %v1594
        %v1600 = vadd.f32 %v1368, %v1594
        %v1601 = vadd.f32 %v1441, %v1594
        %v1602 = vadd.f32 %v1514, %v1594
        %v1603 = vadd.f32 %v1587, %v1594
        %v1605 = vsel %vm1005, %v538, 0
        %1607 = vmatprep.subr.mxu0 0.0
        %1608 = vmatpush1.msra.mxu0 %v967
        %1609 = vmatprep.subr.mxu0 0.0
        %1610 = vmatpush1.msra.mxu0 0.0
        %1611 = vmatprep.subr.mxu0 0.0
        %1612 = vmatpush1.msra.mxu0 0.0
        %1613 = vmatprep.subr.mxu0 0.0
        %1614 = vmatpush1.msra.mxu0 0.0
        %1615 = vmatprep.subr.mxu0 0.0
        %1616 = vmatpush1.msra.mxu0 0.0
        %1617 = vmatprep.subr.mxu0 0.0
        %1618 = vmatpush1.msra.mxu0 0.0
        %1619 = vmatprep.subr.mxu0 0.0
        %1620 = vmatpush1.msra.mxu0 0.0
        %1621 = vmatprep.subr.mxu0 0.0
        %1622 = vmatpush1.msra.mxu0 0.0
        %1623 = vmatprep.subr.mxu0 0.0
        %1624 = vmatpush1.msra.mxu0 0.0
        %1625 = vmatprep.subr.mxu0 0.0
        %1626 = vmatpush1.msra.mxu0 0.0
        %1627 = vmatprep.subr.mxu0 0.0
        %1628 = vmatpush1.msra.mxu0 0.0
        %1629 = vmatprep.subr.mxu0 0.0
        %1630 = vmatpush1.msra.mxu0 0.0
        %1631 = vmatprep.subr.mxu0 0.0
        %1632 = vmatpush1.msra.mxu0 0.0
        %1633 = vmatprep.subr.mxu0 0.0
        %1634 = vmatpush1.msra.mxu0 0.0
        %1635 = vmatprep.subr.mxu0 0.0
        %1636 = vmatpush1.msra.mxu0 0.0
        %1637 = vmatprep.subr.mxu0 0.0
        %1638 = vmatpush1.msra.mxu0 0.0
        %1639 = vmatprep.subr.mxu0 0.0
        %1640 = vmatpush1.msra.mxu0 0.0
        %1641 = vmatprep.subr.mxu0 0.0
        %1642 = vmatpush1.msra.mxu0 0.0
        %1643 = vmatprep.subr.mxu0 0.0
        %1644 = vmatpush1.msra.mxu0 0.0
        %1645 = vmatprep.subr.mxu0 0.0
        %1646 = vmatpush1.msra.mxu0 0.0
        %1647 = vmatprep.subr.mxu0 0.0
        %1648 = vmatpush1.msra.mxu0 0.0
        %1649 = vmatprep.subr.mxu0 0.0
        %1650 = vmatpush1.msra.mxu0 0.0
        %1651 = vmatprep.subr.mxu0 0.0
        %1652 = vmatpush1.msra.mxu0 0.0
        %1653 = vmatprep.subr.mxu0 0.0
        %1654 = vmatpush1.msra.mxu0 0.0
        %1655 = vmatprep.subr.mxu0 0.0
        %1656 = vmatpush1.msra.mxu0 0.0
        %1657 = vmatprep.subr.mxu0 0.0
        %1658 = vmatpush1.msra.mxu0 0.0
        %1659 = vmatprep.subr.mxu0 0.0
        %1660 = vmatpush1.msra.mxu0 0.0
        %1661 = vmatprep.subr.mxu0 0.0
        %1662 = vmatpush1.msra.mxu0 0.0
        %1663 = vmatprep.subr.mxu0 0.0
        %1664 = vmatpush1.msra.mxu0 0.0
        %1665 = vmatprep.subr.mxu0 0.0
        %1666 = vmatpush1.msra.mxu0 0.0
        %1667 = vmatprep.subr.mxu0 0.0
        %1668 = vmatpush1.msra.mxu0 0.0
        %1669 = vmatprep.subr.mxu0 0.0
        %1670 = vmatpush1.msra.mxu0 0.0
        %1671 = vmatprep.mubr.f32.mxu0 0.0
        %1672 = vmatmul.mubr.f32.gmra.mrb[0].mxu0 %v1605
        %v1673 = vpop.f32.mrb[0].mxu0
        %v1674 = vadd.f32 0.0, %v1673
        %v1675 = vpop.f32.mrb[0].mxu0
        %1676 = vdwg.mxu0
        %v1678 = vsel %vm1005, %v539, 0
        %1680 = vmatprep.subr.mxu0 0.0
        %1681 = vmatpush1.msra.mxu0 %v972
        %1682 = vmatprep.subr.mxu0 0.0
        %1683 = vmatpush1.msra.mxu0 0.0
        %1684 = vmatprep.subr.mxu0 0.0
        %1685 = vmatpush1.msra.mxu0 0.0
        %1686 = vmatprep.subr.mxu0 0.0
        %1687 = vmatpush1.msra.mxu0 0.0
        %1688 = vmatprep.subr.mxu0 0.0
        %1689 = vmatpush1.msra.mxu0 0.0
        %1690 = vmatprep.subr.mxu0 0.0
        %1691 = vmatpush1.msra.mxu0 0.0
        %1692 = vmatprep.subr.mxu0 0.0
        %1693 = vmatpush1.msra.mxu0 0.0
        %1694 = vmatprep.subr.mxu0 0.0
        %1695 = vmatpush1.msra.mxu0 0.0
        %1696 = vmatprep.subr.mxu0 0.0
        %1697 = vmatpush1.msra.mxu0 0.0
        %1698 = vmatprep.subr.mxu0 0.0
        %1699 = vmatpush1.msra.mxu0 0.0
        %1700 = vmatprep.subr.mxu0 0.0
        %1701 = vmatpush1.msra.mxu0 0.0
        %1702 = vmatprep.subr.mxu0 0.0
        %1703 = vmatpush1.msra.mxu0 0.0
        %1704 = vmatprep.subr.mxu0 0.0
        %1705 = vmatpush1.msra.mxu0 0.0
        %1706 = vmatprep.subr.mxu0 0.0
        %1707 = vmatpush1.msra.mxu0 0.0
        %1708 = vmatprep.subr.mxu0 0.0
        %1709 = vmatpush1.msra.mxu0 0.0
        %1710 = vmatprep.subr.mxu0 0.0
        %1711 = vmatpush1.msra.mxu0 0.0
        %1712 = vmatprep.subr.mxu0 0.0
        %1713 = vmatpush1.msra.mxu0 0.0
        %1714 = vmatprep.subr.mxu0 0.0
        %1715 = vmatpush1.msra.mxu0 0.0
        %1716 = vmatprep.subr.mxu0 0.0
        %1717 = vmatpush1.msra.mxu0 0.0
        %1718 = vmatprep.subr.mxu0 0.0
        %1719 = vmatpush1.msra.mxu0 0.0
        %1720 = vmatprep.subr.mxu0 0.0
        %1721 = vmatpush1.msra.mxu0 0.0
        %1722 = vmatprep.subr.mxu0 0.0
        %1723 = vmatpush1.msra.mxu0 0.0
        %1724 = vmatprep.subr.mxu0 0.0
        %1725 = vmatpush1.msra.mxu0 0.0
        %1726 = vmatprep.subr.mxu0 0.0
        %1727 = vmatpush1.msra.mxu0 0.0
        %1728 = vmatprep.subr.mxu0 0.0
        %1729 = vmatpush1.msra.mxu0 0.0
        %1730 = vmatprep.subr.mxu0 0.0
        %1731 = vmatpush1.msra.mxu0 0.0
        %1732 = vmatprep.subr.mxu0 0.0
        %1733 = vmatpush1.msra.mxu0 0.0
        %1734 = vmatprep.subr.mxu0 0.0
        %1735 = vmatpush1.msra.mxu0 0.0
        %1736 = vmatprep.subr.mxu0 0.0
        %1737 = vmatpush1.msra.mxu0 0.0
        %1738 = vmatprep.subr.mxu0 0.0
        %1739 = vmatpush1.msra.mxu0 0.0
        %1740 = vmatprep.subr.mxu0 0.0
        %1741 = vmatpush1.msra.mxu0 0.0
        %1742 = vmatprep.subr.mxu0 0.0
        %1743 = vmatpush1.msra.mxu0 0.0
        %1744 = vmatprep.mubr.f32.mxu0 0.0
        %1745 = vmatmul.mubr.f32.gmra.mrb[0].mxu0 %v1678
        %v1746 = vpop.f32.mrb[0].mxu0
        %v1747 = vadd.f32 0.0, %v1746
        %v1748 = vpop.f32.mrb[0].mxu0
        %1749 = vdwg.mxu0
        %v1751 = vsel %vm1005, %v540, 0
        %1753 = vmatprep.subr.mxu0 0.0
        %1754 = vmatpush1.msra.mxu0 %v977
        %1755 = vmatprep.subr.mxu0 0.0
        %1756 = vmatpush1.msra.mxu0 0.0
        %1757 = vmatprep.subr.mxu0 0.0
        %1758 = vmatpush1.msra.mxu0 0.0
        %1759 = vmatprep.subr.mxu0 0.0
        %1760 = vmatpush1.msra.mxu0 0.0
        %1761 = vmatprep.subr.mxu0 0.0
        %1762 = vmatpush1.msra.mxu0 0.0
        %1763 = vmatprep.subr.mxu0 0.0
        %1764 = vmatpush1.msra.mxu0 0.0
        %1765 = vmatprep.subr.mxu0 0.0
        %1766 = vmatpush1.msra.mxu0 0.0
        %1767 = vmatprep.subr.mxu0 0.0
        %1768 = vmatpush1.msra.mxu0 0.0
        %1769 = vmatprep.subr.mxu0 0.0
        %1770 = vmatpush1.msra.mxu0 0.0
        %1771 = vmatprep.subr.mxu0 0.0
        %1772 = vmatpush1.msra.mxu0 0.0
        %1773 = vmatprep.subr.mxu0 0.0
        %1774 = vmatpush1.msra.mxu0 0.0
        %1775 = vmatprep.subr.mxu0 0.0
        %1776 = vmatpush1.msra.mxu0 0.0
        %1777 = vmatprep.subr.mxu0 0.0
        %1778 = vmatpush1.msra.mxu0 0.0
        %1779 = vmatprep.subr.mxu0 0.0
        %1780 = vmatpush1.msra.mxu0 0.0
        %1781 = vmatprep.subr.mxu0 0.0
        %1782 = vmatpush1.msra.mxu0 0.0
        %1783 = vmatprep.subr.mxu0 0.0
        %1784 = vmatpush1.msra.mxu0 0.0
        %1785 = vmatprep.subr.mxu0 0.0
        %1786 = vmatpush1.msra.mxu0 0.0
        %1787 = vmatprep.subr.mxu0 0.0
        %1788 = vmatpush1.msra.mxu0 0.0
        %1789 = vmatprep.subr.mxu0 0.0
        %1790 = vmatpush1.msra.mxu0 0.0
        %1791 = vmatprep.subr.mxu0 0.0
        %1792 = vmatpush1.msra.mxu0 0.0
        %1793 = vmatprep.subr.mxu0 0.0
        %1794 = vmatpush1.msra.mxu0 0.0
        %1795 = vmatprep.subr.mxu0 0.0
        %1796 = vmatpush1.msra.mxu0 0.0
        %1797 = vmatprep.subr.mxu0 0.0
        %1798 = vmatpush1.msra.mxu0 0.0
        %1799 = vmatprep.subr.mxu0 0.0
        %1800 = vmatpush1.msra.mxu0 0.0
        %1801 = vmatprep.subr.mxu0 0.0
        %1802 = vmatpush1.msra.mxu0 0.0
        %1803 = vmatprep.subr.mxu0 0.0
        %1804 = vmatpush1.msra.mxu0 0.0
        %1805 = vmatprep.subr.mxu0 0.0
        %1806 = vmatpush1.msra.mxu0 0.0
        %1807 = vmatprep.subr.mxu0 0.0
        %1808 = vmatpush1.msra.mxu0 0.0
        %1809 = vmatprep.subr.mxu0 0.0
        %1810 = vmatpush1.msra.mxu0 0.0
        %1811 = vmatprep.subr.mxu0 0.0
        %1812 = vmatpush1.msra.mxu0 0.0
        %1813 = vmatprep.subr.mxu0 0.0
        %1814 = vmatpush1.msra.mxu0 0.0
        %1815 = vmatprep.subr.mxu0 0.0
        %1816 = vmatpush1.msra.mxu0 0.0
        %1817 = vmatprep.mubr.f32.mxu0 0.0
        %1818 = vmatmul.mubr.f32.gmra.mrb[0].mxu0 %v1751
        %v1819 = vpop.f32.mrb[0].mxu0
        %v1820 = vadd.f32 0.0, %v1819
        %v1821 = vpop.f32.mrb[0].mxu0
        %1822 = vdwg.mxu0
        %v1824 = vsel %vm1005, %v541, 0
        %1826 = vmatprep.subr.mxu0 0.0
        %1827 = vmatpush1.msra.mxu0 %v982
        %1828 = vmatprep.subr.mxu0 0.0
        %1829 = vmatpush1.msra.mxu0 0.0
        %1830 = vmatprep.subr.mxu0 0.0
        %1831 = vmatpush1.msra.mxu0 0.0
        %1832 = vmatprep.subr.mxu0 0.0
        %1833 = vmatpush1.msra.mxu0 0.0
        %1834 = vmatprep.subr.mxu0 0.0
        %1835 = vmatpush1.msra.mxu0 0.0
        %1836 = vmatprep.subr.mxu0 0.0
        %1837 = vmatpush1.msra.mxu0 0.0
        %1838 = vmatprep.subr.mxu0 0.0
        %1839 = vmatpush1.msra.mxu0 0.0
        %1840 = vmatprep.subr.mxu0 0.0
        %1841 = vmatpush1.msra.mxu0 0.0
        %1842 = vmatprep.subr.mxu0 0.0
        %1843 = vmatpush1.msra.mxu0 0.0
        %1844 = vmatprep.subr.mxu0 0.0
        %1845 = vmatpush1.msra.mxu0 0.0
        %1846 = vmatprep.subr.mxu0 0.0
        %1847 = vmatpush1.msra.mxu0 0.0
        %1848 = vmatprep.subr.mxu0 0.0
        %1849 = vmatpush1.msra.mxu0 0.0
        %1850 = vmatprep.subr.mxu0 0.0
        %1851 = vmatpush1.msra.mxu0 0.0
        %1852 = vmatprep.subr.mxu0 0.0
        %1853 = vmatpush1.msra.mxu0 0.0
        %1854 = vmatprep.subr.mxu0 0.0
        %1855 = vmatpush1.msra.mxu0 0.0
        %1856 = vmatprep.subr.mxu0 0.0
        %1857 = vmatpush1.msra.mxu0 0.0
        %1858 = vmatprep.subr.mxu0 0.0
        %1859 = vmatpush1.msra.mxu0 0.0
        %1860 = vmatprep.subr.mxu0 0.0
        %1861 = vmatpush1.msra.mxu0 0.0
        %1862 = vmatprep.subr.mxu0 0.0
        %1863 = vmatpush1.msra.mxu0 0.0
        %1864 = vmatprep.subr.mxu0 0.0
        %1865 = vmatpush1.msra.mxu0 0.0
        %1866 = vmatprep.subr.mxu0 0.0
        %1867 = vmatpush1.msra.mxu0 0.0
        %1868 = vmatprep.subr.mxu0 0.0
        %1869 = vmatpush1.msra.mxu0 0.0
        %1870 = vmatprep.subr.mxu0 0.0
        %1871 = vmatpush1.msra.mxu0 0.0
        %1872 = vmatprep.subr.mxu0 0.0
        %1873 = vmatpush1.msra.mxu0 0.0
        %1874 = vmatprep.subr.mxu0 0.0
        %1875 = vmatpush1.msra.mxu0 0.0
        %1876 = vmatprep.subr.mxu0 0.0
        %1877 = vmatpush1.msra.mxu0 0.0
        %1878 = vmatprep.subr.mxu0 0.0
        %1879 = vmatpush1.msra.mxu0 0.0
        %1880 = vmatprep.subr.mxu0 0.0
        %1881 = vmatpush1.msra.mxu0 0.0
        %1882 = vmatprep.subr.mxu0 0.0
        %1883 = vmatpush1.msra.mxu0 0.0
        %1884 = vmatprep.subr.mxu0 0.0
        %1885 = vmatpush1.msra.mxu0 0.0
        %1886 = vmatprep.subr.mxu0 0.0
        %1887 = vmatpush1.msra.mxu0 0.0
        %1888 = vmatprep.subr.mxu0 0.0
        %1889 = vmatpush1.msra.mxu0 0.0
        %1890 = vmatprep.mubr.f32.mxu0 0.0
        %1891 = vmatmul.mubr.f32.gmra.mrb[0].mxu0 %v1824
        %v1892 = vpop.f32.mrb[0].mxu0
        %v1893 = vadd.f32 0.0, %v1892
        %v1894 = vpop.f32.mrb[0].mxu0
        %1895 = vdwg.mxu0
        %v1897 = vsel %vm1005, %v542, 0
        %1899 = vmatprep.subr.mxu0 0.0
        %1900 = vmatpush1.msra.mxu0 %v987
        %1901 = vmatprep.subr.mxu0 0.0
        %1902 = vmatpush1.msra.mxu0 0.0
        %1903 = vmatprep.subr.mxu0 0.0
        %1904 = vmatpush1.msra.mxu0 0.0
        %1905 = vmatprep.subr.mxu0 0.0
        %1906 = vmatpush1.msra.mxu0 0.0
        %1907 = vmatprep.subr.mxu0 0.0
        %1908 = vmatpush1.msra.mxu0 0.0
        %1909 = vmatprep.subr.mxu0 0.0
        %1910 = vmatpush1.msra.mxu0 0.0
        %1911 = vmatprep.subr.mxu0 0.0
        %1912 = vmatpush1.msra.mxu0 0.0
        %1913 = vmatprep.subr.mxu0 0.0
        %1914 = vmatpush1.msra.mxu0 0.0
        %1915 = vmatprep.subr.mxu0 0.0
        %1916 = vmatpush1.msra.mxu0 0.0
        %1917 = vmatprep.subr.mxu0 0.0
        %1918 = vmatpush1.msra.mxu0 0.0
        %1919 = vmatprep.subr.mxu0 0.0
        %1920 = vmatpush1.msra.mxu0 0.0
        %1921 = vmatprep.subr.mxu0 0.0
        %1922 = vmatpush1.msra.mxu0 0.0
        %1923 = vmatprep.subr.mxu0 0.0
        %1924 = vmatpush1.msra.mxu0 0.0
        %1925 = vmatprep.subr.mxu0 0.0
        %1926 = vmatpush1.msra.mxu0 0.0
        %1927 = vmatprep.subr.mxu0 0.0
        %1928 = vmatpush1.msra.mxu0 0.0
        %1929 = vmatprep.subr.mxu0 0.0
        %1930 = vmatpush1.msra.mxu0 0.0
        %1931 = vmatprep.subr.mxu0 0.0
        %1932 = vmatpush1.msra.mxu0 0.0
        %1933 = vmatprep.subr.mxu0 0.0
        %1934 = vmatpush1.msra.mxu0 0.0
        %1935 = vmatprep.subr.mxu0 0.0
        %1936 = vmatpush1.msra.mxu0 0.0
        %1937 = vmatprep.subr.mxu0 0.0
        %1938 = vmatpush1.msra.mxu0 0.0
        %1939 = vmatprep.subr.mxu0 0.0
        %1940 = vmatpush1.msra.mxu0 0.0
        %1941 = vmatprep.subr.mxu0 0.0
        %1942 = vmatpush1.msra.mxu0 0.0
        %1943 = vmatprep.subr.mxu0 0.0
        %1944 = vmatpush1.msra.mxu0 0.0
        %1945 = vmatprep.subr.mxu0 0.0
        %1946 = vmatpush1.msra.mxu0 0.0
        %1947 = vmatprep.subr.mxu0 0.0
        %1948 = vmatpush1.msra.mxu0 0.0
        %1949 = vmatprep.subr.mxu0 0.0
        %1950 = vmatpush1.msra.mxu0 0.0
        %1951 = vmatprep.subr.mxu0 0.0
        %1952 = vmatpush1.msra.mxu0 0.0
        %1953 = vmatprep.subr.mxu0 0.0
        %1954 = vmatpush1.msra.mxu0 0.0
        %1955 = vmatprep.subr.mxu0 0.0
        %1956 = vmatpush1.msra.mxu0 0.0
        %1957 = vmatprep.subr.mxu0 0.0
        %1958 = vmatpush1.msra.mxu0 0.0
        %1959 = vmatprep.subr.mxu0 0.0
        %1960 = vmatpush1.msra.mxu0 0.0
        %1961 = vmatprep.subr.mxu0 0.0
        %1962 = vmatpush1.msra.mxu0 0.0
        %1963 = vmatprep.mubr.f32.mxu0 0.0
        %1964 = vmatmul.mubr.f32.gmra.mrb[0].mxu0 %v1897
        %v1965 = vpop.f32.mrb[0].mxu0
        %v1966 = vadd.f32 0.0, %v1965
        %v1967 = vpop.f32.mrb[0].mxu0
        %1968 = vdwg.mxu0
        %v1970 = vsel %vm1005, %v543, 0
        %1972 = vmatprep.subr.mxu0 0.0
        %1973 = vmatpush1.msra.mxu0 %v992
        %1974 = vmatprep.subr.mxu0 0.0
        %1975 = vmatpush1.msra.mxu0 0.0
        %1976 = vmatprep.subr.mxu0 0.0
        %1977 = vmatpush1.msra.mxu0 0.0
        %1978 = vmatprep.subr.mxu0 0.0
        %1979 = vmatpush1.msra.mxu0 0.0
        %1980 = vmatprep.subr.mxu0 0.0
        %1981 = vmatpush1.msra.mxu0 0.0
        %1982 = vmatprep.subr.mxu0 0.0
        %1983 = vmatpush1.msra.mxu0 0.0
        %1984 = vmatprep.subr.mxu0 0.0
        %1985 = vmatpush1.msra.mxu0 0.0
        %1986 = vmatprep.subr.mxu0 0.0
        %1987 = vmatpush1.msra.mxu0 0.0
        %1988 = vmatprep.subr.mxu0 0.0
        %1989 = vmatpush1.msra.mxu0 0.0
        %1990 = vmatprep.subr.mxu0 0.0
        %1991 = vmatpush1.msra.mxu0 0.0
        %1992 = vmatprep.subr.mxu0 0.0
        %1993 = vmatpush1.msra.mxu0 0.0
        %1994 = vmatprep.subr.mxu0 0.0
        %1995 = vmatpush1.msra.mxu0 0.0
        %1996 = vmatprep.subr.mxu0 0.0
        %1997 = vmatpush1.msra.mxu0 0.0
        %1998 = vmatprep.subr.mxu0 0.0
        %1999 = vmatpush1.msra.mxu0 0.0
        %2000 = vmatprep.subr.mxu0 0.0
        %2001 = vmatpush1.msra.mxu0 0.0
        %2002 = vmatprep.subr.mxu0 0.0
        %2003 = vmatpush1.msra.mxu0 0.0
        %2004 = vmatprep.subr.mxu0 0.0
        %2005 = vmatpush1.msra.mxu0 0.0
        %2006 = vmatprep.subr.mxu0 0.0
        %2007 = vmatpush1.msra.mxu0 0.0
        %2008 = vmatprep.subr.mxu0 0.0
        %2009 = vmatpush1.msra.mxu0 0.0
        %2010 = vmatprep.subr.mxu0 0.0
        %2011 = vmatpush1.msra.mxu0 0.0
        %2012 = vmatprep.subr.mxu0 0.0
        %2013 = vmatpush1.msra.mxu0 0.0
        %2014 = vmatprep.subr.mxu0 0.0
        %2015 = vmatpush1.msra.mxu0 0.0
        %2016 = vmatprep.subr.mxu0 0.0
        %2017 = vmatpush1.msra.mxu0 0.0
        %2018 = vmatprep.subr.mxu0 0.0
        %2019 = vmatpush1.msra.mxu0 0.0
        %2020 = vmatprep.subr.mxu0 0.0
        %2021 = vmatpush1.msra.mxu0 0.0
        %2022 = vmatprep.subr.mxu0 0.0
        %2023 = vmatpush1.msra.mxu0 0.0
        %2024 = vmatprep.subr.mxu0 0.0
        %2025 = vmatpush1.msra.mxu0 0.0
        %2026 = vmatprep.subr.mxu0 0.0
        %2027 = vmatpush1.msra.mxu0 0.0
        %2028 = vmatprep.subr.mxu0 0.0
        %2029 = vmatpush1.msra.mxu0 0.0
        %2030 = vmatprep.subr.mxu0 0.0
        %2031 = vmatpush1.msra.mxu0 0.0
        %2032 = vmatprep.subr.mxu0 0.0
        %2033 = vmatpush1.msra.mxu0 0.0
        %2034 = vmatprep.subr.mxu0 0.0
        %2035 = vmatpush1.msra.mxu0 0.0
        %2036 = vmatprep.mubr.f32.mxu0 0.0
        %2037 = vmatmul.mubr.f32.gmra.mrb[0].mxu0 %v1970
        %v2038 = vpop.f32.mrb[0].mxu0
        %v2039 = vadd.f32 0.0, %v2038
        %v2040 = vpop.f32.mrb[0].mxu0
        %2041 = vdwg.mxu0
        %v2043 = vsel %vm1005, %v544, 0
        %2045 = vmatprep.subr.mxu0 0.0
        %2046 = vmatpush1.msra.mxu0 %v997
        %2047 = vmatprep.subr.mxu0 0.0
        %2048 = vmatpush1.msra.mxu0 0.0
        %2049 = vmatprep.subr.mxu0 0.0
        %2050 = vmatpush1.msra.mxu0 0.0
        %2051 = vmatprep.subr.mxu0 0.0
        %2052 = vmatpush1.msra.mxu0 0.0
        %2053 = vmatprep.subr.mxu0 0.0
        %2054 = vmatpush1.msra.mxu0 0.0
        %2055 = vmatprep.subr.mxu0 0.0
        %2056 = vmatpush1.msra.mxu0 0.0
        %2057 = vmatprep.subr.mxu0 0.0
        %2058 = vmatpush1.msra.mxu0 0.0
        %2059 = vmatprep.subr.mxu0 0.0
        %2060 = vmatpush1.msra.mxu0 0.0
        %2061 = vmatprep.subr.mxu0 0.0
        %2062 = vmatpush1.msra.mxu0 0.0
        %2063 = vmatprep.subr.mxu0 0.0
        %2064 = vmatpush1.msra.mxu0 0.0
        %2065 = vmatprep.subr.mxu0 0.0
        %2066 = vmatpush1.msra.mxu0 0.0
        %2067 = vmatprep.subr.mxu0 0.0
        %2068 = vmatpush1.msra.mxu0 0.0
        %2069 = vmatprep.subr.mxu0 0.0
        %2070 = vmatpush1.msra.mxu0 0.0
        %2071 = vmatprep.subr.mxu0 0.0
        %2072 = vmatpush1.msra.mxu0 0.0
        %2073 = vmatprep.subr.mxu0 0.0
        %2074 = vmatpush1.msra.mxu0 0.0
        %2075 = vmatprep.subr.mxu0 0.0
        %2076 = vmatpush1.msra.mxu0 0.0
        %2077 = vmatprep.subr.mxu0 0.0
        %2078 = vmatpush1.msra.mxu0 0.0
        %2079 = vmatprep.subr.mxu0 0.0
        %2080 = vmatpush1.msra.mxu0 0.0
        %2081 = vmatprep.subr.mxu0 0.0
        %2082 = vmatpush1.msra.mxu0 0.0
        %2083 = vmatprep.subr.mxu0 0.0
        %2084 = vmatpush1.msra.mxu0 0.0
        %2085 = vmatprep.subr.mxu0 0.0
        %2086 = vmatpush1.msra.mxu0 0.0
        %2087 = vmatprep.subr.mxu0 0.0
        %2088 = vmatpush1.msra.mxu0 0.0
        %2089 = vmatprep.subr.mxu0 0.0
        %2090 = vmatpush1.msra.mxu0 0.0
        %2091 = vmatprep.subr.mxu0 0.0
        %2092 = vmatpush1.msra.mxu0 0.0
        %2093 = vmatprep.subr.mxu0 0.0
        %2094 = vmatpush1.msra.mxu0 0.0
        %2095 = vmatprep.subr.mxu0 0.0
        %2096 = vmatpush1.msra.mxu0 0.0
        %2097 = vmatprep.subr.mxu0 0.0
        %2098 = vmatpush1.msra.mxu0 0.0
        %2099 = vmatprep.subr.mxu0 0.0
        %2100 = vmatpush1.msra.mxu0 0.0
        %2101 = vmatprep.subr.mxu0 0.0
        %2102 = vmatpush1.msra.mxu0 0.0
        %2103 = vmatprep.subr.mxu0 0.0
        %2104 = vmatpush1.msra.mxu0 0.0
        %2105 = vmatprep.subr.mxu0 0.0
        %2106 = vmatpush1.msra.mxu0 0.0
        %2107 = vmatprep.subr.mxu0 0.0
        %2108 = vmatpush1.msra.mxu0 0.0
        %2109 = vmatprep.mubr.f32.mxu0 0.0
        %2110 = vmatmul.mubr.f32.gmra.mrb[0].mxu0 %v2043
        %v2111 = vpop.f32.mrb[0].mxu0
        %v2112 = vadd.f32 0.0, %v2111
        %v2113 = vpop.f32.mrb[0].mxu0
        %2114 = vdwg.mxu0
        %v2116 = vsel %vm1005, %v545, 0
        %2118 = vmatprep.subr.mxu0 0.0
        %2119 = vmatpush1.msra.mxu0 %v1002
        %2120 = vmatprep.subr.mxu0 0.0
        %2121 = vmatpush1.msra.mxu0 0.0
        %2122 = vmatprep.subr.mxu0 0.0
        %2123 = vmatpush1.msra.mxu0 0.0
        %2124 = vmatprep.subr.mxu0 0.0
        %2125 = vmatpush1.msra.mxu0 0.0
        %2126 = vmatprep.subr.mxu0 0.0
        %2127 = vmatpush1.msra.mxu0 0.0
        %2128 = vmatprep.subr.mxu0 0.0
        %2129 = vmatpush1.msra.mxu0 0.0
        %2130 = vmatprep.subr.mxu0 0.0
        %2131 = vmatpush1.msra.mxu0 0.0
        %2132 = vmatprep.subr.mxu0 0.0
        %2133 = vmatpush1.msra.mxu0 0.0
        %2134 = vmatprep.subr.mxu0 0.0
        %2135 = vmatpush1.msra.mxu0 0.0
        %2136 = vmatprep.subr.mxu0 0.0
        %2137 = vmatpush1.msra.mxu0 0.0
        %2138 = vmatprep.subr.mxu0 0.0
        %2139 = vmatpush1.msra.mxu0 0.0
        %2140 = vmatprep.subr.mxu0 0.0
        %2141 = vmatpush1.msra.mxu0 0.0
        %2142 = vmatprep.subr.mxu0 0.0
        %2143 = vmatpush1.msra.mxu0 0.0
        %2144 = vmatprep.subr.mxu0 0.0
        %2145 = vmatpush1.msra.mxu0 0.0
        %2146 = vmatprep.subr.mxu0 0.0
        %2147 = vmatpush1.msra.mxu0 0.0
        %2148 = vmatprep.subr.mxu0 0.0
        %2149 = vmatpush1.msra.mxu0 0.0
        %2150 = vmatprep.subr.mxu0 0.0
        %2151 = vmatpush1.msra.mxu0 0.0
        %2152 = vmatprep.subr.mxu0 0.0
        %2153 = vmatpush1.msra.mxu0 0.0
        %2154 = vmatprep.subr.mxu0 0.0
        %2155 = vmatpush1.msra.mxu0 0.0
        %2156 = vmatprep.subr.mxu0 0.0
        %2157 = vmatpush1.msra.mxu0 0.0
        %2158 = vmatprep.subr.mxu0 0.0
        %2159 = vmatpush1.msra.mxu0 0.0
        %2160 = vmatprep.subr.mxu0 0.0
        %2161 = vmatpush1.msra.mxu0 0.0
        %2162 = vmatprep.subr.mxu0 0.0
        %2163 = vmatpush1.msra.mxu0 0.0
        %2164 = vmatprep.subr.mxu0 0.0
        %2165 = vmatpush1.msra.mxu0 0.0
        %2166 = vmatprep.subr.mxu0 0.0
        %2167 = vmatpush1.msra.mxu0 0.0
        %2168 = vmatprep.subr.mxu0 0.0
        %2169 = vmatpush1.msra.mxu0 0.0
        %2170 = vmatprep.subr.mxu0 0.0
        %2171 = vmatpush1.msra.mxu0 0.0
        %2172 = vmatprep.subr.mxu0 0.0
        %2173 = vmatpush1.msra.mxu0 0.0
        %2174 = vmatprep.subr.mxu0 0.0
        %2175 = vmatpush1.msra.mxu0 0.0
        %2176 = vmatprep.subr.mxu0 0.0
        %2177 = vmatpush1.msra.mxu0 0.0
        %2178 = vmatprep.subr.mxu0 0.0
        %2179 = vmatpush1.msra.mxu0 0.0
        %2180 = vmatprep.subr.mxu0 0.0
        %2181 = vmatpush1.msra.mxu0 0.0
        %2182 = vmatprep.mubr.f32.mxu0 0.0
        %2183 = vmatmul.mubr.f32.gmra.mrb[0].mxu0 %v2116
        %v2184 = vpop.f32.mrb[0].mxu0
        %v2185 = vadd.f32 0.0, %v2184
        %v2186 = vpop.f32.mrb[0].mxu0
        %2187 = vdwg.mxu0
        %v2189 = vlaneseq
        %v2190 = vshrl.u32 %v2189, 7
        %v2191 = vsub.s32 0, %v2190
        %v2192 = vrot.slane %v773, %v2191
        %v2194 = vadd.f32 %v1674, %v2192
        %v2195 = vadd.f32 %v1747, %v2192
        %v2196 = vadd.f32 %v1820, %v2192
        %v2197 = vadd.f32 %v1893, %v2192
        %v2198 = vadd.f32 %v1966, %v2192
        %v2199 = vadd.f32 %v2039, %v2192
        %v2200 = vadd.f32 %v2112, %v2192
        %v2201 = vadd.f32 %v2185, %v2192
        %2202 = vmatprep.subr.mxu0 %v643
        %2203 = vmatpush1.msra.mxu0 %v642
        %2204 = vmatprep.subr.mxu0 %v647
        %2205 = vmatpush1.msra.mxu0 %v646
        %2206 = vmatprep.subr.mxu0 %v651
        %2207 = vmatpush1.msra.mxu0 %v650
        %2208 = vmatprep.subr.mxu0 %v655
        %2209 = vmatpush1.msra.mxu0 %v654
        %2210 = vmatprep.subr.mxu0 %v659
        %2211 = vmatpush1.msra.mxu0 %v658
        %2212 = vmatprep.subr.mxu0 %v663
        %2213 = vmatpush1.msra.mxu0 %v662
        %2214 = vmatprep.subr.mxu0 %v667
        %2215 = vmatpush1.msra.mxu0 %v666
        %2216 = vmatprep.subr.mxu0 %v671
        %2217 = vmatpush1.msra.mxu0 %v670
        %2218 = vmatprep.subr.mxu0 %v675
        %2219 = vmatpush1.msra.mxu0 %v674
        %2220 = vmatprep.subr.mxu0 %v679
        %2221 = vmatpush1.msra.mxu0 %v678
        %2222 = vmatprep.subr.mxu0 %v683
        %2223 = vmatpush1.msra.mxu0 %v682
        %2224 = vmatprep.subr.mxu0 %v687
        %2225 = vmatpush1.msra.mxu0 %v686
        %2226 = vmatprep.subr.mxu0 %v691
        %2227 = vmatpush1.msra.mxu0 %v690
        %2228 = vmatprep.subr.mxu0 %v695
        %2229 = vmatpush1.msra.mxu0 %v694
        %2230 = vmatprep.subr.mxu0 %v699
        %2231 = vmatpush1.msra.mxu0 %v698
        %2232 = vmatprep.subr.mxu0 %v703
        %2233 = vmatpush1.msra.mxu0 %v702
        %2234 = vmatprep.subr.mxu0 0.0
        %2235 = vmatpush1.msra.mxu0 0.0
        %2236 = vmatprep.subr.mxu0 0.0
        %2237 = vmatpush1.msra.mxu0 0.0
        %2238 = vmatprep.subr.mxu0 0.0
        %2239 = vmatpush1.msra.mxu0 0.0
        %2240 = vmatprep.subr.mxu0 0.0
        %2241 = vmatpush1.msra.mxu0 0.0
        %2242 = vmatprep.subr.mxu0 0.0
        %2243 = vmatpush1.msra.mxu0 0.0
        %2244 = vmatprep.subr.mxu0 0.0
        %2245 = vmatpush1.msra.mxu0 0.0
        %2246 = vmatprep.subr.mxu0 0.0
        %2247 = vmatpush1.msra.mxu0 0.0
        %2248 = vmatprep.subr.mxu0 0.0
        %2249 = vmatpush1.msra.mxu0 0.0
        %2250 = vmatprep.subr.mxu0 0.0
        %2251 = vmatpush1.msra.mxu0 0.0
        %2252 = vmatprep.subr.mxu0 0.0
        %2253 = vmatpush1.msra.mxu0 0.0
        %2254 = vmatprep.subr.mxu0 0.0
        %2255 = vmatpush1.msra.mxu0 0.0
        %2256 = vmatprep.subr.mxu0 0.0
        %2257 = vmatpush1.msra.mxu0 0.0
        %2258 = vmatprep.subr.mxu0 0.0
        %2259 = vmatpush1.msra.mxu0 0.0
        %2260 = vmatprep.subr.mxu0 0.0
        %2261 = vmatpush1.msra.mxu0 0.0
        %2262 = vmatprep.subr.mxu0 0.0
        %2263 = vmatpush1.msra.mxu0 0.0
        %2264 = vmatprep.subr.mxu0 0.0
        %2265 = vmatpush1.msra.mxu0 0.0
        %2266 = vmatprep.mubr.f32.mxu0 0.0
        %2267 = vmatmul.mubr.f32.gmra.mrb[0].mxu0 %v2194
        %v2268 = vpop.f32.mrb[0].mxu0
        %v2269 = vadd.f32 0.0, %v2268
        %v2270 = vpop.f32.mrb[0].mxu0
        %v2271 = vadd.f32 0.0, %v2270
        %2272 = vmatprep.mubr.f32.mxu0 0.0
        %2273 = vmatmul.mubr.f32.gmra.mrb[0].mxu0 %v2195
        %v2274 = vpop.f32.mrb[0].mxu0
        %v2275 = vadd.f32 0.0, %v2274
        %v2276 = vpop.f32.mrb[0].mxu0
        %v2277 = vadd.f32 0.0, %v2276
        %2278 = vmatprep.mubr.f32.mxu0 0.0
        %2279 = vmatmul.mubr.f32.gmra.mrb[0].mxu0 %v2196
        %v2280 = vpop.f32.mrb[0].mxu0
        %v2281 = vadd.f32 0.0, %v2280
        %v2282 = vpop.f32.mrb[0].mxu0
        %v2283 = vadd.f32 0.0, %v2282
        %2284 = vmatprep.mubr.f32.mxu0 0.0
        %2285 = vmatmul.mubr.f32.gmra.mrb[0].mxu0 %v2197
        %v2286 = vpop.f32.mrb[0].mxu0
        %v2287 = vadd.f32 0.0, %v2286
        %v2288 = vpop.f32.mrb[0].mxu0
        %v2289 = vadd.f32 0.0, %v2288
        %2290 = vmatprep.mubr.f32.mxu0 0.0
        %2291 = vmatmul.mubr.f32.gmra.mrb[0].mxu0 %v2198
        %v2292 = vpop.f32.mrb[0].mxu0
        %v2293 = vadd.f32 0.0, %v2292
        %v2294 = vpop.f32.mrb[0].mxu0
        %v2295 = vadd.f32 0.0, %v2294
        %2296 = vmatprep.mubr.f32.mxu0 0.0
        %2297 = vmatmul.mubr.f32.gmra.mrb[0].mxu0 %v2199
        %v2298 = vpop.f32.mrb[0].mxu0
        %v2299 = vadd.f32 0.0, %v2298
        %v2300 = vpop.f32.mrb[0].mxu0
        %v2301 = vadd.f32 0.0, %v2300
        %2302 = vmatprep.mubr.f32.mxu0 0.0
        %2303 = vmatmul.mubr.f32.gmra.mrb[0].mxu0 %v2200
        %v2304 = vpop.f32.mrb[0].mxu0
        %v2305 = vadd.f32 0.0, %v2304
        %v2306 = vpop.f32.mrb[0].mxu0
        %v2307 = vadd.f32 0.0, %v2306
        %2308 = vmatprep.mubr.f32.mxu0 0.0
        %2309 = vmatmul.mubr.f32.gmra.mrb[0].mxu0 %v2201
        %v2310 = vpop.f32.mrb[0].mxu0
        %v2311 = vadd.f32 0.0, %v2310
        %v2312 = vpop.f32.mrb[0].mxu0
        %v2313 = vadd.f32 0.0, %v2312
        %2314 = vdwg.mxu0
        %2315 = vmatprep.subr.mxu0 %v645
        %2316 = vmatpush1.msra.mxu0 %v644
        %2317 = vmatprep.subr.mxu0 %v649
        %2318 = vmatpush1.msra.mxu0 %v648
        %2319 = vmatprep.subr.mxu0 %v653
        %2320 = vmatpush1.msra.mxu0 %v652
        %2321 = vmatprep.subr.mxu0 %v657
        %2322 = vmatpush1.msra.mxu0 %v656
        %2323 = vmatprep.subr.mxu0 %v661
        %2324 = vmatpush1.msra.mxu0 %v660
        %2325 = vmatprep.subr.mxu0 %v665
        %2326 = vmatpush1.msra.mxu0 %v664
        %2327 = vmatprep.subr.mxu0 %v669
        %2328 = vmatpush1.msra.mxu0 %v668
        %2329 = vmatprep.subr.mxu0 %v673
        %2330 = vmatpush1.msra.mxu0 %v672
        %2331 = vmatprep.subr.mxu0 %v677
        %2332 = vmatpush1.msra.mxu0 %v676
        %2333 = vmatprep.subr.mxu0 %v681
        %2334 = vmatpush1.msra.mxu0 %v680
        %2335 = vmatprep.subr.mxu0 %v685
        %2336 = vmatpush1.msra.mxu0 %v684
        %2337 = vmatprep.subr.mxu0 %v689
        %2338 = vmatpush1.msra.mxu0 %v688
        %2339 = vmatprep.subr.mxu0 %v693
        %2340 = vmatpush1.msra.mxu0 %v692
        %2341 = vmatprep.subr.mxu0 %v697
        %2342 = vmatpush1.msra.mxu0 %v696
        %2343 = vmatprep.subr.mxu0 %v701
        %2344 = vmatpush1.msra.mxu0 %v700
        %2345 = vmatprep.subr.mxu0 %v705
        %2346 = vmatpush1.msra.mxu0 %v704
        %2347 = vmatprep.subr.mxu0 0.0
        %2348 = vmatpush1.msra.mxu0 0.0
        %2349 = vmatprep.subr.mxu0 0.0
        %2350 = vmatpush1.msra.mxu0 0.0
        %2351 = vmatprep.subr.mxu0 0.0
        %2352 = vmatpush1.msra.mxu0 0.0
        %2353 = vmatprep.subr.mxu0 0.0
        %2354 = vmatpush1.msra.mxu0 0.0
        %2355 = vmatprep.subr.mxu0 0.0
        %2356 = vmatpush1.msra.mxu0 0.0
        %2357 = vmatprep.subr.mxu0 0.0
        %2358 = vmatpush1.msra.mxu0 0.0
        %2359 = vmatprep.subr.mxu0 0.0
        %2360 = vmatpush1.msra.mxu0 0.0
        %2361 = vmatprep.subr.mxu0 0.0
        %2362 = vmatpush1.msra.mxu0 0.0
        %2363 = vmatprep.subr.mxu0 0.0
        %2364 = vmatpush1.msra.mxu0 0.0
        %2365 = vmatprep.subr.mxu0 0.0
        %2366 = vmatpush1.msra.mxu0 0.0
        %2367 = vmatprep.subr.mxu0 0.0
        %2368 = vmatpush1.msra.mxu0 0.0
        %2369 = vmatprep.subr.mxu0 0.0
        %2370 = vmatpush1.msra.mxu0 0.0
        %2371 = vmatprep.subr.mxu0 0.0
        %2372 = vmatpush1.msra.mxu0 0.0
        %2373 = vmatprep.subr.mxu0 0.0
        %2374 = vmatpush1.msra.mxu0 0.0
        %2375 = vmatprep.subr.mxu0 0.0
        %2376 = vmatpush1.msra.mxu0 0.0
        %2377 = vmatprep.subr.mxu0 0.0
        %2378 = vmatpush1.msra.mxu0 0.0
        %2379 = vmatprep.mubr.f32.mxu0 0.0
        %2380 = vmatmul.mubr.f32.gmra.mrb[0].mxu0 %v2194
        %v2381 = vpop.f32.mrb[0].mxu0
        %v2382 = vadd.f32 0.0, %v2381
        %v2383 = vpop.f32.mrb[0].mxu0
        %v2384 = vadd.f32 0.0, %v2383
        %2385 = vmatprep.mubr.f32.mxu0 0.0
        %2386 = vmatmul.mubr.f32.gmra.mrb[0].mxu0 %v2195
        %v2387 = vpop.f32.mrb[0].mxu0
        %v2388 = vadd.f32 0.0, %v2387
        %v2389 = vpop.f32.mrb[0].mxu0
        %v2390 = vadd.f32 0.0, %v2389
        %2391 = vmatprep.mubr.f32.mxu0 0.0
        %2392 = vmatmul.mubr.f32.gmra.mrb[0].mxu0 %v2196
        %v2393 = vpop.f32.mrb[0].mxu0
        %v2394 = vadd.f32 0.0, %v2393
        %v2395 = vpop.f32.mrb[0].mxu0
        %v2396 = vadd.f32 0.0, %v2395
        %2397 = vmatprep.mubr.f32.mxu0 0.0
        %2398 = vmatmul.mubr.f32.gmra.mrb[0].mxu0 %v2197
        %v2399 = vpop.f32.mrb[0].mxu0
        %v2400 = vadd.f32 0.0, %v2399
        %v2401 = vpop.f32.mrb[0].mxu0
        %v2402 = vadd.f32 0.0, %v2401
        %2403 = vmatprep.mubr.f32.mxu0 0.0
        %2404 = vmatmul.mubr.f32.gmra.mrb[0].mxu0 %v2198
        %v2405 = vpop.f32.mrb[0].mxu0
        %v2406 = vadd.f32 0.0, %v2405
        %v2407 = vpop.f32.mrb[0].mxu0
        %v2408 = vadd.f32 0.0, %v2407
        %2409 = vmatprep.mubr.f32.mxu0 0.0
        %2410 = vmatmul.mubr.f32.gmra.mrb[0].mxu0 %v2199
        %v2411 = vpop.f32.mrb[0].mxu0
        %v2412 = vadd.f32 0.0, %v2411
        %v2413 = vpop.f32.mrb[0].mxu0
        %v2414 = vadd.f32 0.0, %v2413
        %2415 = vmatprep.mubr.f32.mxu0 0.0
        %2416 = vmatmul.mubr.f32.gmra.mrb[0].mxu0 %v2200
        %v2417 = vpop.f32.mrb[0].mxu0
        %v2418 = vadd.f32 0.0, %v2417
        %v2419 = vpop.f32.mrb[0].mxu0
        %v2420 = vadd.f32 0.0, %v2419
        %2421 = vmatprep.mubr.f32.mxu0 0.0
        %2422 = vmatmul.mubr.f32.gmra.mrb[0].mxu0 %v2201
        %v2423 = vpop.f32.mrb[0].mxu0
        %v2424 = vadd.f32 0.0, %v2423
        %v2425 = vpop.f32.mrb[0].mxu0
        %v2426 = vadd.f32 0.0, %v2425
        %2427 = vdwg.mxu0
        %2428 = vmatprep.subr.mxu0 %v579
        %2429 = vmatpush1.msra.mxu0 %v578
        %2430 = vmatprep.subr.mxu0 %v583
        %2431 = vmatpush1.msra.mxu0 %v582
        %2432 = vmatprep.subr.mxu0 %v587
        %2433 = vmatpush1.msra.mxu0 %v586
        %2434 = vmatprep.subr.mxu0 %v591
        %2435 = vmatpush1.msra.mxu0 %v590
        %2436 = vmatprep.subr.mxu0 %v595
        %2437 = vmatpush1.msra.mxu0 %v594
        %2438 = vmatprep.subr.mxu0 %v599
        %2439 = vmatpush1.msra.mxu0 %v598
        %2440 = vmatprep.subr.mxu0 %v603
        %2441 = vmatpush1.msra.mxu0 %v602
        %2442 = vmatprep.subr.mxu0 %v607
        %2443 = vmatpush1.msra.mxu0 %v606
        %2444 = vmatprep.subr.mxu0 %v611
        %2445 = vmatpush1.msra.mxu0 %v610
        %2446 = vmatprep.subr.mxu0 %v615
        %2447 = vmatpush1.msra.mxu0 %v614
        %2448 = vmatprep.subr.mxu0 %v619
        %2449 = vmatpush1.msra.mxu0 %v618
        %2450 = vmatprep.subr.mxu0 %v623
        %2451 = vmatpush1.msra.mxu0 %v622
        %2452 = vmatprep.subr.mxu0 %v627
        %2453 = vmatpush1.msra.mxu0 %v626
        %2454 = vmatprep.subr.mxu0 %v631
        %2455 = vmatpush1.msra.mxu0 %v630
        %2456 = vmatprep.subr.mxu0 %v635
        %2457 = vmatpush1.msra.mxu0 %v634
        %2458 = vmatprep.subr.mxu0 %v639
        %2459 = vmatpush1.msra.mxu0 %v638
        %2460 = vmatprep.subr.mxu0 0.0
        %2461 = vmatpush1.msra.mxu0 0.0
        %2462 = vmatprep.subr.mxu0 0.0
        %2463 = vmatpush1.msra.mxu0 0.0
        %2464 = vmatprep.subr.mxu0 0.0
        %2465 = vmatpush1.msra.mxu0 0.0
        %2466 = vmatprep.subr.mxu0 0.0
        %2467 = vmatpush1.msra.mxu0 0.0
        %2468 = vmatprep.subr.mxu0 0.0
        %2469 = vmatpush1.msra.mxu0 0.0
        %2470 = vmatprep.subr.mxu0 0.0
        %2471 = vmatpush1.msra.mxu0 0.0
        %2472 = vmatprep.subr.mxu0 0.0
        %2473 = vmatpush1.msra.mxu0 0.0
        %2474 = vmatprep.subr.mxu0 0.0
        %2475 = vmatpush1.msra.mxu0 0.0
        %2476 = vmatprep.subr.mxu0 0.0
        %2477 = vmatpush1.msra.mxu0 0.0
        %2478 = vmatprep.subr.mxu0 0.0
        %2479 = vmatpush1.msra.mxu0 0.0
        %2480 = vmatprep.subr.mxu0 0.0
        %2481 = vmatpush1.msra.mxu0 0.0
        %2482 = vmatprep.subr.mxu0 0.0
        %2483 = vmatpush1.msra.mxu0 0.0
        %2484 = vmatprep.subr.mxu0 0.0
        %2485 = vmatpush1.msra.mxu0 0.0
        %2486 = vmatprep.subr.mxu0 0.0
        %2487 = vmatpush1.msra.mxu0 0.0
        %2488 = vmatprep.subr.mxu0 0.0
        %2489 = vmatpush1.msra.mxu0 0.0
        %2490 = vmatprep.subr.mxu0 0.0
        %2491 = vmatpush1.msra.mxu0 0.0
        %2492 = vmatprep.mubr.f32.mxu0 0.0
        %2493 = vmatmul.mubr.f32.gmra.mrb[0].mxu0 %v1596
        %v2494 = vpop.f32.mrb[0].mxu0
        %v2495 = vadd.f32 %v2269, %v2494
        %v2496 = vpop.f32.mrb[0].mxu0
        %v2497 = vadd.f32 %v2271, %v2496
        %2498 = vmatprep.mubr.f32.mxu0 0.0
        %2499 = vmatmul.mubr.f32.gmra.mrb[0].mxu0 %v1597
        %v2500 = vpop.f32.mrb[0].mxu0
        %v2501 = vadd.f32 %v2275, %v2500
        %v2502 = vpop.f32.mrb[0].mxu0
        %v2503 = vadd.f32 %v2277, %v2502
        %2504 = vmatprep.mubr.f32.mxu0 0.0
        %2505 = vmatmul.mubr.f32.gmra.mrb[0].mxu0 %v1598
        %v2506 = vpop.f32.mrb[0].mxu0
        %v2507 = vadd.f32 %v2281, %v2506
        %v2508 = vpop.f32.mrb[0].mxu0
        %v2509 = vadd.f32 %v2283, %v2508
        %2510 = vmatprep.mubr.f32.mxu0 0.0
        %2511 = vmatmul.mubr.f32.gmra.mrb[0].mxu0 %v1599
        %v2512 = vpop.f32.mrb[0].mxu0
        %v2513 = vadd.f32 %v2287, %v2512
        %v2514 = vpop.f32.mrb[0].mxu0
        %v2515 = vadd.f32 %v2289, %v2514
        %2516 = vmatprep.mubr.f32.mxu0 0.0
        %2517 = vmatmul.mubr.f32.gmra.mrb[0].mxu0 %v1600
        %v2518 = vpop.f32.mrb[0].mxu0
        %v2519 = vadd.f32 %v2293, %v2518
        %v2520 = vpop.f32.mrb[0].mxu0
        %v2521 = vadd.f32 %v2295, %v2520
        %2522 = vmatprep.mubr.f32.mxu0 0.0
        %2523 = vmatmul.mubr.f32.gmra.mrb[0].mxu0 %v1601
        %v2524 = vpop.f32.mrb[0].mxu0
        %v2525 = vadd.f32 %v2299, %v2524
        %v2526 = vpop.f32.mrb[0].mxu0
        %v2527 = vadd.f32 %v2301, %v2526
        %2528 = vmatprep.mubr.f32.mxu0 0.0
        %2529 = vmatmul.mubr.f32.gmra.mrb[0].mxu0 %v1602
        %v2530 = vpop.f32.mrb[0].mxu0
        %v2531 = vadd.f32 %v2305, %v2530
        %v2532 = vpop.f32.mrb[0].mxu0
        %v2533 = vadd.f32 %v2307, %v2532
        %2534 = vmatprep.mubr.f32.mxu0 0.0
        %2535 = vmatmul.mubr.f32.gmra.mrb[0].mxu0 %v1603
        %v2536 = vpop.f32.mrb[0].mxu0
        %v2537 = vadd.f32 %v2311, %v2536
        %v2538 = vpop.f32.mrb[0].mxu0
        %v2539 = vadd.f32 %v2313, %v2538
        %2540 = vdwg.mxu0
        %2541 = vmatprep.subr.mxu0 %v581
        %2542 = vmatpush1.msra.mxu0 %v580
        %2543 = vmatprep.subr.mxu0 %v585
        %2544 = vmatpush1.msra.mxu0 %v584
        %2545 = vmatprep.subr.mxu0 %v589
        %2546 = vmatpush1.msra.mxu0 %v588
        %2547 = vmatprep.subr.mxu0 %v593
        %2548 = vmatpush1.msra.mxu0 %v592
        %2549 = vmatprep.subr.mxu0 %v597
        %2550 = vmatpush1.msra.mxu0 %v596
        %2551 = vmatprep.subr.mxu0 %v601
        %2552 = vmatpush1.msra.mxu0 %v600
        %2553 = vmatprep.subr.mxu0 %v605
        %2554 = vmatpush1.msra.mxu0 %v604
        %2555 = vmatprep.subr.mxu0 %v609
        %2556 = vmatpush1.msra.mxu0 %v608
        %2557 = vmatprep.subr.mxu0 %v613
        %2558 = vmatpush1.msra.mxu0 %v612
        %2559 = vmatprep.subr.mxu0 %v617
        %2560 = vmatpush1.msra.mxu0 %v616
        %2561 = vmatprep.subr.mxu0 %v621
        %2562 = vmatpush1.msra.mxu0 %v620
        %2563 = vmatprep.subr.mxu0 %v625
        %2564 = vmatpush1.msra.mxu0 %v624
        %2565 = vmatprep.subr.mxu0 %v629
        %2566 = vmatpush1.msra.mxu0 %v628
        %2567 = vmatprep.subr.mxu0 %v633
        %2568 = vmatpush1.msra.mxu0 %v632
        %2569 = vmatprep.subr.mxu0 %v637
        %2570 = vmatpush1.msra.mxu0 %v636
        %2571 = vmatprep.subr.mxu0 %v641
        %2572 = vmatpush1.msra.mxu0 %v640
        %2573 = vmatprep.subr.mxu0 0.0
        %2574 = vmatpush1.msra.mxu0 0.0
        %2575 = vmatprep.subr.mxu0 0.0
        %2576 = vmatpush1.msra.mxu0 0.0
        %2577 = vmatprep.subr.mxu0 0.0
        %2578 = vmatpush1.msra.mxu0 0.0
        %2579 = vmatprep.subr.mxu0 0.0
        %2580 = vmatpush1.msra.mxu0 0.0
        %2581 = vmatprep.subr.mxu0 0.0
        %2582 = vmatpush1.msra.mxu0 0.0
        %2583 = vmatprep.subr.mxu0 0.0
        %2584 = vmatpush1.msra.mxu0 0.0
        %2585 = vmatprep.subr.mxu0 0.0
        %2586 = vmatpush1.msra.mxu0 0.0
        %2587 = vmatprep.subr.mxu0 0.0
        %2588 = vmatpush1.msra.mxu0 0.0
        %2589 = vmatprep.subr.mxu0 0.0
        %2590 = vmatpush1.msra.mxu0 0.0
        %2591 = vmatprep.subr.mxu0 0.0
        %2592 = vmatpush1.msra.mxu0 0.0
        %2593 = vmatprep.subr.mxu0 0.0
        %2594 = vmatpush1.msra.mxu0 0.0
        %2595 = vmatprep.subr.mxu0 0.0
        %2596 = vmatpush1.msra.mxu0 0.0
        %2597 = vmatprep.subr.mxu0 0.0
        %2598 = vmatpush1.msra.mxu0 0.0
        %2599 = vmatprep.subr.mxu0 0.0
        %2600 = vmatpush1.msra.mxu0 0.0
        %2601 = vmatprep.subr.mxu0 0.0
        %2602 = vmatpush1.msra.mxu0 0.0
        %2603 = vmatprep.subr.mxu0 0.0
        %2604 = vmatpush1.msra.mxu0 0.0
        %2605 = vmatprep.mubr.f32.mxu0 0.0
        %2606 = vmatmul.mubr.f32.gmra.mrb[0].mxu0 %v1596
        %v2607 = vpop.f32.mrb[0].mxu0
        %v2608 = vadd.f32 %v2382, %v2607
        %v2609 = vpop.f32.mrb[0].mxu0
        %v2610 = vadd.f32 %v2384, %v2609
        %2611 = vmatprep.mubr.f32.mxu0 0.0
        %2612 = vmatmul.mubr.f32.gmra.mrb[0].mxu0 %v1597
        %v2613 = vpop.f32.mrb[0].mxu0
        %v2614 = vadd.f32 %v2388, %v2613
        %v2615 = vpop.f32.mrb[0].mxu0
        %v2616 = vadd.f32 %v2390, %v2615
        %2617 = vmatprep.mubr.f32.mxu0 0.0
        %2618 = vmatmul.mubr.f32.gmra.mrb[0].mxu0 %v1598
        %v2619 = vpop.f32.mrb[0].mxu0
        %v2620 = vadd.f32 %v2394, %v2619
        %v2621 = vpop.f32.mrb[0].mxu0
        %v2622 = vadd.f32 %v2396, %v2621
        %2623 = vmatprep.mubr.f32.mxu0 0.0
        %2624 = vmatmul.mubr.f32.gmra.mrb[0].mxu0 %v1599
        %v2625 = vpop.f32.mrb[0].mxu0
        %v2626 = vadd.f32 %v2400, %v2625
        %v2627 = vpop.f32.mrb[0].mxu0
        %v2628 = vadd.f32 %v2402, %v2627
        %2629 = vmatprep.mubr.f32.mxu0 0.0
        %2630 = vmatmul.mubr.f32.gmra.mrb[0].mxu0 %v1600
        %v2631 = vpop.f32.mrb[0].mxu0
        %v2632 = vadd.f32 %v2406, %v2631
        %v2633 = vpop.f32.mrb[0].mxu0
        %v2634 = vadd.f32 %v2408, %v2633
        %2635 = vmatprep.mubr.f32.mxu0 0.0
        %2636 = vmatmul.mubr.f32.gmra.mrb[0].mxu0 %v1601
        %v2637 = vpop.f32.mrb[0].mxu0
        %v2638 = vadd.f32 %v2412, %v2637
        %v2639 = vpop.f32.mrb[0].mxu0
        %v2640 = vadd.f32 %v2414, %v2639
        %2641 = vmatprep.mubr.f32.mxu0 0.0
        %2642 = vmatmul.mubr.f32.gmra.mrb[0].mxu0 %v1602
        %v2643 = vpop.f32.mrb[0].mxu0
        %v2644 = vadd.f32 %v2418, %v2643
        %v2645 = vpop.f32.mrb[0].mxu0
        %v2646 = vadd.f32 %v2420, %v2645
        %2647 = vmatprep.mubr.f32.mxu0 0.0
        %2648 = vmatmul.mubr.f32.gmra.mrb[0].mxu0 %v1603
        %v2649 = vpop.f32.mrb[0].mxu0
        %v2650 = vadd.f32 %v2424, %v2649
        %v2651 = vpop.f32.mrb[0].mxu0
        %v2652 = vadd.f32 %v2426, %v2651
        %2653 = vdwg.mxu0
        %2654 = vmatprep.subr.mxu0 %v707
        %2655 = vmatpush1.msra.mxu0 %v706
        %2656 = vmatprep.subr.mxu0 %v711
        %2657 = vmatpush1.msra.mxu0 %v710
        %2658 = vmatprep.subr.mxu0 %v715
        %2659 = vmatpush1.msra.mxu0 %v714
        %2660 = vmatprep.subr.mxu0 %v719
        %2661 = vmatpush1.msra.mxu0 %v718
        %2662 = vmatprep.subr.mxu0 %v723
        %2663 = vmatpush1.msra.mxu0 %v722
        %2664 = vmatprep.subr.mxu0 %v727
        %2665 = vmatpush1.msra.mxu0 %v726
        %2666 = vmatprep.subr.mxu0 %v731
        %2667 = vmatpush1.msra.mxu0 %v730
        %2668 = vmatprep.subr.mxu0 %v735
        %2669 = vmatpush1.msra.mxu0 %v734
        %2670 = vmatprep.subr.mxu0 %v739
        %2671 = vmatpush1.msra.mxu0 %v738
        %2672 = vmatprep.subr.mxu0 %v743
        %2673 = vmatpush1.msra.mxu0 %v742
        %2674 = vmatprep.subr.mxu0 %v747
        %2675 = vmatpush1.msra.mxu0 %v746
        %2676 = vmatprep.subr.mxu0 %v751
        %2677 = vmatpush1.msra.mxu0 %v750
        %2678 = vmatprep.subr.mxu0 %v755
        %2679 = vmatpush1.msra.mxu0 %v754
        %2680 = vmatprep.subr.mxu0 %v759
        %2681 = vmatpush1.msra.mxu0 %v758
        %2682 = vmatprep.subr.mxu0 %v763
        %2683 = vmatpush1.msra.mxu0 %v762
        %2684 = vmatprep.subr.mxu0 %v767
        %2685 = vmatpush1.msra.mxu0 %v766
        %2686 = vmatprep.subr.mxu0 0.0
        %2687 = vmatpush1.msra.mxu0 0.0
        %2688 = vmatprep.subr.mxu0 0.0
        %2689 = vmatpush1.msra.mxu0 0.0
        %2690 = vmatprep.subr.mxu0 0.0
        %2691 = vmatpush1.msra.mxu0 0.0
        %2692 = vmatprep.subr.mxu0 0.0
        %2693 = vmatpush1.msra.mxu0 0.0
        %2694 = vmatprep.subr.mxu0 0.0
        %2695 = vmatpush1.msra.mxu0 0.0
        %2696 = vmatprep.subr.mxu0 0.0
        %2697 = vmatpush1.msra.mxu0 0.0
        %2698 = vmatprep.subr.mxu0 0.0
        %2699 = vmatpush1.msra.mxu0 0.0
        %2700 = vmatprep.subr.mxu0 0.0
        %2701 = vmatpush1.msra.mxu0 0.0
        %2702 = vmatprep.subr.mxu0 0.0
        %2703 = vmatpush1.msra.mxu0 0.0
        %2704 = vmatprep.subr.mxu0 0.0
        %2705 = vmatpush1.msra.mxu0 0.0
        %2706 = vmatprep.subr.mxu0 0.0
        %2707 = vmatpush1.msra.mxu0 0.0
        %2708 = vmatprep.subr.mxu0 0.0
        %2709 = vmatpush1.msra.mxu0 0.0
        %2710 = vmatprep.subr.mxu0 0.0
        %2711 = vmatpush1.msra.mxu0 0.0
        %2712 = vmatprep.subr.mxu0 0.0
        %2713 = vmatpush1.msra.mxu0 0.0
        %2714 = vmatprep.subr.mxu0 0.0
        %2715 = vmatpush1.msra.mxu0 0.0
        %2716 = vmatprep.subr.mxu0 0.0
        %2717 = vmatpush1.msra.mxu0 0.0
        %2718 = vmatprep.mubr.f32.mxu0 0.0
        %2719 = vmatmul.mubr.f32.gmra.mrb[0].mxu0 %v775
        %v2720 = vpop.f32.mrb[0].mxu0
        %v2721 = vadd.f32 0.0, %v2720
        %v2722 = vpop.f32.mrb[0].mxu0
        %v2723 = vadd.f32 0.0, %v2722
        %2724 = vmatprep.mubr.f32.mxu0 0.0
        %2725 = vmatmul.mubr.f32.gmra.mrb[0].mxu0 %v776
        %v2726 = vpop.f32.mrb[0].mxu0
        %v2727 = vadd.f32 0.0, %v2726
        %v2728 = vpop.f32.mrb[0].mxu0
        %v2729 = vadd.f32 0.0, %v2728
        %2730 = vmatprep.mubr.f32.mxu0 0.0
        %2731 = vmatmul.mubr.f32.gmra.mrb[0].mxu0 %v777
        %v2732 = vpop.f32.mrb[0].mxu0
        %v2733 = vadd.f32 0.0, %v2732
        %v2734 = vpop.f32.mrb[0].mxu0
        %v2735 = vadd.f32 0.0, %v2734
        %2736 = vmatprep.mubr.f32.mxu0 0.0
        %2737 = vmatmul.mubr.f32.gmra.mrb[0].mxu0 %v778
        %v2738 = vpop.f32.mrb[0].mxu0
        %v2739 = vadd.f32 0.0, %v2738
        %v2740 = vpop.f32.mrb[0].mxu0
        %v2741 = vadd.f32 0.0, %v2740
        %2742 = vmatprep.mubr.f32.mxu0 0.0
        %2743 = vmatmul.mubr.f32.gmra.mrb[0].mxu0 %v779
        %v2744 = vpop.f32.mrb[0].mxu0
        %v2745 = vadd.f32 0.0, %v2744
        %v2746 = vpop.f32.mrb[0].mxu0
        %v2747 = vadd.f32 0.0, %v2746
        %2748 = vmatprep.mubr.f32.mxu0 0.0
        %2749 = vmatmul.mubr.f32.gmra.mrb[0].mxu0 %v780
        %v2750 = vpop.f32.mrb[0].mxu0
        %v2751 = vadd.f32 0.0, %v2750
        %v2752 = vpop.f32.mrb[0].mxu0
        %v2753 = vadd.f32 0.0, %v2752
        %2754 = vmatprep.mubr.f32.mxu0 0.0
        %2755 = vmatmul.mubr.f32.gmra.mrb[0].mxu0 %v781
        %v2756 = vpop.f32.mrb[0].mxu0
        %v2757 = vadd.f32 0.0, %v2756
        %v2758 = vpop.f32.mrb[0].mxu0
        %v2759 = vadd.f32 0.0, %v2758
        %2760 = vmatprep.mubr.f32.mxu0 0.0
        %2761 = vmatmul.mubr.f32.gmra.mrb[0].mxu0 %v782
        %v2762 = vpop.f32.mrb[0].mxu0
        %v2763 = vadd.f32 0.0, %v2762
        %v2764 = vpop.f32.mrb[0].mxu0
        %v2765 = vadd.f32 0.0, %v2764
        %2766 = vdwg.mxu0
        %2767 = vmatprep.subr.mxu0 %v709
        %2768 = vmatpush1.msra.mxu0 %v708
        %2769 = vmatprep.subr.mxu0 %v713
        %2770 = vmatpush1.msra.mxu0 %v712
        %2771 = vmatprep.subr.mxu0 %v717
        %2772 = vmatpush1.msra.mxu0 %v716
        %2773 = vmatprep.subr.mxu0 %v721
        %2774 = vmatpush1.msra.mxu0 %v720
        %2775 = vmatprep.subr.mxu0 %v725
        %2776 = vmatpush1.msra.mxu0 %v724
        %2777 = vmatprep.subr.mxu0 %v729
        %2778 = vmatpush1.msra.mxu0 %v728
        %2779 = vmatprep.subr.mxu0 %v733
        %2780 = vmatpush1.msra.mxu0 %v732
        %2781 = vmatprep.subr.mxu0 %v737
        %2782 = vmatpush1.msra.mxu0 %v736
        %2783 = vmatprep.subr.mxu0 %v741
        %2784 = vmatpush1.msra.mxu0 %v740
        %2785 = vmatprep.subr.mxu0 %v745
        %2786 = vmatpush1.msra.mxu0 %v744
        %2787 = vmatprep.subr.mxu0 %v749
        %2788 = vmatpush1.msra.mxu0 %v748
        %2789 = vmatprep.subr.mxu0 %v753
        %2790 = vmatpush1.msra.mxu0 %v752
        %2791 = vmatprep.subr.mxu0 %v757
        %2792 = vmatpush1.msra.mxu0 %v756
        %2793 = vmatprep.subr.mxu0 %v761
        %2794 = vmatpush1.msra.mxu0 %v760
        %2795 = vmatprep.subr.mxu0 %v765
        %2796 = vmatpush1.msra.mxu0 %v764
        %2797 = vmatprep.subr.mxu0 %v769
        %2798 = vmatpush1.msra.mxu0 %v768
        %2799 = vmatprep.subr.mxu0 0.0
        %2800 = vmatpush1.msra.mxu0 0.0
        %2801 = vmatprep.subr.mxu0 0.0
        %2802 = vmatpush1.msra.mxu0 0.0
        %2803 = vmatprep.subr.mxu0 0.0
        %2804 = vmatpush1.msra.mxu0 0.0
        %2805 = vmatprep.subr.mxu0 0.0
        %2806 = vmatpush1.msra.mxu0 0.0
        %2807 = vmatprep.subr.mxu0 0.0
        %2808 = vmatpush1.msra.mxu0 0.0
        %2809 = vmatprep.subr.mxu0 0.0
        %2810 = vmatpush1.msra.mxu0 0.0
        %2811 = vmatprep.subr.mxu0 0.0
        %2812 = vmatpush1.msra.mxu0 0.0
        %2813 = vmatprep.subr.mxu0 0.0
        %2814 = vmatpush1.msra.mxu0 0.0
        %2815 = vmatprep.subr.mxu0 0.0
        %2816 = vmatpush1.msra.mxu0 0.0
        %2817 = vmatprep.subr.mxu0 0.0
        %2818 = vmatpush1.msra.mxu0 0.0
        %2819 = vmatprep.subr.mxu0 0.0
        %2820 = vmatpush1.msra.mxu0 0.0
        %2821 = vmatprep.subr.mxu0 0.0
        %2822 = vmatpush1.msra.mxu0 0.0
        %2823 = vmatprep.subr.mxu0 0.0
        %2824 = vmatpush1.msra.mxu0 0.0
        %2825 = vmatprep.subr.mxu0 0.0
        %2826 = vmatpush1.msra.mxu0 0.0
        %2827 = vmatprep.subr.mxu0 0.0
        %2828 = vmatpush1.msra.mxu0 0.0
        %2829 = vmatprep.subr.mxu0 0.0
        %2830 = vmatpush1.msra.mxu0 0.0
        %2831 = vmatprep.mubr.f32.mxu0 0.0
        %2832 = vmatmul.mubr.f32.gmra.mrb[0].mxu0 %v775
        %v2833 = vpop.f32.mrb[0].mxu0
        %v2834 = vadd.f32 0.0, %v2833
        %v2835 = vpop.f32.mrb[0].mxu0
        %v2836 = vadd.f32 0.0, %v2835
        %2837 = vmatprep.mubr.f32.mxu0 0.0
        %2838 = vmatmul.mubr.f32.gmra.mrb[0].mxu0 %v776
        %v2839 = vpop.f32.mrb[0].mxu0
        %v2840 = vadd.f32 0.0, %v2839
        %v2841 = vpop.f32.mrb[0].mxu0
        %v2842 = vadd.f32 0.0, %v2841
        %2843 = vmatprep.mubr.f32.mxu0 0.0
        %2844 = vmatmul.mubr.f32.gmra.mrb[0].mxu0 %v777
        %v2845 = vpop.f32.mrb[0].mxu0
        %v2846 = vadd.f32 0.0, %v2845
        %v2847 = vpop.f32.mrb[0].mxu0
        %v2848 = vadd.f32 0.0, %v2847
        %2849 = vmatprep.mubr.f32.mxu0 0.0
        %2850 = vmatmul.mubr.f32.gmra.mrb[0].mxu0 %v778
        %v2851 = vpop.f32.mrb[0].mxu0
        %v2852 = vadd.f32 0.0, %v2851
        %v2853 = vpop.f32.mrb[0].mxu0
        %v2854 = vadd.f32 0.0, %v2853
        %2855 = vmatprep.mubr.f32.mxu0 0.0
        %2856 = vmatmul.mubr.f32.gmra.mrb[0].mxu0 %v779
        %v2857 = vpop.f32.mrb[0].mxu0
        %v2858 = vadd.f32 0.0, %v2857
        %v2859 = vpop.f32.mrb[0].mxu0
        %v2860 = vadd.f32 0.0, %v2859
        %2861 = vmatprep.mubr.f32.mxu0 0.0
        %2862 = vmatmul.mubr.f32.gmra.mrb[0].mxu0 %v780
        %v2863 = vpop.f32.mrb[0].mxu0
        %v2864 = vadd.f32 0.0, %v2863
        %v2865 = vpop.f32.mrb[0].mxu0
        %v2866 = vadd.f32 0.0, %v2865
        %2867 = vmatprep.mubr.f32.mxu0 0.0
        %2868 = vmatmul.mubr.f32.gmra.mrb[0].mxu0 %v781
        %v2869 = vpop.f32.mrb[0].mxu0
        %v2870 = vadd.f32 0.0, %v2869
        %v2871 = vpop.f32.mrb[0].mxu0
        %v2872 = vadd.f32 0.0, %v2871
        %2873 = vmatprep.mubr.f32.mxu0 0.0
        %2874 = vmatmul.mubr.f32.gmra.mrb[0].mxu0 %v782
        %v2875 = vpop.f32.mrb[0].mxu0
        %v2876 = vadd.f32 0.0, %v2875
        %v2877 = vpop.f32.mrb[0].mxu0
        %v2878 = vadd.f32 0.0, %v2877
        %2879 = vdwg.mxu0
        %v2880 = vadd.f32 %v2495, %v2721
        %v2881 = vadd.f32 %v2497, %v2723
        %v2882 = vadd.f32 %v2608, %v2834
        %v2883 = vadd.f32 %v2610, %v2836
        %v2884 = vadd.f32 %v2501, %v2727
        %v2885 = vadd.f32 %v2503, %v2729
        %v2886 = vadd.f32 %v2614, %v2840
        %v2887 = vadd.f32 %v2616, %v2842
        %v2888 = vadd.f32 %v2507, %v2733
        %v2889 = vadd.f32 %v2509, %v2735
        %v2890 = vadd.f32 %v2620, %v2846
        %v2891 = vadd.f32 %v2622, %v2848
        %v2892 = vadd.f32 %v2513, %v2739
        %v2893 = vadd.f32 %v2515, %v2741
        %v2894 = vadd.f32 %v2626, %v2852
        %v2895 = vadd.f32 %v2628, %v2854
        %v2896 = vadd.f32 %v2519, %v2745
        %v2897 = vadd.f32 %v2521, %v2747
        %v2898 = vadd.f32 %v2632, %v2858
        %v2899 = vadd.f32 %v2634, %v2860
        %v2900 = vadd.f32 %v2525, %v2751
        %v2901 = vadd.f32 %v2527, %v2753
        %v2902 = vadd.f32 %v2638, %v2864
        %v2903 = vadd.f32 %v2640, %v2866
        %v2904 = vadd.f32 %v2531, %v2757
        %v2905 = vadd.f32 %v2533, %v2759
        %v2906 = vadd.f32 %v2644, %v2870
        %v2907 = vadd.f32 %v2646, %v2872
        %v2908 = vadd.f32 %v2537, %v2763
        %v2909 = vadd.f32 %v2539, %v2765
        %v2910 = vadd.f32 %v2650, %v2876
        %v2911 = vadd.f32 %v2652, %v2878
        %v2913 = vlaneseq
        %v2914 = vshrl.u32 %v2913, 7
        %v2915 = vsub.s32 0, %v2914
        %v2916 = vrot.slane %v774, %v2915
        %v2917 = vlaneseq
        %v2918 = vshrl.u32 %v2917, 7
        %v2919 = vsub.s32 1, %v2918
        %v2920 = vrot.slane %v774, %v2919
        %v2921 = vlaneseq
        %v2922 = vshrl.u32 %v2921, 7
        %v2923 = vsub.s32 2, %v2922
        %v2924 = vrot.slane %v774, %v2923
        %v2925 = vlaneseq
        %v2926 = vshrl.u32 %v2925, 7
        %v2927 = vsub.s32 3, %v2926
        %v2928 = vrot.slane %v774, %v2927
        %v2933 = vadd.f32 %v2880, %v2916
        %v2934 = vadd.f32 %v2881, %v2920
        %v2935 = vadd.f32 %v2882, %v2924
        %v2936 = vadd.f32 %v2883, %v2928
        %v2937 = vadd.f32 %v2884, %v2916
        %v2938 = vadd.f32 %v2885, %v2920
        %v2939 = vadd.f32 %v2886, %v2924
        %v2940 = vadd.f32 %v2887, %v2928
        %v2941 = vadd.f32 %v2888, %v2916
        %v2942 = vadd.f32 %v2889, %v2920
        %v2943 = vadd.f32 %v2890, %v2924
        %v2944 = vadd.f32 %v2891, %v2928
        %v2945 = vadd.f32 %v2892, %v2916
        %v2946 = vadd.f32 %v2893, %v2920
        %v2947 = vadd.f32 %v2894, %v2924
        %v2948 = vadd.f32 %v2895, %v2928
        %v2949 = vadd.f32 %v2896, %v2916
        %v2950 = vadd.f32 %v2897, %v2920
        %v2951 = vadd.f32 %v2898, %v2924
        %v2952 = vadd.f32 %v2899, %v2928
        %v2953 = vadd.f32 %v2900, %v2916
        %v2954 = vadd.f32 %v2901, %v2920
        %v2955 = vadd.f32 %v2902, %v2924
        %v2956 = vadd.f32 %v2903, %v2928
        %v2957 = vadd.f32 %v2904, %v2916
        %v2958 = vadd.f32 %v2905, %v2920
        %v2959 = vadd.f32 %v2906, %v2924
        %v2960 = vadd.f32 %v2907, %v2928
        %v2961 = vadd.f32 %v2908, %v2916
        %v2962 = vadd.f32 %v2909, %v2920
        %v2963 = vadd.f32 %v2910, %v2924
        %v2964 = vadd.f32 %v2911, %v2928
        %v2965 = vxor.u32 %v2933, 2147483648
        %v2966 = vxor.u32 %v2937, 2147483648
        %v2967 = vxor.u32 %v2941, 2147483648
        %v2968 = vxor.u32 %v2945, 2147483648
        %v2969 = vxor.u32 %v2949, 2147483648
        %v2970 = vxor.u32 %v2953, 2147483648
        %v2971 = vxor.u32 %v2957, 2147483648
        %v2972 = vxor.u32 %v2961, 2147483648
        %v2973 = vmul.f32 %v2965, 1.442695
        %v2974 = vpow.pop %v2973
        %v2975 = vmul.f32 %v2966, 1.442695
        %v2976 = vpow.pop %v2975
        %v2977 = vmul.f32 %v2967, 1.442695
        %v2978 = vpow.pop %v2977
        %v2979 = vmul.f32 %v2968, 1.442695
        %v2980 = vpow.pop %v2979
        %v2981 = vmul.f32 %v2969, 1.442695
        %v2982 = vpow.pop %v2981
        %v2983 = vmul.f32 %v2970, 1.442695
        %v2984 = vpow.pop %v2983
        %v2985 = vmul.f32 %v2971, 1.442695
        %v2986 = vpow.pop %v2985
        %v2987 = vmul.f32 %v2972, 1.442695
        %v2988 = vpow.pop %v2987
        %v2989 = vadd.f32 %v2974, 1.0
        %v2990 = vadd.f32 %v2976, 1.0
        %v2991 = vadd.f32 %v2978, 1.0
        %v2992 = vadd.f32 %v2980, 1.0
        %v2993 = vadd.f32 %v2982, 1.0
        %v2994 = vadd.f32 %v2984, 1.0
        %v2995 = vadd.f32 %v2986, 1.0
        %v2996 = vadd.f32 %v2988, 1.0
        %v2997 = vrcp.pop %v2989
        %v2998 = vmul.f32 1.0, %v2997
        %v2999 = vrcp.pop %v2990
        %v3000 = vmul.f32 1.0, %v2999
        %v3001 = vrcp.pop %v2991
        %v3002 = vmul.f32 1.0, %v3001
        %v3003 = vrcp.pop %v2992
        %v3004 = vmul.f32 1.0, %v3003
        %v3005 = vrcp.pop %v2993
        %v3006 = vmul.f32 1.0, %v3005
        %v3007 = vrcp.pop %v2994
        %v3008 = vmul.f32 1.0, %v3007
        %v3009 = vrcp.pop %v2995
        %v3010 = vmul.f32 1.0, %v3009
        %v3011 = vrcp.pop %v2996
        %v3012 = vmul.f32 1.0, %v3011
        %v3013 = vxor.u32 %v2934, 2147483648
        %v3014 = vxor.u32 %v2938, 2147483648
        %v3015 = vxor.u32 %v2942, 2147483648
        %v3016 = vxor.u32 %v2946, 2147483648
        %v3017 = vxor.u32 %v2950, 2147483648
        %v3018 = vxor.u32 %v2954, 2147483648
        %v3019 = vxor.u32 %v2958, 2147483648
        %v3020 = vxor.u32 %v2962, 2147483648
        %v3021 = vmul.f32 %v3013, 1.442695
        %v3022 = vpow.pop %v3021
        %v3023 = vmul.f32 %v3014, 1.442695
        %v3024 = vpow.pop %v3023
        %v3025 = vmul.f32 %v3015, 1.442695
        %v3026 = vpow.pop %v3025
        %v3027 = vmul.f32 %v3016, 1.442695
        %v3028 = vpow.pop %v3027
        %v3029 = vmul.f32 %v3017, 1.442695
        %v3030 = vpow.pop %v3029
        %v3031 = vmul.f32 %v3018, 1.442695
        %v3032 = vpow.pop %v3031
        %v3033 = vmul.f32 %v3019, 1.442695
        %v3034 = vpow.pop %v3033
        %v3035 = vmul.f32 %v3020, 1.442695
        %v3036 = vpow.pop %v3035
        %v3037 = vadd.f32 %v3022, 1.0
        %v3038 = vadd.f32 %v3024, 1.0
        %v3039 = vadd.f32 %v3026, 1.0
        %v3040 = vadd.f32 %v3028, 1.0
        %v3041 = vadd.f32 %v3030, 1.0
        %v3042 = vadd.f32 %v3032, 1.0
        %v3043 = vadd.f32 %v3034, 1.0
        %v3044 = vadd.f32 %v3036, 1.0
        %v3045 = vrcp.pop %v3037
        %v3046 = vmul.f32 1.0, %v3045
        %v3047 = vrcp.pop %v3038
        %v3048 = vmul.f32 1.0, %v3047
        %v3049 = vrcp.pop %v3039
        %v3050 = vmul.f32 1.0, %v3049
        %v3051 = vrcp.pop %v3040
        %v3052 = vmul.f32 1.0, %v3051
        %v3053 = vrcp.pop %v3041
        %v3054 = vmul.f32 1.0, %v3053
        %v3055 = vrcp.pop %v3042
        %v3056 = vmul.f32 1.0, %v3055
        %v3057 = vrcp.pop %v3043
        %v3058 = vmul.f32 1.0, %v3057
        %v3059 = vrcp.pop %v3044
        %v3060 = vmul.f32 1.0, %v3059
        %v3061 = vmul.f32 %v2998, %v2936
        %v3062 = vmul.f32 %v3000, %v2940
        %v3063 = vmul.f32 %v3002, %v2944
        %v3064 = vmul.f32 %v3004, %v2948
        %v3065 = vmul.f32 %v3006, %v2952
        %v3066 = vmul.f32 %v3008, %v2956
        %v3067 = vmul.f32 %v3010, %v2960
        %v3068 = vmul.f32 %v3012, %v2964
        %v3069 = vadd.f32 %v2935, %v3061
        %v3070 = vadd.f32 %v2939, %v3062
        %v3071 = vadd.f32 %v2943, %v3063
        %v3072 = vadd.f32 %v2947, %v3064
        %v3073 = vadd.f32 %v2951, %v3065
        %v3074 = vadd.f32 %v2955, %v3066
        %v3075 = vadd.f32 %v2959, %v3067
        %v3076 = vadd.f32 %v2963, %v3068
        %v3077 = vtanh.pop %v3069
        %v3078 = vtanh.pop %v3070
        %v3079 = vtanh.pop %v3071
        %v3080 = vtanh.pop %v3072
        %v3081 = vtanh.pop %v3073
        %v3082 = vtanh.pop %v3074
        %v3083 = vtanh.pop %v3075
        %v3084 = vtanh.pop %v3076
        %v3085 = vsub.f32 %v775, %v3077
        %v3086 = vsub.f32 %v776, %v3078
        %v3087 = vsub.f32 %v777, %v3079
        %v3088 = vsub.f32 %v778, %v3080
        %v3089 = vsub.f32 %v779, %v3081
        %v3090 = vsub.f32 %v780, %v3082
        %v3091 = vsub.f32 %v781, %v3083
        %v3092 = vsub.f32 %v782, %v3084
        %v3093 = vmul.f32 %v3046, %v3085
        %v3094 = vmul.f32 %v3048, %v3086
        %v3095 = vmul.f32 %v3050, %v3087
        %v3096 = vmul.f32 %v3052, %v3088
        %v3097 = vmul.f32 %v3054, %v3089
        %v3098 = vmul.f32 %v3056, %v3090
        %v3099 = vmul.f32 %v3058, %v3091
        %v3100 = vmul.f32 %v3060, %v3092
        %v3101 = vadd.f32 %v3077, %v3093
        %v3102 = vadd.f32 %v3078, %v3094
        %v3103 = vadd.f32 %v3079, %v3095
        %v3104 = vadd.f32 %v3080, %v3096
        %v3105 = vadd.f32 %v3081, %v3097
        %v3106 = vadd.f32 %v3082, %v3098
        %v3107 = vadd.f32 %v3083, %v3099
        %v3108 = vadd.f32 %v3084, %v3100
        %3109 = vmatprep.subr.mxu0 0.0
        %3110 = vmatpush1.msra.mxu0 %v546
        %3111 = vmatprep.subr.mxu0 0.0
        %3112 = vmatpush1.msra.mxu0 %v547
        %3113 = vmatprep.subr.mxu0 0.0
        %3114 = vmatpush1.msra.mxu0 %v548
        %3115 = vmatprep.subr.mxu0 0.0
        %3116 = vmatpush1.msra.mxu0 %v549
        %3117 = vmatprep.subr.mxu0 0.0
        %3118 = vmatpush1.msra.mxu0 %v550
        %3119 = vmatprep.subr.mxu0 0.0
        %3120 = vmatpush1.msra.mxu0 %v551
        %3121 = vmatprep.subr.mxu0 0.0
        %3122 = vmatpush1.msra.mxu0 %v552
        %3123 = vmatprep.subr.mxu0 0.0
        %3124 = vmatpush1.msra.mxu0 %v553
        %3125 = vmatprep.subr.mxu0 0.0
        %3126 = vmatpush1.msra.mxu0 %v554
        %3127 = vmatprep.subr.mxu0 0.0
        %3128 = vmatpush1.msra.mxu0 %v555
        %3129 = vmatprep.subr.mxu0 0.0
        %3130 = vmatpush1.msra.mxu0 %v556
        %3131 = vmatprep.subr.mxu0 0.0
        %3132 = vmatpush1.msra.mxu0 %v557
        %3133 = vmatprep.subr.mxu0 0.0
        %3134 = vmatpush1.msra.mxu0 %v558
        %3135 = vmatprep.subr.mxu0 0.0
        %3136 = vmatpush1.msra.mxu0 %v559
        %3137 = vmatprep.subr.mxu0 0.0
        %3138 = vmatpush1.msra.mxu0 %v560
        %3139 = vmatprep.subr.mxu0 0.0
        %3140 = vmatpush1.msra.mxu0 %v561
        %3141 = vmatprep.subr.mxu0 0.0
        %3142 = vmatpush1.msra.mxu0 0.0
        %3143 = vmatprep.subr.mxu0 0.0
        %3144 = vmatpush1.msra.mxu0 0.0
        %3145 = vmatprep.subr.mxu0 0.0
        %3146 = vmatpush1.msra.mxu0 0.0
        %3147 = vmatprep.subr.mxu0 0.0
        %3148 = vmatpush1.msra.mxu0 0.0
        %3149 = vmatprep.subr.mxu0 0.0
        %3150 = vmatpush1.msra.mxu0 0.0
        %3151 = vmatprep.subr.mxu0 0.0
        %3152 = vmatpush1.msra.mxu0 0.0
        %3153 = vmatprep.subr.mxu0 0.0
        %3154 = vmatpush1.msra.mxu0 0.0
        %3155 = vmatprep.subr.mxu0 0.0
        %3156 = vmatpush1.msra.mxu0 0.0
        %3157 = vmatprep.subr.mxu0 0.0
        %3158 = vmatpush1.msra.mxu0 0.0
        %3159 = vmatprep.subr.mxu0 0.0
        %3160 = vmatpush1.msra.mxu0 0.0
        %3161 = vmatprep.subr.mxu0 0.0
        %3162 = vmatpush1.msra.mxu0 0.0
        %3163 = vmatprep.subr.mxu0 0.0
        %3164 = vmatpush1.msra.mxu0 0.0
        %3165 = vmatprep.subr.mxu0 0.0
        %3166 = vmatpush1.msra.mxu0 0.0
        %3167 = vmatprep.subr.mxu0 0.0
        %3168 = vmatpush1.msra.mxu0 0.0
        %3169 = vmatprep.subr.mxu0 0.0
        %3170 = vmatpush1.msra.mxu0 0.0
        %3171 = vmatprep.subr.mxu0 0.0
        %3172 = vmatpush1.msra.mxu0 0.0
        %3173 = vmatprep.mubr.f32.mxu0 0.0
        %3174 = vmatmul.mubr.f32.gmra.mrb[0].mxu0 %v3101
        %v3175 = vpop.f32.mrb[0].mxu0
        %v3176 = vadd.f32 %v787, %v3175
        %v3177 = vpop.f32.mrb[0].mxu0
        %3178 = vmatprep.mubr.f32.mxu0 0.0
        %3179 = vmatmul.mubr.f32.gmra.mrb[0].mxu0 %v3102
        %v3180 = vpop.f32.mrb[0].mxu0
        %v3181 = vadd.f32 %v787, %v3180
        %v3182 = vpop.f32.mrb[0].mxu0
        %3183 = vmatprep.mubr.f32.mxu0 0.0
        %3184 = vmatmul.mubr.f32.gmra.mrb[0].mxu0 %v3103
        %v3185 = vpop.f32.mrb[0].mxu0
        %v3186 = vadd.f32 %v787, %v3185
        %v3187 = vpop.f32.mrb[0].mxu0
        %3188 = vmatprep.mubr.f32.mxu0 0.0
        %3189 = vmatmul.mubr.f32.gmra.mrb[0].mxu0 %v3104
        %v3190 = vpop.f32.mrb[0].mxu0
        %v3191 = vadd.f32 %v787, %v3190
        %v3192 = vpop.f32.mrb[0].mxu0
        %3193 = vmatprep.mubr.f32.mxu0 0.0
        %3194 = vmatmul.mubr.f32.gmra.mrb[0].mxu0 %v3105
        %v3195 = vpop.f32.mrb[0].mxu0
        %v3196 = vadd.f32 %v787, %v3195
        %v3197 = vpop.f32.mrb[0].mxu0
        %3198 = vmatprep.mubr.f32.mxu0 0.0
        %3199 = vmatmul.mubr.f32.gmra.mrb[0].mxu0 %v3106
        %v3200 = vpop.f32.mrb[0].mxu0
        %v3201 = vadd.f32 %v787, %v3200
        %v3202 = vpop.f32.mrb[0].mxu0
        %3203 = vmatprep.mubr.f32.mxu0 0.0
        %3204 = vmatmul.mubr.f32.gmra.mrb[0].mxu0 %v3107
        %v3205 = vpop.f32.mrb[0].mxu0
        %v3206 = vadd.f32 %v787, %v3205
        %v3207 = vpop.f32.mrb[0].mxu0
        %3208 = vmatprep.mubr.f32.mxu0 0.0
        %3209 = vmatmul.mubr.f32.gmra.mrb[0].mxu0 %v3108
        %v3210 = vpop.f32.mrb[0].mxu0
        %v3211 = vadd.f32 %v787, %v3210
        %v3212 = vpop.f32.mrb[0].mxu0
        %3213 = vdwg.mxu0
        %3214 = vmatprep.subr.mxu0 0.0
        %3215 = vmatpush1.msra.mxu0 %v562
        %3216 = vmatprep.subr.mxu0 0.0
        %3217 = vmatpush1.msra.mxu0 %v563
        %3218 = vmatprep.subr.mxu0 0.0
        %3219 = vmatpush1.msra.mxu0 %v564
        %3220 = vmatprep.subr.mxu0 0.0
        %3221 = vmatpush1.msra.mxu0 %v565
        %3222 = vmatprep.subr.mxu0 0.0
        %3223 = vmatpush1.msra.mxu0 %v566
        %3224 = vmatprep.subr.mxu0 0.0
        %3225 = vmatpush1.msra.mxu0 %v567
        %3226 = vmatprep.subr.mxu0 0.0
        %3227 = vmatpush1.msra.mxu0 %v568
        %3228 = vmatprep.subr.mxu0 0.0
        %3229 = vmatpush1.msra.mxu0 %v569
        %3230 = vmatprep.subr.mxu0 0.0
        %3231 = vmatpush1.msra.mxu0 %v570
        %3232 = vmatprep.subr.mxu0 0.0
        %3233 = vmatpush1.msra.mxu0 %v571
        %3234 = vmatprep.subr.mxu0 0.0
        %3235 = vmatpush1.msra.mxu0 %v572
        %3236 = vmatprep.subr.mxu0 0.0
        %3237 = vmatpush1.msra.mxu0 %v573
        %3238 = vmatprep.subr.mxu0 0.0
        %3239 = vmatpush1.msra.mxu0 %v574
        %3240 = vmatprep.subr.mxu0 0.0
        %3241 = vmatpush1.msra.mxu0 %v575
        %3242 = vmatprep.subr.mxu0 0.0
        %3243 = vmatpush1.msra.mxu0 %v576
        %3244 = vmatprep.subr.mxu0 0.0
        %3245 = vmatpush1.msra.mxu0 %v577
        %3246 = vmatprep.subr.mxu0 0.0
        %3247 = vmatpush1.msra.mxu0 0.0
        %3248 = vmatprep.subr.mxu0 0.0
        %3249 = vmatpush1.msra.mxu0 0.0
        %3250 = vmatprep.subr.mxu0 0.0
        %3251 = vmatpush1.msra.mxu0 0.0
        %3252 = vmatprep.subr.mxu0 0.0
        %3253 = vmatpush1.msra.mxu0 0.0
        %3254 = vmatprep.subr.mxu0 0.0
        %3255 = vmatpush1.msra.mxu0 0.0
        %3256 = vmatprep.subr.mxu0 0.0
        %3257 = vmatpush1.msra.mxu0 0.0
        %3258 = vmatprep.subr.mxu0 0.0
        %3259 = vmatpush1.msra.mxu0 0.0
        %3260 = vmatprep.subr.mxu0 0.0
        %3261 = vmatpush1.msra.mxu0 0.0
        %3262 = vmatprep.subr.mxu0 0.0
        %3263 = vmatpush1.msra.mxu0 0.0
        %3264 = vmatprep.subr.mxu0 0.0
        %3265 = vmatpush1.msra.mxu0 0.0
        %3266 = vmatprep.subr.mxu0 0.0
        %3267 = vmatpush1.msra.mxu0 0.0
        %3268 = vmatprep.subr.mxu0 0.0
        %3269 = vmatpush1.msra.mxu0 0.0
        %3270 = vmatprep.subr.mxu0 0.0
        %3271 = vmatpush1.msra.mxu0 0.0
        %3272 = vmatprep.subr.mxu0 0.0
        %3273 = vmatpush1.msra.mxu0 0.0
        %3274 = vmatprep.subr.mxu0 0.0
        %3275 = vmatpush1.msra.mxu0 0.0
        %3276 = vmatprep.subr.mxu0 0.0
        %3277 = vmatpush1.msra.mxu0 0.0
        %3278 = vmatprep.mubr.f32.mxu0 0.0
        %3279 = vmatmul.mubr.f32.gmra.mrb[0].mxu0 %v3101
        %v3280 = vpop.f32.mrb[0].mxu0
        %v3281 = vadd.f32 %v898, %v3280
        %v3282 = vpop.f32.mrb[0].mxu0
        %3283 = vmatprep.mubr.f32.mxu0 0.0
        %3284 = vmatmul.mubr.f32.gmra.mrb[0].mxu0 %v3102
        %v3285 = vpop.f32.mrb[0].mxu0
        %v3286 = vadd.f32 %v898, %v3285
        %v3287 = vpop.f32.mrb[0].mxu0
        %3288 = vmatprep.mubr.f32.mxu0 0.0
        %3289 = vmatmul.mubr.f32.gmra.mrb[0].mxu0 %v3103
        %v3290 = vpop.f32.mrb[0].mxu0
        %v3291 = vadd.f32 %v898, %v3290
        %v3292 = vpop.f32.mrb[0].mxu0
        %3293 = vmatprep.mubr.f32.mxu0 0.0
        %3294 = vmatmul.mubr.f32.gmra.mrb[0].mxu0 %v3104
        %v3295 = vpop.f32.mrb[0].mxu0
        %v3296 = vadd.f32 %v898, %v3295
        %v3297 = vpop.f32.mrb[0].mxu0
        %3298 = vmatprep.mubr.f32.mxu0 0.0
        %3299 = vmatmul.mubr.f32.gmra.mrb[0].mxu0 %v3105
        %v3300 = vpop.f32.mrb[0].mxu0
        %v3301 = vadd.f32 %v898, %v3300
        %v3302 = vpop.f32.mrb[0].mxu0
        %3303 = vmatprep.mubr.f32.mxu0 0.0
        %3304 = vmatmul.mubr.f32.gmra.mrb[0].mxu0 %v3106
        %v3305 = vpop.f32.mrb[0].mxu0
        %v3306 = vadd.f32 %v898, %v3305
        %v3307 = vpop.f32.mrb[0].mxu0
        %3308 = vmatprep.mubr.f32.mxu0 0.0
        %3309 = vmatmul.mubr.f32.gmra.mrb[0].mxu0 %v3107
        %v3310 = vpop.f32.mrb[0].mxu0
        %v3311 = vadd.f32 %v898, %v3310
        %v3312 = vpop.f32.mrb[0].mxu0
        %3313 = vmatprep.mubr.f32.mxu0 0.0
        %3314 = vmatmul.mubr.f32.gmra.mrb[0].mxu0 %v3108
        %v3315 = vpop.f32.mrb[0].mxu0
        %v3316 = vadd.f32 %v898, %v3315
        %v3317 = vpop.f32.mrb[0].mxu0
        %3318 = vdwg.mxu0
        %3319 = vmatprep.subr.mxu0 0.0
        %3320 = vmatpush1.msra.mxu0 %v3176
        %3321 = vmatprep.subr.mxu0 0.0
        %3322 = vmatpush1.msra.mxu0 0.0
        %3323 = vmatprep.subr.mxu0 0.0
        %3324 = vmatpush1.msra.mxu0 0.0
        %3325 = vmatprep.subr.mxu0 0.0
        %3326 = vmatpush1.msra.mxu0 0.0
        %3327 = vmatprep.subr.mxu0 0.0
        %3328 = vmatpush1.msra.mxu0 0.0
        %3329 = vmatprep.subr.mxu0 0.0
        %3330 = vmatpush1.msra.mxu0 0.0
        %3331 = vmatprep.subr.mxu0 0.0
        %3332 = vmatpush1.msra.mxu0 0.0
        %3333 = vmatprep.subr.mxu0 0.0
        %3334 = vmatpush1.msra.mxu0 0.0
        %3335 = vmatprep.subr.mxu0 0.0
        %3336 = vmatpush1.msra.mxu0 0.0
        %3337 = vmatprep.subr.mxu0 0.0
        %3338 = vmatpush1.msra.mxu0 0.0
        %3339 = vmatprep.subr.mxu0 0.0
        %3340 = vmatpush1.msra.mxu0 0.0
        %3341 = vmatprep.subr.mxu0 0.0
        %3342 = vmatpush1.msra.mxu0 0.0
        %3343 = vmatprep.subr.mxu0 0.0
        %3344 = vmatpush1.msra.mxu0 0.0
        %3345 = vmatprep.subr.mxu0 0.0
        %3346 = vmatpush1.msra.mxu0 0.0
        %3347 = vmatprep.subr.mxu0 0.0
        %3348 = vmatpush1.msra.mxu0 0.0
        %3349 = vmatprep.subr.mxu0 0.0
        %3350 = vmatpush1.msra.mxu0 0.0
        %3351 = vmatprep.subr.mxu0 0.0
        %3352 = vmatpush1.msra.mxu0 0.0
        %3353 = vmatprep.subr.mxu0 0.0
        %3354 = vmatpush1.msra.mxu0 0.0
        %3355 = vmatprep.subr.mxu0 0.0
        %3356 = vmatpush1.msra.mxu0 0.0
        %3357 = vmatprep.subr.mxu0 0.0
        %3358 = vmatpush1.msra.mxu0 0.0
        %3359 = vmatprep.subr.mxu0 0.0
        %3360 = vmatpush1.msra.mxu0 0.0
        %3361 = vmatprep.subr.mxu0 0.0
        %3362 = vmatpush1.msra.mxu0 0.0
        %3363 = vmatprep.subr.mxu0 0.0
        %3364 = vmatpush1.msra.mxu0 0.0
        %3365 = vmatprep.subr.mxu0 0.0
        %3366 = vmatpush1.msra.mxu0 0.0
        %3367 = vmatprep.subr.mxu0 0.0
        %3368 = vmatpush1.msra.mxu0 0.0
        %3369 = vmatprep.subr.mxu0 0.0
        %3370 = vmatpush1.msra.mxu0 0.0
        %3371 = vmatprep.subr.mxu0 0.0
        %3372 = vmatpush1.msra.mxu0 0.0
        %3373 = vmatprep.subr.mxu0 0.0
        %3374 = vmatpush1.msra.mxu0 0.0
        %3375 = vmatprep.subr.mxu0 0.0
        %3376 = vmatpush1.msra.mxu0 0.0
        %3377 = vmatprep.subr.mxu0 0.0
        %3378 = vmatpush1.msra.mxu0 0.0
        %3379 = vmatprep.subr.mxu0 0.0
        %3380 = vmatpush1.msra.mxu0 0.0
        %3381 = vmatprep.subr.mxu0 0.0
        %3382 = vmatpush1.msra.mxu0 0.0
        %3383 = vmatprep.mubr.f32.mxu0 0.0
        %3384 = vmatmul.mubr.f32.gmra.mrb[0].mxu0 %v1007
        %v3385 = vpop.f32.mrb[0].mxu0
        %v3386 = vadd.f32 0.0, %v3385
        %v3387 = vpop.f32.mrb[0].mxu0
        %3388 = vdwg.mxu0
        %3389 = vmatprep.subr.mxu0 0.0
        %3390 = vmatpush1.msra.mxu0 %v3181
        %3391 = vmatprep.subr.mxu0 0.0
        %3392 = vmatpush1.msra.mxu0 0.0
        %3393 = vmatprep.subr.mxu0 0.0
        %3394 = vmatpush1.msra.mxu0 0.0
        %3395 = vmatprep.subr.mxu0 0.0
        %3396 = vmatpush1.msra.mxu0 0.0
        %3397 = vmatprep.subr.mxu0 0.0
        %3398 = vmatpush1.msra.mxu0 0.0
        %3399 = vmatprep.subr.mxu0 0.0
        %3400 = vmatpush1.msra.mxu0 0.0
        %3401 = vmatprep.subr.mxu0 0.0
        %3402 = vmatpush1.msra.mxu0 0.0
        %3403 = vmatprep.subr.mxu0 0.0
        %3404 = vmatpush1.msra.mxu0 0.0
        %3405 = vmatprep.subr.mxu0 0.0
        %3406 = vmatpush1.msra.mxu0 0.0
        %3407 = vmatprep.subr.mxu0 0.0
        %3408 = vmatpush1.msra.mxu0 0.0
        %3409 = vmatprep.subr.mxu0 0.0
        %3410 = vmatpush1.msra.mxu0 0.0
        %3411 = vmatprep.subr.mxu0 0.0
        %3412 = vmatpush1.msra.mxu0 0.0
        %3413 = vmatprep.subr.mxu0 0.0
        %3414 = vmatpush1.msra.mxu0 0.0
        %3415 = vmatprep.subr.mxu0 0.0
        %3416 = vmatpush1.msra.mxu0 0.0
        %3417 = vmatprep.subr.mxu0 0.0
        %3418 = vmatpush1.msra.mxu0 0.0
        %3419 = vmatprep.subr.mxu0 0.0
        %3420 = vmatpush1.msra.mxu0 0.0
        %3421 = vmatprep.subr.mxu0 0.0
        %3422 = vmatpush1.msra.mxu0 0.0
        %3423 = vmatprep.subr.mxu0 0.0
        %3424 = vmatpush1.msra.mxu0 0.0
        %3425 = vmatprep.subr.mxu0 0.0
        %3426 = vmatpush1.msra.mxu0 0.0
        %3427 = vmatprep.subr.mxu0 0.0
        %3428 = vmatpush1.msra.mxu0 0.0
        %3429 = vmatprep.subr.mxu0 0.0
        %3430 = vmatpush1.msra.mxu0 0.0
        %3431 = vmatprep.subr.mxu0 0.0
        %3432 = vmatpush1.msra.mxu0 0.0
        %3433 = vmatprep.subr.mxu0 0.0
        %3434 = vmatpush1.msra.mxu0 0.0
        %3435 = vmatprep.subr.mxu0 0.0
        %3436 = vmatpush1.msra.mxu0 0.0
        %3437 = vmatprep.subr.mxu0 0.0
        %3438 = vmatpush1.msra.mxu0 0.0
        %3439 = vmatprep.subr.mxu0 0.0
        %3440 = vmatpush1.msra.mxu0 0.0
        %3441 = vmatprep.subr.mxu0 0.0
        %3442 = vmatpush1.msra.mxu0 0.0
        %3443 = vmatprep.subr.mxu0 0.0
        %3444 = vmatpush1.msra.mxu0 0.0
        %3445 = vmatprep.subr.mxu0 0.0
        %3446 = vmatpush1.msra.mxu0 0.0
        %3447 = vmatprep.subr.mxu0 0.0
        %3448 = vmatpush1.msra.mxu0 0.0
        %3449 = vmatprep.subr.mxu0 0.0
        %3450 = vmatpush1.msra.mxu0 0.0
        %3451 = vmatprep.subr.mxu0 0.0
        %3452 = vmatpush1.msra.mxu0 0.0
        %3453 = vmatprep.mubr.f32.mxu0 0.0
        %3454 = vmatmul.mubr.f32.gmra.mrb[0].mxu0 %v1080
        %v3455 = vpop.f32.mrb[0].mxu0
        %v3456 = vadd.f32 0.0, %v3455
        %v3457 = vpop.f32.mrb[0].mxu0
        %3458 = vdwg.mxu0
        %3459 = vmatprep.subr.mxu0 0.0
        %3460 = vmatpush1.msra.mxu0 %v3186
        %3461 = vmatprep.subr.mxu0 0.0
        %3462 = vmatpush1.msra.mxu0 0.0
        %3463 = vmatprep.subr.mxu0 0.0
        %3464 = vmatpush1.msra.mxu0 0.0
        %3465 = vmatprep.subr.mxu0 0.0
        %3466 = vmatpush1.msra.mxu0 0.0
        %3467 = vmatprep.subr.mxu0 0.0
        %3468 = vmatpush1.msra.mxu0 0.0
        %3469 = vmatprep.subr.mxu0 0.0
        %3470 = vmatpush1.msra.mxu0 0.0
        %3471 = vmatprep.subr.mxu0 0.0
        %3472 = vmatpush1.msra.mxu0 0.0
        %3473 = vmatprep.subr.mxu0 0.0
        %3474 = vmatpush1.msra.mxu0 0.0
        %3475 = vmatprep.subr.mxu0 0.0
        %3476 = vmatpush1.msra.mxu0 0.0
        %3477 = vmatprep.subr.mxu0 0.0
        %3478 = vmatpush1.msra.mxu0 0.0
        %3479 = vmatprep.subr.mxu0 0.0
        %3480 = vmatpush1.msra.mxu0 0.0
        %3481 = vmatprep.subr.mxu0 0.0
        %3482 = vmatpush1.msra.mxu0 0.0
        %3483 = vmatprep.subr.mxu0 0.0
        %3484 = vmatpush1.msra.mxu0 0.0
        %3485 = vmatprep.subr.mxu0 0.0
        %3486 = vmatpush1.msra.mxu0 0.0
        %3487 = vmatprep.subr.mxu0 0.0
        %3488 = vmatpush1.msra.mxu0 0.0
        %3489 = vmatprep.subr.mxu0 0.0
        %3490 = vmatpush1.msra.mxu0 0.0
        %3491 = vmatprep.subr.mxu0 0.0
        %3492 = vmatpush1.msra.mxu0 0.0
        %3493 = vmatprep.subr.mxu0 0.0
        %3494 = vmatpush1.msra.mxu0 0.0
        %3495 = vmatprep.subr.mxu0 0.0
        %3496 = vmatpush1.msra.mxu0 0.0
        %3497 = vmatprep.subr.mxu0 0.0
        %3498 = vmatpush1.msra.mxu0 0.0
        %3499 = vmatprep.subr.mxu0 0.0
        %3500 = vmatpush1.msra.mxu0 0.0
        %3501 = vmatprep.subr.mxu0 0.0
        %3502 = vmatpush1.msra.mxu0 0.0
        %3503 = vmatprep.subr.mxu0 0.0
        %3504 = vmatpush1.msra.mxu0 0.0
        %3505 = vmatprep.subr.mxu0 0.0
        %3506 = vmatpush1.msra.mxu0 0.0
        %3507 = vmatprep.subr.mxu0 0.0
        %3508 = vmatpush1.msra.mxu0 0.0
        %3509 = vmatprep.subr.mxu0 0.0
        %3510 = vmatpush1.msra.mxu0 0.0
        %3511 = vmatprep.subr.mxu0 0.0
        %3512 = vmatpush1.msra.mxu0 0.0
        %3513 = vmatprep.subr.mxu0 0.0
        %3514 = vmatpush1.msra.mxu0 0.0
        %3515 = vmatprep.subr.mxu0 0.0
        %3516 = vmatpush1.msra.mxu0 0.0
        %3517 = vmatprep.subr.mxu0 0.0
        %3518 = vmatpush1.msra.mxu0 0.0
        %3519 = vmatprep.subr.mxu0 0.0
        %3520 = vmatpush1.msra.mxu0 0.0
        %3521 = vmatprep.subr.mxu0 0.0
        %3522 = vmatpush1.msra.mxu0 0.0
        %3523 = vmatprep.mubr.f32.mxu0 0.0
        %3524 = vmatmul.mubr.f32.gmra.mrb[0].mxu0 %v1153
        %v3525 = vpop.f32.mrb[0].mxu0
        %v3526 = vadd.f32 0.0, %v3525
        %v3527 = vpop.f32.mrb[0].mxu0
        %3528 = vdwg.mxu0
        %3529 = vmatprep.subr.mxu0 0.0
        %3530 = vmatpush1.msra.mxu0 %v3191
        %3531 = vmatprep.subr.mxu0 0.0
        %3532 = vmatpush1.msra.mxu0 0.0
        %3533 = vmatprep.subr.mxu0 0.0
        %3534 = vmatpush1.msra.mxu0 0.0
        %3535 = vmatprep.subr.mxu0 0.0
        %3536 = vmatpush1.msra.mxu0 0.0
        %3537 = vmatprep.subr.mxu0 0.0
        %3538 = vmatpush1.msra.mxu0 0.0
        %3539 = vmatprep.subr.mxu0 0.0
        %3540 = vmatpush1.msra.mxu0 0.0
        %3541 = vmatprep.subr.mxu0 0.0
        %3542 = vmatpush1.msra.mxu0 0.0
        %3543 = vmatprep.subr.mxu0 0.0
        %3544 = vmatpush1.msra.mxu0 0.0
        %3545 = vmatprep.subr.mxu0 0.0
        %3546 = vmatpush1.msra.mxu0 0.0
        %3547 = vmatprep.subr.mxu0 0.0
        %3548 = vmatpush1.msra.mxu0 0.0
        %3549 = vmatprep.subr.mxu0 0.0
        %3550 = vmatpush1.msra.mxu0 0.0
        %3551 = vmatprep.subr.mxu0 0.0
        %3552 = vmatpush1.msra.mxu0 0.0
        %3553 = vmatprep.subr.mxu0 0.0
        %3554 = vmatpush1.msra.mxu0 0.0
        %3555 = vmatprep.subr.mxu0 0.0
        %3556 = vmatpush1.msra.mxu0 0.0
        %3557 = vmatprep.subr.mxu0 0.0
        %3558 = vmatpush1.msra.mxu0 0.0
        %3559 = vmatprep.subr.mxu0 0.0
        %3560 = vmatpush1.msra.mxu0 0.0
        %3561 = vmatprep.subr.mxu0 0.0
        %3562 = vmatpush1.msra.mxu0 0.0
        %3563 = vmatprep.subr.mxu0 0.0
        %3564 = vmatpush1.msra.mxu0 0.0
        %3565 = vmatprep.subr.mxu0 0.0
        %3566 = vmatpush1.msra.mxu0 0.0
        %3567 = vmatprep.subr.mxu0 0.0
        %3568 = vmatpush1.msra.mxu0 0.0
        %3569 = vmatprep.subr.mxu0 0.0
        %3570 = vmatpush1.msra.mxu0 0.0
        %3571 = vmatprep.subr.mxu0 0.0
        %3572 = vmatpush1.msra.mxu0 0.0
        %3573 = vmatprep.subr.mxu0 0.0
        %3574 = vmatpush1.msra.mxu0 0.0
        %3575 = vmatprep.subr.mxu0 0.0
        %3576 = vmatpush1.msra.mxu0 0.0
        %3577 = vmatprep.subr.mxu0 0.0
        %3578 = vmatpush1.msra.mxu0 0.0
        %3579 = vmatprep.subr.mxu0 0.0
        %3580 = vmatpush1.msra.mxu0 0.0
        %3581 = vmatprep.subr.mxu0 0.0
        %3582 = vmatpush1.msra.mxu0 0.0
        %3583 = vmatprep.subr.mxu0 0.0
        %3584 = vmatpush1.msra.mxu0 0.0
        %3585 = vmatprep.subr.mxu0 0.0
        %3586 = vmatpush1.msra.mxu0 0.0
        %3587 = vmatprep.subr.mxu0 0.0
        %3588 = vmatpush1.msra.mxu0 0.0
        %3589 = vmatprep.subr.mxu0 0.0
        %3590 = vmatpush1.msra.mxu0 0.0
        %3591 = vmatprep.subr.mxu0 0.0
        %3592 = vmatpush1.msra.mxu0 0.0
        %3593 = vmatprep.mubr.f32.mxu0 0.0
        %3594 = vmatmul.mubr.f32.gmra.mrb[0].mxu0 %v1226
        %v3595 = vpop.f32.mrb[0].mxu0
        %v3596 = vadd.f32 0.0, %v3595
        %v3597 = vpop.f32.mrb[0].mxu0
        %3598 = vdwg.mxu0
        %3599 = vmatprep.subr.mxu0 0.0
        %3600 = vmatpush1.msra.mxu0 %v3196
        %3601 = vmatprep.subr.mxu0 0.0
        %3602 = vmatpush1.msra.mxu0 0.0
        %3603 = vmatprep.subr.mxu0 0.0
        %3604 = vmatpush1.msra.mxu0 0.0
        %3605 = vmatprep.subr.mxu0 0.0
        %3606 = vmatpush1.msra.mxu0 0.0
        %3607 = vmatprep.subr.mxu0 0.0
        %3608 = vmatpush1.msra.mxu0 0.0
        %3609 = vmatprep.subr.mxu0 0.0
        %3610 = vmatpush1.msra.mxu0 0.0
        %3611 = vmatprep.subr.mxu0 0.0
        %3612 = vmatpush1.msra.mxu0 0.0
        %3613 = vmatprep.subr.mxu0 0.0
        %3614 = vmatpush1.msra.mxu0 0.0
        %3615 = vmatprep.subr.mxu0 0.0
        %3616 = vmatpush1.msra.mxu0 0.0
        %3617 = vmatprep.subr.mxu0 0.0
        %3618 = vmatpush1.msra.mxu0 0.0
        %3619 = vmatprep.subr.mxu0 0.0
        %3620 = vmatpush1.msra.mxu0 0.0
        %3621 = vmatprep.subr.mxu0 0.0
        %3622 = vmatpush1.msra.mxu0 0.0
        %3623 = vmatprep.subr.mxu0 0.0
        %3624 = vmatpush1.msra.mxu0 0.0
        %3625 = vmatprep.subr.mxu0 0.0
        %3626 = vmatpush1.msra.mxu0 0.0
        %3627 = vmatprep.subr.mxu0 0.0
        %3628 = vmatpush1.msra.mxu0 0.0
        %3629 = vmatprep.subr.mxu0 0.0
        %3630 = vmatpush1.msra.mxu0 0.0
        %3631 = vmatprep.subr.mxu0 0.0
        %3632 = vmatpush1.msra.mxu0 0.0
        %3633 = vmatprep.subr.mxu0 0.0
        %3634 = vmatpush1.msra.mxu0 0.0
        %3635 = vmatprep.subr.mxu0 0.0
        %3636 = vmatpush1.msra.mxu0 0.0
        %3637 = vmatprep.subr.mxu0 0.0
        %3638 = vmatpush1.msra.mxu0 0.0
        %3639 = vmatprep.subr.mxu0 0.0
        %3640 = vmatpush1.msra.mxu0 0.0
        %3641 = vmatprep.subr.mxu0 0.0
        %3642 = vmatpush1.msra.mxu0 0.0
        %3643 = vmatprep.subr.mxu0 0.0
        %3644 = vmatpush1.msra.mxu0 0.0
        %3645 = vmatprep.subr.mxu0 0.0
        %3646 = vmatpush1.msra.mxu0 0.0
        %3647 = vmatprep.subr.mxu0 0.0
        %3648 = vmatpush1.msra.mxu0 0.0
        %3649 = vmatprep.subr.mxu0 0.0
        %3650 = vmatpush1.msra.mxu0 0.0
        %3651 = vmatprep.subr.mxu0 0.0
        %3652 = vmatpush1.msra.mxu0 0.0
        %3653 = vmatprep.subr.mxu0 0.0
        %3654 = vmatpush1.msra.mxu0 0.0
        %3655 = vmatprep.subr.mxu0 0.0
        %3656 = vmatpush1.msra.mxu0 0.0
        %3657 = vmatprep.subr.mxu0 0.0
        %3658 = vmatpush1.msra.mxu0 0.0
        %3659 = vmatprep.subr.mxu0 0.0
        %3660 = vmatpush1.msra.mxu0 0.0
        %3661 = vmatprep.subr.mxu0 0.0
        %3662 = vmatpush1.msra.mxu0 0.0
        %3663 = vmatprep.mubr.f32.mxu0 0.0
        %3664 = vmatmul.mubr.f32.gmra.mrb[0].mxu0 %v1299
        %v3665 = vpop.f32.mrb[0].mxu0
        %v3666 = vadd.f32 0.0, %v3665
        %v3667 = vpop.f32.mrb[0].mxu0
        %3668 = vdwg.mxu0
        %3669 = vmatprep.subr.mxu0 0.0
        %3670 = vmatpush1.msra.mxu0 %v3201
        %3671 = vmatprep.subr.mxu0 0.0
        %3672 = vmatpush1.msra.mxu0 0.0
        %3673 = vmatprep.subr.mxu0 0.0
        %3674 = vmatpush1.msra.mxu0 0.0
        %3675 = vmatprep.subr.mxu0 0.0
        %3676 = vmatpush1.msra.mxu0 0.0
        %3677 = vmatprep.subr.mxu0 0.0
        %3678 = vmatpush1.msra.mxu0 0.0
        %3679 = vmatprep.subr.mxu0 0.0
        %3680 = vmatpush1.msra.mxu0 0.0
        %3681 = vmatprep.subr.mxu0 0.0
        %3682 = vmatpush1.msra.mxu0 0.0
        %3683 = vmatprep.subr.mxu0 0.0
        %3684 = vmatpush1.msra.mxu0 0.0
        %3685 = vmatprep.subr.mxu0 0.0
        %3686 = vmatpush1.msra.mxu0 0.0
        %3687 = vmatprep.subr.mxu0 0.0
        %3688 = vmatpush1.msra.mxu0 0.0
        %3689 = vmatprep.subr.mxu0 0.0
        %3690 = vmatpush1.msra.mxu0 0.0
        %3691 = vmatprep.subr.mxu0 0.0
        %3692 = vmatpush1.msra.mxu0 0.0
        %3693 = vmatprep.subr.mxu0 0.0
        %3694 = vmatpush1.msra.mxu0 0.0
        %3695 = vmatprep.subr.mxu0 0.0
        %3696 = vmatpush1.msra.mxu0 0.0
        %3697 = vmatprep.subr.mxu0 0.0
        %3698 = vmatpush1.msra.mxu0 0.0
        %3699 = vmatprep.subr.mxu0 0.0
        %3700 = vmatpush1.msra.mxu0 0.0
        %3701 = vmatprep.subr.mxu0 0.0
        %3702 = vmatpush1.msra.mxu0 0.0
        %3703 = vmatprep.subr.mxu0 0.0
        %3704 = vmatpush1.msra.mxu0 0.0
        %3705 = vmatprep.subr.mxu0 0.0
        %3706 = vmatpush1.msra.mxu0 0.0
        %3707 = vmatprep.subr.mxu0 0.0
        %3708 = vmatpush1.msra.mxu0 0.0
        %3709 = vmatprep.subr.mxu0 0.0
        %3710 = vmatpush1.msra.mxu0 0.0
        %3711 = vmatprep.subr.mxu0 0.0
        %3712 = vmatpush1.msra.mxu0 0.0
        %3713 = vmatprep.subr.mxu0 0.0
        %3714 = vmatpush1.msra.mxu0 0.0
        %3715 = vmatprep.subr.mxu0 0.0
        %3716 = vmatpush1.msra.mxu0 0.0
        %3717 = vmatprep.subr.mxu0 0.0
        %3718 = vmatpush1.msra.mxu0 0.0
        %3719 = vmatprep.subr.mxu0 0.0
        %3720 = vmatpush1.msra.mxu0 0.0
        %3721 = vmatprep.subr.mxu0 0.0
        %3722 = vmatpush1.msra.mxu0 0.0
        %3723 = vmatprep.subr.mxu0 0.0
        %3724 = vmatpush1.msra.mxu0 0.0
        %3725 = vmatprep.subr.mxu0 0.0
        %3726 = vmatpush1.msra.mxu0 0.0
        %3727 = vmatprep.subr.mxu0 0.0
        %3728 = vmatpush1.msra.mxu0 0.0
        %3729 = vmatprep.subr.mxu0 0.0
        %3730 = vmatpush1.msra.mxu0 0.0
        %3731 = vmatprep.subr.mxu0 0.0
        %3732 = vmatpush1.msra.mxu0 0.0
        %3733 = vmatprep.mubr.f32.mxu0 0.0
        %3734 = vmatmul.mubr.f32.gmra.mrb[0].mxu0 %v1372
        %v3735 = vpop.f32.mrb[0].mxu0
        %v3736 = vadd.f32 0.0, %v3735
        %v3737 = vpop.f32.mrb[0].mxu0
        %3738 = vdwg.mxu0
        %3739 = vmatprep.subr.mxu0 0.0
        %3740 = vmatpush1.msra.mxu0 %v3206
        %3741 = vmatprep.subr.mxu0 0.0
        %3742 = vmatpush1.msra.mxu0 0.0
        %3743 = vmatprep.subr.mxu0 0.0
        %3744 = vmatpush1.msra.mxu0 0.0
        %3745 = vmatprep.subr.mxu0 0.0
        %3746 = vmatpush1.msra.mxu0 0.0
        %3747 = vmatprep.subr.mxu0 0.0
        %3748 = vmatpush1.msra.mxu0 0.0
        %3749 = vmatprep.subr.mxu0 0.0
        %3750 = vmatpush1.msra.mxu0 0.0
        %3751 = vmatprep.subr.mxu0 0.0
        %3752 = vmatpush1.msra.mxu0 0.0
        %3753 = vmatprep.subr.mxu0 0.0
        %3754 = vmatpush1.msra.mxu0 0.0
        %3755 = vmatprep.subr.mxu0 0.0
        %3756 = vmatpush1.msra.mxu0 0.0
        %3757 = vmatprep.subr.mxu0 0.0
        %3758 = vmatpush1.msra.mxu0 0.0
        %3759 = vmatprep.subr.mxu0 0.0
        %3760 = vmatpush1.msra.mxu0 0.0
        %3761 = vmatprep.subr.mxu0 0.0
        %3762 = vmatpush1.msra.mxu0 0.0
        %3763 = vmatprep.subr.mxu0 0.0
        %3764 = vmatpush1.msra.mxu0 0.0
        %3765 = vmatprep.subr.mxu0 0.0
        %3766 = vmatpush1.msra.mxu0 0.0
        %3767 = vmatprep.subr.mxu0 0.0
        %3768 = vmatpush1.msra.mxu0 0.0
        %3769 = vmatprep.subr.mxu0 0.0
        %3770 = vmatpush1.msra.mxu0 0.0
        %3771 = vmatprep.subr.mxu0 0.0
        %3772 = vmatpush1.msra.mxu0 0.0
        %3773 = vmatprep.subr.mxu0 0.0
        %3774 = vmatpush1.msra.mxu0 0.0
        %3775 = vmatprep.subr.mxu0 0.0
        %3776 = vmatpush1.msra.mxu0 0.0
        %3777 = vmatprep.subr.mxu0 0.0
        %3778 = vmatpush1.msra.mxu0 0.0
        %3779 = vmatprep.subr.mxu0 0.0
        %3780 = vmatpush1.msra.mxu0 0.0
        %3781 = vmatprep.subr.mxu0 0.0
        %3782 = vmatpush1.msra.mxu0 0.0
        %3783 = vmatprep.subr.mxu0 0.0
        %3784 = vmatpush1.msra.mxu0 0.0
        %3785 = vmatprep.subr.mxu0 0.0
        %3786 = vmatpush1.msra.mxu0 0.0
        %3787 = vmatprep.subr.mxu0 0.0
        %3788 = vmatpush1.msra.mxu0 0.0
        %3789 = vmatprep.subr.mxu0 0.0
        %3790 = vmatpush1.msra.mxu0 0.0
        %3791 = vmatprep.subr.mxu0 0.0
        %3792 = vmatpush1.msra.mxu0 0.0
        %3793 = vmatprep.subr.mxu0 0.0
        %3794 = vmatpush1.msra.mxu0 0.0
        %3795 = vmatprep.subr.mxu0 0.0
        %3796 = vmatpush1.msra.mxu0 0.0
        %3797 = vmatprep.subr.mxu0 0.0
        %3798 = vmatpush1.msra.mxu0 0.0
        %3799 = vmatprep.subr.mxu0 0.0
        %3800 = vmatpush1.msra.mxu0 0.0
        %3801 = vmatprep.subr.mxu0 0.0
        %3802 = vmatpush1.msra.mxu0 0.0
        %3803 = vmatprep.mubr.f32.mxu0 0.0
        %3804 = vmatmul.mubr.f32.gmra.mrb[0].mxu0 %v1445
        %v3805 = vpop.f32.mrb[0].mxu0
        %v3806 = vadd.f32 0.0, %v3805
        %v3807 = vpop.f32.mrb[0].mxu0
        %3808 = vdwg.mxu0
        %3809 = vmatprep.subr.mxu0 0.0
        %3810 = vmatpush1.msra.mxu0 %v3211
        %3811 = vmatprep.subr.mxu0 0.0
        %3812 = vmatpush1.msra.mxu0 0.0
        %3813 = vmatprep.subr.mxu0 0.0
        %3814 = vmatpush1.msra.mxu0 0.0
        %3815 = vmatprep.subr.mxu0 0.0
        %3816 = vmatpush1.msra.mxu0 0.0
        %3817 = vmatprep.subr.mxu0 0.0
        %3818 = vmatpush1.msra.mxu0 0.0
        %3819 = vmatprep.subr.mxu0 0.0
        %3820 = vmatpush1.msra.mxu0 0.0
        %3821 = vmatprep.subr.mxu0 0.0
        %3822 = vmatpush1.msra.mxu0 0.0
        %3823 = vmatprep.subr.mxu0 0.0
        %3824 = vmatpush1.msra.mxu0 0.0
        %3825 = vmatprep.subr.mxu0 0.0
        %3826 = vmatpush1.msra.mxu0 0.0
        %3827 = vmatprep.subr.mxu0 0.0
        %3828 = vmatpush1.msra.mxu0 0.0
        %3829 = vmatprep.subr.mxu0 0.0
        %3830 = vmatpush1.msra.mxu0 0.0
        %3831 = vmatprep.subr.mxu0 0.0
        %3832 = vmatpush1.msra.mxu0 0.0
        %3833 = vmatprep.subr.mxu0 0.0
        %3834 = vmatpush1.msra.mxu0 0.0
        %3835 = vmatprep.subr.mxu0 0.0
        %3836 = vmatpush1.msra.mxu0 0.0
        %3837 = vmatprep.subr.mxu0 0.0
        %3838 = vmatpush1.msra.mxu0 0.0
        %3839 = vmatprep.subr.mxu0 0.0
        %3840 = vmatpush1.msra.mxu0 0.0
        %3841 = vmatprep.subr.mxu0 0.0
        %3842 = vmatpush1.msra.mxu0 0.0
        %3843 = vmatprep.subr.mxu0 0.0
        %3844 = vmatpush1.msra.mxu0 0.0
        %3845 = vmatprep.subr.mxu0 0.0
        %3846 = vmatpush1.msra.mxu0 0.0
        %3847 = vmatprep.subr.mxu0 0.0
        %3848 = vmatpush1.msra.mxu0 0.0
        %3849 = vmatprep.subr.mxu0 0.0
        %3850 = vmatpush1.msra.mxu0 0.0
        %3851 = vmatprep.subr.mxu0 0.0
        %3852 = vmatpush1.msra.mxu0 0.0
        %3853 = vmatprep.subr.mxu0 0.0
        %3854 = vmatpush1.msra.mxu0 0.0
        %3855 = vmatprep.subr.mxu0 0.0
        %3856 = vmatpush1.msra.mxu0 0.0
        %3857 = vmatprep.subr.mxu0 0.0
        %3858 = vmatpush1.msra.mxu0 0.0
        %3859 = vmatprep.subr.mxu0 0.0
        %3860 = vmatpush1.msra.mxu0 0.0
        %3861 = vmatprep.subr.mxu0 0.0
        %3862 = vmatpush1.msra.mxu0 0.0
        %3863 = vmatprep.subr.mxu0 0.0
        %3864 = vmatpush1.msra.mxu0 0.0
        %3865 = vmatprep.subr.mxu0 0.0
        %3866 = vmatpush1.msra.mxu0 0.0
        %3867 = vmatprep.subr.mxu0 0.0
        %3868 = vmatpush1.msra.mxu0 0.0
        %3869 = vmatprep.subr.mxu0 0.0
        %3870 = vmatpush1.msra.mxu0 0.0
        %3871 = vmatprep.subr.mxu0 0.0
        %3872 = vmatpush1.msra.mxu0 0.0
        %3873 = vmatprep.mubr.f32.mxu0 0.0
        %3874 = vmatmul.mubr.f32.gmra.mrb[0].mxu0 %v1518
        %v3875 = vpop.f32.mrb[0].mxu0
        %v3876 = vadd.f32 0.0, %v3875
        %v3877 = vpop.f32.mrb[0].mxu0
        %3878 = vdwg.mxu0
        %v3879 = vadd.f32 %v3386, %v1594
        %v3880 = vadd.f32 %v3456, %v1594
        %v3881 = vadd.f32 %v3526, %v1594
        %v3882 = vadd.f32 %v3596, %v1594
        %v3883 = vadd.f32 %v3666, %v1594
        %v3884 = vadd.f32 %v3736, %v1594
        %v3885 = vadd.f32 %v3806, %v1594
        %v3886 = vadd.f32 %v3876, %v1594
        %3887 = vmatprep.subr.mxu0 0.0
        %3888 = vmatpush1.msra.mxu0 %v3281
        %3889 = vmatprep.subr.mxu0 0.0
        %3890 = vmatpush1.msra.mxu0 0.0
        %3891 = vmatprep.subr.mxu0 0.0
        %3892 = vmatpush1.msra.mxu0 0.0
        %3893 = vmatprep.subr.mxu0 0.0
        %3894 = vmatpush1.msra.mxu0 0.0
        %3895 = vmatprep.subr.mxu0 0.0
        %3896 = vmatpush1.msra.mxu0 0.0
        %3897 = vmatprep.subr.mxu0 0.0
        %3898 = vmatpush1.msra.mxu0 0.0
        %3899 = vmatprep.subr.mxu0 0.0
        %3900 = vmatpush1.msra.mxu0 0.0
        %3901 = vmatprep.subr.mxu0 0.0
        %3902 = vmatpush1.msra.mxu0 0.0
        %3903 = vmatprep.subr.mxu0 0.0
        %3904 = vmatpush1.msra.mxu0 0.0
        %3905 = vmatprep.subr.mxu0 0.0
        %3906 = vmatpush1.msra.mxu0 0.0
        %3907 = vmatprep.subr.mxu0 0.0
        %3908 = vmatpush1.msra.mxu0 0.0
        %3909 = vmatprep.subr.mxu0 0.0
        %3910 = vmatpush1.msra.mxu0 0.0
        %3911 = vmatprep.subr.mxu0 0.0
        %3912 = vmatpush1.msra.mxu0 0.0
        %3913 = vmatprep.subr.mxu0 0.0
        %3914 = vmatpush1.msra.mxu0 0.0
        %3915 = vmatprep.subr.mxu0 0.0
        %3916 = vmatpush1.msra.mxu0 0.0
        %3917 = vmatprep.subr.mxu0 0.0
        %3918 = vmatpush1.msra.mxu0 0.0
        %3919 = vmatprep.subr.mxu0 0.0
        %3920 = vmatpush1.msra.mxu0 0.0
        %3921 = vmatprep.subr.mxu0 0.0
        %3922 = vmatpush1.msra.mxu0 0.0
        %3923 = vmatprep.subr.mxu0 0.0
        %3924 = vmatpush1.msra.mxu0 0.0
        %3925 = vmatprep.subr.mxu0 0.0
        %3926 = vmatpush1.msra.mxu0 0.0
        %3927 = vmatprep.subr.mxu0 0.0
        %3928 = vmatpush1.msra.mxu0 0.0
        %3929 = vmatprep.subr.mxu0 0.0
        %3930 = vmatpush1.msra.mxu0 0.0
        %3931 = vmatprep.subr.mxu0 0.0
        %3932 = vmatpush1.msra.mxu0 0.0
        %3933 = vmatprep.subr.mxu0 0.0
        %3934 = vmatpush1.msra.mxu0 0.0
        %3935 = vmatprep.subr.mxu0 0.0
        %3936 = vmatpush1.msra.mxu0 0.0
        %3937 = vmatprep.subr.mxu0 0.0
        %3938 = vmatpush1.msra.mxu0 0.0
        %3939 = vmatprep.subr.mxu0 0.0
        %3940 = vmatpush1.msra.mxu0 0.0
        %3941 = vmatprep.subr.mxu0 0.0
        %3942 = vmatpush1.msra.mxu0 0.0
        %3943 = vmatprep.subr.mxu0 0.0
        %3944 = vmatpush1.msra.mxu0 0.0
        %3945 = vmatprep.subr.mxu0 0.0
        %3946 = vmatpush1.msra.mxu0 0.0
        %3947 = vmatprep.subr.mxu0 0.0
        %3948 = vmatpush1.msra.mxu0 0.0
        %3949 = vmatprep.subr.mxu0 0.0
        %3950 = vmatpush1.msra.mxu0 0.0
        %3951 = vmatprep.mubr.f32.mxu0 0.0
        %3952 = vmatmul.mubr.f32.gmra.mrb[0].mxu0 %v1605
        %v3953 = vpop.f32.mrb[0].mxu0
        %v3954 = vadd.f32 0.0, %v3953
        %v3955 = vpop.f32.mrb[0].mxu0
        %3956 = vdwg.mxu0
        %3957 = vmatprep.subr.mxu0 0.0
        %3958 = vmatpush1.msra.mxu0 %v3286
        %3959 = vmatprep.subr.mxu0 0.0
        %3960 = vmatpush1.msra.mxu0 0.0
        %3961 = vmatprep.subr.mxu0 0.0
        %3962 = vmatpush1.msra.mxu0 0.0
        %3963 = vmatprep.subr.mxu0 0.0
        %3964 = vmatpush1.msra.mxu0 0.0
        %3965 = vmatprep.subr.mxu0 0.0
        %3966 = vmatpush1.msra.mxu0 0.0
        %3967 = vmatprep.subr.mxu0 0.0
        %3968 = vmatpush1.msra.mxu0 0.0
        %3969 = vmatprep.subr.mxu0 0.0
        %3970 = vmatpush1.msra.mxu0 0.0
        %3971 = vmatprep.subr.mxu0 0.0
        %3972 = vmatpush1.msra.mxu0 0.0
        %3973 = vmatprep.subr.mxu0 0.0
        %3974 = vmatpush1.msra.mxu0 0.0
        %3975 = vmatprep.subr.mxu0 0.0
        %3976 = vmatpush1.msra.mxu0 0.0
        %3977 = vmatprep.subr.mxu0 0.0
        %3978 = vmatpush1.msra.mxu0 0.0
        %3979 = vmatprep.subr.mxu0 0.0
        %3980 = vmatpush1.msra.mxu0 0.0
        %3981 = vmatprep.subr.mxu0 0.0
        %3982 = vmatpush1.msra.mxu0 0.0
        %3983 = vmatprep.subr.mxu0 0.0
        %3984 = vmatpush1.msra.mxu0 0.0
        %3985 = vmatprep.subr.mxu0 0.0
        %3986 = vmatpush1.msra.mxu0 0.0
        %3987 = vmatprep.subr.mxu0 0.0
        %3988 = vmatpush1.msra.mxu0 0.0
        %3989 = vmatprep.subr.mxu0 0.0
        %3990 = vmatpush1.msra.mxu0 0.0
        %3991 = vmatprep.subr.mxu0 0.0
        %3992 = vmatpush1.msra.mxu0 0.0
        %3993 = vmatprep.subr.mxu0 0.0
        %3994 = vmatpush1.msra.mxu0 0.0
        %3995 = vmatprep.subr.mxu0 0.0
        %3996 = vmatpush1.msra.mxu0 0.0
        %3997 = vmatprep.subr.mxu0 0.0
        %3998 = vmatpush1.msra.mxu0 0.0
        %3999 = vmatprep.subr.mxu0 0.0
        %4000 = vmatpush1.msra.mxu0 0.0
        %4001 = vmatprep.subr.mxu0 0.0
        %4002 = vmatpush1.msra.mxu0 0.0
        %4003 = vmatprep.subr.mxu0 0.0
        %4004 = vmatpush1.msra.mxu0 0.0
        %4005 = vmatprep.subr.mxu0 0.0
        %4006 = vmatpush1.msra.mxu0 0.0
        %4007 = vmatprep.subr.mxu0 0.0
        %4008 = vmatpush1.msra.mxu0 0.0
        %4009 = vmatprep.subr.mxu0 0.0
        %4010 = vmatpush1.msra.mxu0 0.0
        %4011 = vmatprep.subr.mxu0 0.0
        %4012 = vmatpush1.msra.mxu0 0.0
        %4013 = vmatprep.subr.mxu0 0.0
        %4014 = vmatpush1.msra.mxu0 0.0
        %4015 = vmatprep.subr.mxu0 0.0
        %4016 = vmatpush1.msra.mxu0 0.0
        %4017 = vmatprep.subr.mxu0 0.0
        %4018 = vmatpush1.msra.mxu0 0.0
        %4019 = vmatprep.subr.mxu0 0.0
        %4020 = vmatpush1.msra.mxu0 0.0
        %4021 = vmatprep.mubr.f32.mxu0 0.0
        %4022 = vmatmul.mubr.f32.gmra.mrb[0].mxu0 %v1678
        %v4023 = vpop.f32.mrb[0].mxu0
        %v4024 = vadd.f32 0.0, %v4023
        %v4025 = vpop.f32.mrb[0].mxu0
        %4026 = vdwg.mxu0
        %4027 = vmatprep.subr.mxu0 0.0
        %4028 = vmatpush1.msra.mxu0 %v3291
        %4029 = vmatprep.subr.mxu0 0.0
        %4030 = vmatpush1.msra.mxu0 0.0
        %4031 = vmatprep.subr.mxu0 0.0
        %4032 = vmatpush1.msra.mxu0 0.0
        %4033 = vmatprep.subr.mxu0 0.0
        %4034 = vmatpush1.msra.mxu0 0.0
        %4035 = vmatprep.subr.mxu0 0.0
        %4036 = vmatpush1.msra.mxu0 0.0
        %4037 = vmatprep.subr.mxu0 0.0
        %4038 = vmatpush1.msra.mxu0 0.0
        %4039 = vmatprep.subr.mxu0 0.0
        %4040 = vmatpush1.msra.mxu0 0.0
        %4041 = vmatprep.subr.mxu0 0.0
        %4042 = vmatpush1.msra.mxu0 0.0
        %4043 = vmatprep.subr.mxu0 0.0
        %4044 = vmatpush1.msra.mxu0 0.0
        %4045 = vmatprep.subr.mxu0 0.0
        %4046 = vmatpush1.msra.mxu0 0.0
        %4047 = vmatprep.subr.mxu0 0.0
        %4048 = vmatpush1.msra.mxu0 0.0
        %4049 = vmatprep.subr.mxu0 0.0
        %4050 = vmatpush1.msra.mxu0 0.0
        %4051 = vmatprep.subr.mxu0 0.0
        %4052 = vmatpush1.msra.mxu0 0.0
        %4053 = vmatprep.subr.mxu0 0.0
        %4054 = vmatpush1.msra.mxu0 0.0
        %4055 = vmatprep.subr.mxu0 0.0
        %4056 = vmatpush1.msra.mxu0 0.0
        %4057 = vmatprep.subr.mxu0 0.0
        %4058 = vmatpush1.msra.mxu0 0.0
        %4059 = vmatprep.subr.mxu0 0.0
        %4060 = vmatpush1.msra.mxu0 0.0
        %4061 = vmatprep.subr.mxu0 0.0
        %4062 = vmatpush1.msra.mxu0 0.0
        %4063 = vmatprep.subr.mxu0 0.0
        %4064 = vmatpush1.msra.mxu0 0.0
        %4065 = vmatprep.subr.mxu0 0.0
        %4066 = vmatpush1.msra.mxu0 0.0
        %4067 = vmatprep.subr.mxu0 0.0
        %4068 = vmatpush1.msra.mxu0 0.0
        %4069 = vmatprep.subr.mxu0 0.0
        %4070 = vmatpush1.msra.mxu0 0.0
        %4071 = vmatprep.subr.mxu0 0.0
        %4072 = vmatpush1.msra.mxu0 0.0
        %4073 = vmatprep.subr.mxu0 0.0
        %4074 = vmatpush1.msra.mxu0 0.0
        %4075 = vmatprep.subr.mxu0 0.0
        %4076 = vmatpush1.msra.mxu0 0.0
        %4077 = vmatprep.subr.mxu0 0.0
        %4078 = vmatpush1.msra.mxu0 0.0
        %4079 = vmatprep.subr.mxu0 0.0
        %4080 = vmatpush1.msra.mxu0 0.0
        %4081 = vmatprep.subr.mxu0 0.0
        %4082 = vmatpush1.msra.mxu0 0.0
        %4083 = vmatprep.subr.mxu0 0.0
        %4084 = vmatpush1.msra.mxu0 0.0
        %4085 = vmatprep.subr.mxu0 0.0
        %4086 = vmatpush1.msra.mxu0 0.0
        %4087 = vmatprep.subr.mxu0 0.0
        %4088 = vmatpush1.msra.mxu0 0.0
        %4089 = vmatprep.subr.mxu0 0.0
        %4090 = vmatpush1.msra.mxu0 0.0
        %4091 = vmatprep.mubr.f32.mxu0 0.0
        %4092 = vmatmul.mubr.f32.gmra.mrb[0].mxu0 %v1751
        %v4093 = vpop.f32.mrb[0].mxu0
        %v4094 = vadd.f32 0.0, %v4093
        %v4095 = vpop.f32.mrb[0].mxu0
        %4096 = vdwg.mxu0
        %4097 = vmatprep.subr.mxu0 0.0
        %4098 = vmatpush1.msra.mxu0 %v3296
        %4099 = vmatprep.subr.mxu0 0.0
        %4100 = vmatpush1.msra.mxu0 0.0
        %4101 = vmatprep.subr.mxu0 0.0
        %4102 = vmatpush1.msra.mxu0 0.0
        %4103 = vmatprep.subr.mxu0 0.0
        %4104 = vmatpush1.msra.mxu0 0.0
        %4105 = vmatprep.subr.mxu0 0.0
        %4106 = vmatpush1.msra.mxu0 0.0
        %4107 = vmatprep.subr.mxu0 0.0
        %4108 = vmatpush1.msra.mxu0 0.0
        %4109 = vmatprep.subr.mxu0 0.0
        %4110 = vmatpush1.msra.mxu0 0.0
        %4111 = vmatprep.subr.mxu0 0.0
        %4112 = vmatpush1.msra.mxu0 0.0
        %4113 = vmatprep.subr.mxu0 0.0
        %4114 = vmatpush1.msra.mxu0 0.0
        %4115 = vmatprep.subr.mxu0 0.0
        %4116 = vmatpush1.msra.mxu0 0.0
        %4117 = vmatprep.subr.mxu0 0.0
        %4118 = vmatpush1.msra.mxu0 0.0
        %4119 = vmatprep.subr.mxu0 0.0
        %4120 = vmatpush1.msra.mxu0 0.0
        %4121 = vmatprep.subr.mxu0 0.0
        %4122 = vmatpush1.msra.mxu0 0.0
        %4123 = vmatprep.subr.mxu0 0.0
        %4124 = vmatpush1.msra.mxu0 0.0
        %4125 = vmatprep.subr.mxu0 0.0
        %4126 = vmatpush1.msra.mxu0 0.0
        %4127 = vmatprep.subr.mxu0 0.0
        %4128 = vmatpush1.msra.mxu0 0.0
        %4129 = vmatprep.subr.mxu0 0.0
        %4130 = vmatpush1.msra.mxu0 0.0
        %4131 = vmatprep.subr.mxu0 0.0
        %4132 = vmatpush1.msra.mxu0 0.0
        %4133 = vmatprep.subr.mxu0 0.0
        %4134 = vmatpush1.msra.mxu0 0.0
        %4135 = vmatprep.subr.mxu0 0.0
        %4136 = vmatpush1.msra.mxu0 0.0
        %4137 = vmatprep.subr.mxu0 0.0
        %4138 = vmatpush1.msra.mxu0 0.0
        %4139 = vmatprep.subr.mxu0 0.0
        %4140 = vmatpush1.msra.mxu0 0.0
        %4141 = vmatprep.subr.mxu0 0.0
        %4142 = vmatpush1.msra.mxu0 0.0
        %4143 = vmatprep.subr.mxu0 0.0
        %4144 = vmatpush1.msra.mxu0 0.0
        %4145 = vmatprep.subr.mxu0 0.0
        %4146 = vmatpush1.msra.mxu0 0.0
        %4147 = vmatprep.subr.mxu0 0.0
        %4148 = vmatpush1.msra.mxu0 0.0
        %4149 = vmatprep.subr.mxu0 0.0
        %4150 = vmatpush1.msra.mxu0 0.0
        %4151 = vmatprep.subr.mxu0 0.0
        %4152 = vmatpush1.msra.mxu0 0.0
        %4153 = vmatprep.subr.mxu0 0.0
        %4154 = vmatpush1.msra.mxu0 0.0
        %4155 = vmatprep.subr.mxu0 0.0
        %4156 = vmatpush1.msra.mxu0 0.0
        %4157 = vmatprep.subr.mxu0 0.0
        %4158 = vmatpush1.msra.mxu0 0.0
        %4159 = vmatprep.subr.mxu0 0.0
        %4160 = vmatpush1.msra.mxu0 0.0
        %4161 = vmatprep.mubr.f32.mxu0 0.0
        %4162 = vmatmul.mubr.f32.gmra.mrb[0].mxu0 %v1824
        %v4163 = vpop.f32.mrb[0].mxu0
        %v4164 = vadd.f32 0.0, %v4163
        %v4165 = vpop.f32.mrb[0].mxu0
        %4166 = vdwg.mxu0
        %4167 = vmatprep.subr.mxu0 0.0
        %4168 = vmatpush1.msra.mxu0 %v3301
        %4169 = vmatprep.subr.mxu0 0.0
        %4170 = vmatpush1.msra.mxu0 0.0
        %4171 = vmatprep.subr.mxu0 0.0
        %4172 = vmatpush1.msra.mxu0 0.0
        %4173 = vmatprep.subr.mxu0 0.0
        %4174 = vmatpush1.msra.mxu0 0.0
        %4175 = vmatprep.subr.mxu0 0.0
        %4176 = vmatpush1.msra.mxu0 0.0
        %4177 = vmatprep.subr.mxu0 0.0
        %4178 = vmatpush1.msra.mxu0 0.0
        %4179 = vmatprep.subr.mxu0 0.0
        %4180 = vmatpush1.msra.mxu0 0.0
        %4181 = vmatprep.subr.mxu0 0.0
        %4182 = vmatpush1.msra.mxu0 0.0
        %4183 = vmatprep.subr.mxu0 0.0
        %4184 = vmatpush1.msra.mxu0 0.0
        %4185 = vmatprep.subr.mxu0 0.0
        %4186 = vmatpush1.msra.mxu0 0.0
        %4187 = vmatprep.subr.mxu0 0.0
        %4188 = vmatpush1.msra.mxu0 0.0
        %4189 = vmatprep.subr.mxu0 0.0
        %4190 = vmatpush1.msra.mxu0 0.0
        %4191 = vmatprep.subr.mxu0 0.0
        %4192 = vmatpush1.msra.mxu0 0.0
        %4193 = vmatprep.subr.mxu0 0.0
        %4194 = vmatpush1.msra.mxu0 0.0
        %4195 = vmatprep.subr.mxu0 0.0
        %4196 = vmatpush1.msra.mxu0 0.0
        %4197 = vmatprep.subr.mxu0 0.0
        %4198 = vmatpush1.msra.mxu0 0.0
        %4199 = vmatprep.subr.mxu0 0.0
        %4200 = vmatpush1.msra.mxu0 0.0
        %4201 = vmatprep.subr.mxu0 0.0
        %4202 = vmatpush1.msra.mxu0 0.0
        %4203 = vmatprep.subr.mxu0 0.0
        %4204 = vmatpush1.msra.mxu0 0.0
        %4205 = vmatprep.subr.mxu0 0.0
        %4206 = vmatpush1.msra.mxu0 0.0
        %4207 = vmatprep.subr.mxu0 0.0
        %4208 = vmatpush1.msra.mxu0 0.0
        %4209 = vmatprep.subr.mxu0 0.0
        %4210 = vmatpush1.msra.mxu0 0.0
        %4211 = vmatprep.subr.mxu0 0.0
        %4212 = vmatpush1.msra.mxu0 0.0
        %4213 = vmatprep.subr.mxu0 0.0
        %4214 = vmatpush1.msra.mxu0 0.0
        %4215 = vmatprep.subr.mxu0 0.0
        %4216 = vmatpush1.msra.mxu0 0.0
        %4217 = vmatprep.subr.mxu0 0.0
        %4218 = vmatpush1.msra.mxu0 0.0
        %4219 = vmatprep.subr.mxu0 0.0
        %4220 = vmatpush1.msra.mxu0 0.0
        %4221 = vmatprep.subr.mxu0 0.0
        %4222 = vmatpush1.msra.mxu0 0.0
        %4223 = vmatprep.subr.mxu0 0.0
        %4224 = vmatpush1.msra.mxu0 0.0
        %4225 = vmatprep.subr.mxu0 0.0
        %4226 = vmatpush1.msra.mxu0 0.0
        %4227 = vmatprep.subr.mxu0 0.0
        %4228 = vmatpush1.msra.mxu0 0.0
        %4229 = vmatprep.subr.mxu0 0.0
        %4230 = vmatpush1.msra.mxu0 0.0
        %4231 = vmatprep.mubr.f32.mxu0 0.0
        %4232 = vmatmul.mubr.f32.gmra.mrb[0].mxu0 %v1897
        %v4233 = vpop.f32.mrb[0].mxu0
        %v4234 = vadd.f32 0.0, %v4233
        %v4235 = vpop.f32.mrb[0].mxu0
        %4236 = vdwg.mxu0
        %4237 = vmatprep.subr.mxu0 0.0
        %4238 = vmatpush1.msra.mxu0 %v3306
        %4239 = vmatprep.subr.mxu0 0.0
        %4240 = vmatpush1.msra.mxu0 0.0
        %4241 = vmatprep.subr.mxu0 0.0
        %4242 = vmatpush1.msra.mxu0 0.0
        %4243 = vmatprep.subr.mxu0 0.0
        %4244 = vmatpush1.msra.mxu0 0.0
        %4245 = vmatprep.subr.mxu0 0.0
        %4246 = vmatpush1.msra.mxu0 0.0
        %4247 = vmatprep.subr.mxu0 0.0
        %4248 = vmatpush1.msra.mxu0 0.0
        %4249 = vmatprep.subr.mxu0 0.0
        %4250 = vmatpush1.msra.mxu0 0.0
        %4251 = vmatprep.subr.mxu0 0.0
        %4252 = vmatpush1.msra.mxu0 0.0
        %4253 = vmatprep.subr.mxu0 0.0
        %4254 = vmatpush1.msra.mxu0 0.0
        %4255 = vmatprep.subr.mxu0 0.0
        %4256 = vmatpush1.msra.mxu0 0.0
        %4257 = vmatprep.subr.mxu0 0.0
        %4258 = vmatpush1.msra.mxu0 0.0
        %4259 = vmatprep.subr.mxu0 0.0
        %4260 = vmatpush1.msra.mxu0 0.0
        %4261 = vmatprep.subr.mxu0 0.0
        %4262 = vmatpush1.msra.mxu0 0.0
        %4263 = vmatprep.subr.mxu0 0.0
        %4264 = vmatpush1.msra.mxu0 0.0
        %4265 = vmatprep.subr.mxu0 0.0
        %4266 = vmatpush1.msra.mxu0 0.0
        %4267 = vmatprep.subr.mxu0 0.0
        %4268 = vmatpush1.msra.mxu0 0.0
        %4269 = vmatprep.subr.mxu0 0.0
        %4270 = vmatpush1.msra.mxu0 0.0
        %4271 = vmatprep.subr.mxu0 0.0
        %4272 = vmatpush1.msra.mxu0 0.0
        %4273 = vmatprep.subr.mxu0 0.0
        %4274 = vmatpush1.msra.mxu0 0.0
        %4275 = vmatprep.subr.mxu0 0.0
        %4276 = vmatpush1.msra.mxu0 0.0
        %4277 = vmatprep.subr.mxu0 0.0
        %4278 = vmatpush1.msra.mxu0 0.0
        %4279 = vmatprep.subr.mxu0 0.0
        %4280 = vmatpush1.msra.mxu0 0.0
        %4281 = vmatprep.subr.mxu0 0.0
        %4282 = vmatpush1.msra.mxu0 0.0
        %4283 = vmatprep.subr.mxu0 0.0
        %4284 = vmatpush1.msra.mxu0 0.0
        %4285 = vmatprep.subr.mxu0 0.0
        %4286 = vmatpush1.msra.mxu0 0.0
        %4287 = vmatprep.subr.mxu0 0.0
        %4288 = vmatpush1.msra.mxu0 0.0
        %4289 = vmatprep.subr.mxu0 0.0
        %4290 = vmatpush1.msra.mxu0 0.0
        %4291 = vmatprep.subr.mxu0 0.0
        %4292 = vmatpush1.msra.mxu0 0.0
        %4293 = vmatprep.subr.mxu0 0.0
        %4294 = vmatpush1.msra.mxu0 0.0
        %4295 = vmatprep.subr.mxu0 0.0
        %4296 = vmatpush1.msra.mxu0 0.0
        %4297 = vmatprep.subr.mxu0 0.0
        %4298 = vmatpush1.msra.mxu0 0.0
        %4299 = vmatprep.subr.mxu0 0.0
        %4300 = vmatpush1.msra.mxu0 0.0
        %4301 = vmatprep.mubr.f32.mxu0 0.0
        %4302 = vmatmul.mubr.f32.gmra.mrb[0].mxu0 %v1970
        %v4303 = vpop.f32.mrb[0].mxu0
        %v4304 = vadd.f32 0.0, %v4303
        %v4305 = vpop.f32.mrb[0].mxu0
        %4306 = vdwg.mxu0
        %4307 = vmatprep.subr.mxu0 0.0
        %4308 = vmatpush1.msra.mxu0 %v3311
        %4309 = vmatprep.subr.mxu0 0.0
        %4310 = vmatpush1.msra.mxu0 0.0
        %4311 = vmatprep.subr.mxu0 0.0
        %4312 = vmatpush1.msra.mxu0 0.0
        %4313 = vmatprep.subr.mxu0 0.0
        %4314 = vmatpush1.msra.mxu0 0.0
        %4315 = vmatprep.subr.mxu0 0.0
        %4316 = vmatpush1.msra.mxu0 0.0
        %4317 = vmatprep.subr.mxu0 0.0
        %4318 = vmatpush1.msra.mxu0 0.0
        %4319 = vmatprep.subr.mxu0 0.0
        %4320 = vmatpush1.msra.mxu0 0.0
        %4321 = vmatprep.subr.mxu0 0.0
        %4322 = vmatpush1.msra.mxu0 0.0
        %4323 = vmatprep.subr.mxu0 0.0
        %4324 = vmatpush1.msra.mxu0 0.0
        %4325 = vmatprep.subr.mxu0 0.0
        %4326 = vmatpush1.msra.mxu0 0.0
        %4327 = vmatprep.subr.mxu0 0.0
        %4328 = vmatpush1.msra.mxu0 0.0
        %4329 = vmatprep.subr.mxu0 0.0
        %4330 = vmatpush1.msra.mxu0 0.0
        %4331 = vmatprep.subr.mxu0 0.0
        %4332 = vmatpush1.msra.mxu0 0.0
        %4333 = vmatprep.subr.mxu0 0.0
        %4334 = vmatpush1.msra.mxu0 0.0
        %4335 = vmatprep.subr.mxu0 0.0
        %4336 = vmatpush1.msra.mxu0 0.0
        %4337 = vmatprep.subr.mxu0 0.0
        %4338 = vmatpush1.msra.mxu0 0.0
        %4339 = vmatprep.subr.mxu0 0.0
        %4340 = vmatpush1.msra.mxu0 0.0
        %4341 = vmatprep.subr.mxu0 0.0
        %4342 = vmatpush1.msra.mxu0 0.0
        %4343 = vmatprep.subr.mxu0 0.0
        %4344 = vmatpush1.msra.mxu0 0.0
        %4345 = vmatprep.subr.mxu0 0.0
        %4346 = vmatpush1.msra.mxu0 0.0
        %4347 = vmatprep.subr.mxu0 0.0
        %4348 = vmatpush1.msra.mxu0 0.0
        %4349 = vmatprep.subr.mxu0 0.0
        %4350 = vmatpush1.msra.mxu0 0.0
        %4351 = vmatprep.subr.mxu0 0.0
        %4352 = vmatpush1.msra.mxu0 0.0
        %4353 = vmatprep.subr.mxu0 0.0
        %4354 = vmatpush1.msra.mxu0 0.0
        %4355 = vmatprep.subr.mxu0 0.0
        %4356 = vmatpush1.msra.mxu0 0.0
        %4357 = vmatprep.subr.mxu0 0.0
        %4358 = vmatpush1.msra.mxu0 0.0
        %4359 = vmatprep.subr.mxu0 0.0
        %4360 = vmatpush1.msra.mxu0 0.0
        %4361 = vmatprep.subr.mxu0 0.0
        %4362 = vmatpush1.msra.mxu0 0.0
        %4363 = vmatprep.subr.mxu0 0.0
        %4364 = vmatpush1.msra.mxu0 0.0
        %4365 = vmatprep.subr.mxu0 0.0
        %4366 = vmatpush1.msra.mxu0 0.0
        %4367 = vmatprep.subr.mxu0 0.0
        %4368 = vmatpush1.msra.mxu0 0.0
        %4369 = vmatprep.subr.mxu0 0.0
        %4370 = vmatpush1.msra.mxu0 0.0
        %4371 = vmatprep.mubr.f32.mxu0 0.0
        %4372 = vmatmul.mubr.f32.gmra.mrb[0].mxu0 %v2043
        %v4373 = vpop.f32.mrb[0].mxu0
        %v4374 = vadd.f32 0.0, %v4373
        %v4375 = vpop.f32.mrb[0].mxu0
        %4376 = vdwg.mxu0
        %4377 = vmatprep.subr.mxu0 0.0
        %4378 = vmatpush1.msra.mxu0 %v3316
        %4379 = vmatprep.subr.mxu0 0.0
        %4380 = vmatpush1.msra.mxu0 0.0
        %4381 = vmatprep.subr.mxu0 0.0
        %4382 = vmatpush1.msra.mxu0 0.0
        %4383 = vmatprep.subr.mxu0 0.0
        %4384 = vmatpush1.msra.mxu0 0.0
        %4385 = vmatprep.subr.mxu0 0.0
        %4386 = vmatpush1.msra.mxu0 0.0
        %4387 = vmatprep.subr.mxu0 0.0
        %4388 = vmatpush1.msra.mxu0 0.0
        %4389 = vmatprep.subr.mxu0 0.0
        %4390 = vmatpush1.msra.mxu0 0.0
        %4391 = vmatprep.subr.mxu0 0.0
        %4392 = vmatpush1.msra.mxu0 0.0
        %4393 = vmatprep.subr.mxu0 0.0
        %4394 = vmatpush1.msra.mxu0 0.0
        %4395 = vmatprep.subr.mxu0 0.0
        %4396 = vmatpush1.msra.mxu0 0.0
        %4397 = vmatprep.subr.mxu0 0.0
        %4398 = vmatpush1.msra.mxu0 0.0
        %4399 = vmatprep.subr.mxu0 0.0
        %4400 = vmatpush1.msra.mxu0 0.0
        %4401 = vmatprep.subr.mxu0 0.0
        %4402 = vmatpush1.msra.mxu0 0.0
        %4403 = vmatprep.subr.mxu0 0.0
        %4404 = vmatpush1.msra.mxu0 0.0
        %4405 = vmatprep.subr.mxu0 0.0
        %4406 = vmatpush1.msra.mxu0 0.0
        %4407 = vmatprep.subr.mxu0 0.0
        %4408 = vmatpush1.msra.mxu0 0.0
        %4409 = vmatprep.subr.mxu0 0.0
        %4410 = vmatpush1.msra.mxu0 0.0
        %4411 = vmatprep.subr.mxu0 0.0
        %4412 = vmatpush1.msra.mxu0 0.0
        %4413 = vmatprep.subr.mxu0 0.0
        %4414 = vmatpush1.msra.mxu0 0.0
        %4415 = vmatprep.subr.mxu0 0.0
        %4416 = vmatpush1.msra.mxu0 0.0
        %4417 = vmatprep.subr.mxu0 0.0
        %4418 = vmatpush1.msra.mxu0 0.0
        %4419 = vmatprep.subr.mxu0 0.0
        %4420 = vmatpush1.msra.mxu0 0.0
        %4421 = vmatprep.subr.mxu0 0.0
        %4422 = vmatpush1.msra.mxu0 0.0
        %4423 = vmatprep.subr.mxu0 0.0
        %4424 = vmatpush1.msra.mxu0 0.0
        %4425 = vmatprep.subr.mxu0 0.0
        %4426 = vmatpush1.msra.mxu0 0.0
        %4427 = vmatprep.subr.mxu0 0.0
        %4428 = vmatpush1.msra.mxu0 0.0
        %4429 = vmatprep.subr.mxu0 0.0
        %4430 = vmatpush1.msra.mxu0 0.0
        %4431 = vmatprep.subr.mxu0 0.0
        %4432 = vmatpush1.msra.mxu0 0.0
        %4433 = vmatprep.subr.mxu0 0.0
        %4434 = vmatpush1.msra.mxu0 0.0
        %4435 = vmatprep.subr.mxu0 0.0
        %4436 = vmatpush1.msra.mxu0 0.0
        %4437 = vmatprep.subr.mxu0 0.0
        %4438 = vmatpush1.msra.mxu0 0.0
        %4439 = vmatprep.subr.mxu0 0.0
        %4440 = vmatpush1.msra.mxu0 0.0
        %4441 = vmatprep.mubr.f32.mxu0 0.0
        %4442 = vmatmul.mubr.f32.gmra.mrb[0].mxu0 %v2116
        %v4443 = vpop.f32.mrb[0].mxu0
        %v4444 = vadd.f32 0.0, %v4443
        %v4445 = vpop.f32.mrb[0].mxu0
        %4446 = vdwg.mxu0
        %v4447 = vadd.f32 %v3954, %v2192
        %v4448 = vadd.f32 %v4024, %v2192
        %v4449 = vadd.f32 %v4094, %v2192
        %v4450 = vadd.f32 %v4164, %v2192
        %v4451 = vadd.f32 %v4234, %v2192
        %v4452 = vadd.f32 %v4304, %v2192
        %v4453 = vadd.f32 %v4374, %v2192
        %v4454 = vadd.f32 %v4444, %v2192
        %4455 = vmatprep.subr.mxu0 %v643
        %4456 = vmatpush1.msra.mxu0 %v642
        %4457 = vmatprep.subr.mxu0 %v647
        %4458 = vmatpush1.msra.mxu0 %v646
        %4459 = vmatprep.subr.mxu0 %v651
        %4460 = vmatpush1.msra.mxu0 %v650
        %4461 = vmatprep.subr.mxu0 %v655
        %4462 = vmatpush1.msra.mxu0 %v654
        %4463 = vmatprep.subr.mxu0 %v659
        %4464 = vmatpush1.msra.mxu0 %v658
        %4465 = vmatprep.subr.mxu0 %v663
        %4466 = vmatpush1.msra.mxu0 %v662
        %4467 = vmatprep.subr.mxu0 %v667
        %4468 = vmatpush1.msra.mxu0 %v666
        %4469 = vmatprep.subr.mxu0 %v671
        %4470 = vmatpush1.msra.mxu0 %v670
        %4471 = vmatprep.subr.mxu0 %v675
        %4472 = vmatpush1.msra.mxu0 %v674
        %4473 = vmatprep.subr.mxu0 %v679
        %4474 = vmatpush1.msra.mxu0 %v678
        %4475 = vmatprep.subr.mxu0 %v683
        %4476 = vmatpush1.msra.mxu0 %v682
        %4477 = vmatprep.subr.mxu0 %v687
        %4478 = vmatpush1.msra.mxu0 %v686
        %4479 = vmatprep.subr.mxu0 %v691
        %4480 = vmatpush1.msra.mxu0 %v690
        %4481 = vmatprep.subr.mxu0 %v695
        %4482 = vmatpush1.msra.mxu0 %v694
        %4483 = vmatprep.subr.mxu0 %v699
        %4484 = vmatpush1.msra.mxu0 %v698
        %4485 = vmatprep.subr.mxu0 %v703
        %4486 = vmatpush1.msra.mxu0 %v702
        %4487 = vmatprep.subr.mxu0 0.0
        %4488 = vmatpush1.msra.mxu0 0.0
        %4489 = vmatprep.subr.mxu0 0.0
        %4490 = vmatpush1.msra.mxu0 0.0
        %4491 = vmatprep.subr.mxu0 0.0
        %4492 = vmatpush1.msra.mxu0 0.0
        %4493 = vmatprep.subr.mxu0 0.0
        %4494 = vmatpush1.msra.mxu0 0.0
        %4495 = vmatprep.subr.mxu0 0.0
        %4496 = vmatpush1.msra.mxu0 0.0
        %4497 = vmatprep.subr.mxu0 0.0
        %4498 = vmatpush1.msra.mxu0 0.0
        %4499 = vmatprep.subr.mxu0 0.0
        %4500 = vmatpush1.msra.mxu0 0.0
        %4501 = vmatprep.subr.mxu0 0.0
        %4502 = vmatpush1.msra.mxu0 0.0
        %4503 = vmatprep.subr.mxu0 0.0
        %4504 = vmatpush1.msra.mxu0 0.0
        %4505 = vmatprep.subr.mxu0 0.0
        %4506 = vmatpush1.msra.mxu0 0.0
        %4507 = vmatprep.subr.mxu0 0.0
        %4508 = vmatpush1.msra.mxu0 0.0
        %4509 = vmatprep.subr.mxu0 0.0
        %4510 = vmatpush1.msra.mxu0 0.0
        %4511 = vmatprep.subr.mxu0 0.0
        %4512 = vmatpush1.msra.mxu0 0.0
        %4513 = vmatprep.subr.mxu0 0.0
        %4514 = vmatpush1.msra.mxu0 0.0
        %4515 = vmatprep.subr.mxu0 0.0
        %4516 = vmatpush1.msra.mxu0 0.0
        %4517 = vmatprep.subr.mxu0 0.0
        %4518 = vmatpush1.msra.mxu0 0.0
        %4519 = vmatprep.mubr.f32.mxu0 0.0
        %4520 = vmatmul.mubr.f32.gmra.mrb[0].mxu0 %v4447
        %v4521 = vpop.f32.mrb[0].mxu0
        %v4522 = vadd.f32 0.0, %v4521
        %v4523 = vpop.f32.mrb[0].mxu0
        %v4524 = vadd.f32 0.0, %v4523
        %4525 = vmatprep.mubr.f32.mxu0 0.0
        %4526 = vmatmul.mubr.f32.gmra.mrb[0].mxu0 %v4448
        %v4527 = vpop.f32.mrb[0].mxu0
        %v4528 = vadd.f32 0.0, %v4527
        %v4529 = vpop.f32.mrb[0].mxu0
        %v4530 = vadd.f32 0.0, %v4529
        %4531 = vmatprep.mubr.f32.mxu0 0.0
        %4532 = vmatmul.mubr.f32.gmra.mrb[0].mxu0 %v4449
        %v4533 = vpop.f32.mrb[0].mxu0
        %v4534 = vadd.f32 0.0, %v4533
        %v4535 = vpop.f32.mrb[0].mxu0
        %v4536 = vadd.f32 0.0, %v4535
        %4537 = vmatprep.mubr.f32.mxu0 0.0
        %4538 = vmatmul.mubr.f32.gmra.mrb[0].mxu0 %v4450
        %v4539 = vpop.f32.mrb[0].mxu0
        %v4540 = vadd.f32 0.0, %v4539
        %v4541 = vpop.f32.mrb[0].mxu0
        %v4542 = vadd.f32 0.0, %v4541
        %4543 = vmatprep.mubr.f32.mxu0 0.0
        %4544 = vmatmul.mubr.f32.gmra.mrb[0].mxu0 %v4451
        %v4545 = vpop.f32.mrb[0].mxu0
        %v4546 = vadd.f32 0.0, %v4545
        %v4547 = vpop.f32.mrb[0].mxu0
        %v4548 = vadd.f32 0.0, %v4547
        %4549 = vmatprep.mubr.f32.mxu0 0.0
        %4550 = vmatmul.mubr.f32.gmra.mrb[0].mxu0 %v4452
        %v4551 = vpop.f32.mrb[0].mxu0
        %v4552 = vadd.f32 0.0, %v4551
        %v4553 = vpop.f32.mrb[0].mxu0
        %v4554 = vadd.f32 0.0, %v4553
        %4555 = vmatprep.mubr.f32.mxu0 0.0
        %4556 = vmatmul.mubr.f32.gmra.mrb[0].mxu0 %v4453
        %v4557 = vpop.f32.mrb[0].mxu0
        %v4558 = vadd.f32 0.0, %v4557
        %v4559 = vpop.f32.mrb[0].mxu0
        %v4560 = vadd.f32 0.0, %v4559
        %4561 = vmatprep.mubr.f32.mxu0 0.0
        %4562 = vmatmul.mubr.f32.gmra.mrb[0].mxu0 %v4454
        %v4563 = vpop.f32.mrb[0].mxu0
        %v4564 = vadd.f32 0.0, %v4563
        %v4565 = vpop.f32.mrb[0].mxu0
        %v4566 = vadd.f32 0.0, %v4565
        %4567 = vdwg.mxu0
        %4568 = vmatprep.subr.mxu0 %v645
        %4569 = vmatpush1.msra.mxu0 %v644
        %4570 = vmatprep.subr.mxu0 %v649
        %4571 = vmatpush1.msra.mxu0 %v648
        %4572 = vmatprep.subr.mxu0 %v653
        %4573 = vmatpush1.msra.mxu0 %v652
        %4574 = vmatprep.subr.mxu0 %v657
        %4575 = vmatpush1.msra.mxu0 %v656
        %4576 = vmatprep.subr.mxu0 %v661
        %4577 = vmatpush1.msra.mxu0 %v660
        %4578 = vmatprep.subr.mxu0 %v665
        %4579 = vmatpush1.msra.mxu0 %v664
        %4580 = vmatprep.subr.mxu0 %v669
        %4581 = vmatpush1.msra.mxu0 %v668
        %4582 = vmatprep.subr.mxu0 %v673
        %4583 = vmatpush1.msra.mxu0 %v672
        %4584 = vmatprep.subr.mxu0 %v677
        %4585 = vmatpush1.msra.mxu0 %v676
        %4586 = vmatprep.subr.mxu0 %v681
        %4587 = vmatpush1.msra.mxu0 %v680
        %4588 = vmatprep.subr.mxu0 %v685
        %4589 = vmatpush1.msra.mxu0 %v684
        %4590 = vmatprep.subr.mxu0 %v689
        %4591 = vmatpush1.msra.mxu0 %v688
        %4592 = vmatprep.subr.mxu0 %v693
        %4593 = vmatpush1.msra.mxu0 %v692
        %4594 = vmatprep.subr.mxu0 %v697
        %4595 = vmatpush1.msra.mxu0 %v696
        %4596 = vmatprep.subr.mxu0 %v701
        %4597 = vmatpush1.msra.mxu0 %v700
        %4598 = vmatprep.subr.mxu0 %v705
        %4599 = vmatpush1.msra.mxu0 %v704
        %4600 = vmatprep.subr.mxu0 0.0
        %4601 = vmatpush1.msra.mxu0 0.0
        %4602 = vmatprep.subr.mxu0 0.0
        %4603 = vmatpush1.msra.mxu0 0.0
        %4604 = vmatprep.subr.mxu0 0.0
        %4605 = vmatpush1.msra.mxu0 0.0
        %4606 = vmatprep.subr.mxu0 0.0
        %4607 = vmatpush1.msra.mxu0 0.0
        %4608 = vmatprep.subr.mxu0 0.0
        %4609 = vmatpush1.msra.mxu0 0.0
        %4610 = vmatprep.subr.mxu0 0.0
        %4611 = vmatpush1.msra.mxu0 0.0
        %4612 = vmatprep.subr.mxu0 0.0
        %4613 = vmatpush1.msra.mxu0 0.0
        %4614 = vmatprep.subr.mxu0 0.0
        %4615 = vmatpush1.msra.mxu0 0.0
        %4616 = vmatprep.subr.mxu0 0.0
        %4617 = vmatpush1.msra.mxu0 0.0
        %4618 = vmatprep.subr.mxu0 0.0
        %4619 = vmatpush1.msra.mxu0 0.0
        %4620 = vmatprep.subr.mxu0 0.0
        %4621 = vmatpush1.msra.mxu0 0.0
        %4622 = vmatprep.subr.mxu0 0.0
        %4623 = vmatpush1.msra.mxu0 0.0
        %4624 = vmatprep.subr.mxu0 0.0
        %4625 = vmatpush1.msra.mxu0 0.0
        %4626 = vmatprep.subr.mxu0 0.0
        %4627 = vmatpush1.msra.mxu0 0.0
        %4628 = vmatprep.subr.mxu0 0.0
        %4629 = vmatpush1.msra.mxu0 0.0
        %4630 = vmatprep.subr.mxu0 0.0
        %4631 = vmatpush1.msra.mxu0 0.0
        %4632 = vmatprep.mubr.f32.mxu0 0.0
        %4633 = vmatmul.mubr.f32.gmra.mrb[0].mxu0 %v4447
        %v4634 = vpop.f32.mrb[0].mxu0
        %v4635 = vadd.f32 0.0, %v4634
        %v4636 = vpop.f32.mrb[0].mxu0
        %v4637 = vadd.f32 0.0, %v4636
        %4638 = vmatprep.mubr.f32.mxu0 0.0
        %4639 = vmatmul.mubr.f32.gmra.mrb[0].mxu0 %v4448
        %v4640 = vpop.f32.mrb[0].mxu0
        %v4641 = vadd.f32 0.0, %v4640
        %v4642 = vpop.f32.mrb[0].mxu0
        %v4643 = vadd.f32 0.0, %v4642
        %4644 = vmatprep.mubr.f32.mxu0 0.0
        %4645 = vmatmul.mubr.f32.gmra.mrb[0].mxu0 %v4449
        %v4646 = vpop.f32.mrb[0].mxu0
        %v4647 = vadd.f32 0.0, %v4646
        %v4648 = vpop.f32.mrb[0].mxu0
        %v4649 = vadd.f32 0.0, %v4648
        %4650 = vmatprep.mubr.f32.mxu0 0.0
        %4651 = vmatmul.mubr.f32.gmra.mrb[0].mxu0 %v4450
        %v4652 = vpop.f32.mrb[0].mxu0
        %v4653 = vadd.f32 0.0, %v4652
        %v4654 = vpop.f32.mrb[0].mxu0
        %v4655 = vadd.f32 0.0, %v4654
        %4656 = vmatprep.mubr.f32.mxu0 0.0
        %4657 = vmatmul.mubr.f32.gmra.mrb[0].mxu0 %v4451
        %v4658 = vpop.f32.mrb[0].mxu0
        %v4659 = vadd.f32 0.0, %v4658
        %v4660 = vpop.f32.mrb[0].mxu0
        %v4661 = vadd.f32 0.0, %v4660
        %4662 = vmatprep.mubr.f32.mxu0 0.0
        %4663 = vmatmul.mubr.f32.gmra.mrb[0].mxu0 %v4452
        %v4664 = vpop.f32.mrb[0].mxu0
        %v4665 = vadd.f32 0.0, %v4664
        %v4666 = vpop.f32.mrb[0].mxu0
        %v4667 = vadd.f32 0.0, %v4666
        %4668 = vmatprep.mubr.f32.mxu0 0.0
        %4669 = vmatmul.mubr.f32.gmra.mrb[0].mxu0 %v4453
        %v4670 = vpop.f32.mrb[0].mxu0
        %v4671 = vadd.f32 0.0, %v4670
        %v4672 = vpop.f32.mrb[0].mxu0
        %v4673 = vadd.f32 0.0, %v4672
        %4674 = vmatprep.mubr.f32.mxu0 0.0
        %4675 = vmatmul.mubr.f32.gmra.mrb[0].mxu0 %v4454
        %v4676 = vpop.f32.mrb[0].mxu0
        %v4677 = vadd.f32 0.0, %v4676
        %v4678 = vpop.f32.mrb[0].mxu0
        %v4679 = vadd.f32 0.0, %v4678
        %4680 = vdwg.mxu0
        %4681 = vmatprep.subr.mxu0 %v579
        %4682 = vmatpush1.msra.mxu0 %v578
        %4683 = vmatprep.subr.mxu0 %v583
        %4684 = vmatpush1.msra.mxu0 %v582
        %4685 = vmatprep.subr.mxu0 %v587
        %4686 = vmatpush1.msra.mxu0 %v586
        %4687 = vmatprep.subr.mxu0 %v591
        %4688 = vmatpush1.msra.mxu0 %v590
        %4689 = vmatprep.subr.mxu0 %v595
        %4690 = vmatpush1.msra.mxu0 %v594
        %4691 = vmatprep.subr.mxu0 %v599
        %4692 = vmatpush1.msra.mxu0 %v598
        %4693 = vmatprep.subr.mxu0 %v603
        %4694 = vmatpush1.msra.mxu0 %v602
        %4695 = vmatprep.subr.mxu0 %v607
        %4696 = vmatpush1.msra.mxu0 %v606
        %4697 = vmatprep.subr.mxu0 %v611
        %4698 = vmatpush1.msra.mxu0 %v610
        %4699 = vmatprep.subr.mxu0 %v615
        %4700 = vmatpush1.msra.mxu0 %v614
        %4701 = vmatprep.subr.mxu0 %v619
        %4702 = vmatpush1.msra.mxu0 %v618
        %4703 = vmatprep.subr.mxu0 %v623
        %4704 = vmatpush1.msra.mxu0 %v622
        %4705 = vmatprep.subr.mxu0 %v627
        %4706 = vmatpush1.msra.mxu0 %v626
        %4707 = vmatprep.subr.mxu0 %v631
        %4708 = vmatpush1.msra.mxu0 %v630
        %4709 = vmatprep.subr.mxu0 %v635
        %4710 = vmatpush1.msra.mxu0 %v634
        %4711 = vmatprep.subr.mxu0 %v639
        %4712 = vmatpush1.msra.mxu0 %v638
        %4713 = vmatprep.subr.mxu0 0.0
        %4714 = vmatpush1.msra.mxu0 0.0
        %4715 = vmatprep.subr.mxu0 0.0
        %4716 = vmatpush1.msra.mxu0 0.0
        %4717 = vmatprep.subr.mxu0 0.0
        %4718 = vmatpush1.msra.mxu0 0.0
        %4719 = vmatprep.subr.mxu0 0.0
        %4720 = vmatpush1.msra.mxu0 0.0
        %4721 = vmatprep.subr.mxu0 0.0
        %4722 = vmatpush1.msra.mxu0 0.0
        %4723 = vmatprep.subr.mxu0 0.0
        %4724 = vmatpush1.msra.mxu0 0.0
        %4725 = vmatprep.subr.mxu0 0.0
        %4726 = vmatpush1.msra.mxu0 0.0
        %4727 = vmatprep.subr.mxu0 0.0
        %4728 = vmatpush1.msra.mxu0 0.0
        %4729 = vmatprep.subr.mxu0 0.0
        %4730 = vmatpush1.msra.mxu0 0.0
        %4731 = vmatprep.subr.mxu0 0.0
        %4732 = vmatpush1.msra.mxu0 0.0
        %4733 = vmatprep.subr.mxu0 0.0
        %4734 = vmatpush1.msra.mxu0 0.0
        %4735 = vmatprep.subr.mxu0 0.0
        %4736 = vmatpush1.msra.mxu0 0.0
        %4737 = vmatprep.subr.mxu0 0.0
        %4738 = vmatpush1.msra.mxu0 0.0
        %4739 = vmatprep.subr.mxu0 0.0
        %4740 = vmatpush1.msra.mxu0 0.0
        %4741 = vmatprep.subr.mxu0 0.0
        %4742 = vmatpush1.msra.mxu0 0.0
        %4743 = vmatprep.subr.mxu0 0.0
        %4744 = vmatpush1.msra.mxu0 0.0
        %4745 = vmatprep.mubr.f32.mxu0 0.0
        %4746 = vmatmul.mubr.f32.gmra.mrb[0].mxu0 %v3879
        %v4747 = vpop.f32.mrb[0].mxu0
        %v4748 = vadd.f32 %v4522, %v4747
        %v4749 = vpop.f32.mrb[0].mxu0
        %v4750 = vadd.f32 %v4524, %v4749
        %4751 = vmatprep.mubr.f32.mxu0 0.0
        %4752 = vmatmul.mubr.f32.gmra.mrb[0].mxu0 %v3880
        %v4753 = vpop.f32.mrb[0].mxu0
        %v4754 = vadd.f32 %v4528, %v4753
        %v4755 = vpop.f32.mrb[0].mxu0
        %v4756 = vadd.f32 %v4530, %v4755
        %4757 = vmatprep.mubr.f32.mxu0 0.0
        %4758 = vmatmul.mubr.f32.gmra.mrb[0].mxu0 %v3881
        %v4759 = vpop.f32.mrb[0].mxu0
        %v4760 = vadd.f32 %v4534, %v4759
        %v4761 = vpop.f32.mrb[0].mxu0
        %v4762 = vadd.f32 %v4536, %v4761
        %4763 = vmatprep.mubr.f32.mxu0 0.0
        %4764 = vmatmul.mubr.f32.gmra.mrb[0].mxu0 %v3882
        %v4765 = vpop.f32.mrb[0].mxu0
        %v4766 = vadd.f32 %v4540, %v4765
        %v4767 = vpop.f32.mrb[0].mxu0
        %v4768 = vadd.f32 %v4542, %v4767
        %4769 = vmatprep.mubr.f32.mxu0 0.0
        %4770 = vmatmul.mubr.f32.gmra.mrb[0].mxu0 %v3883
        %v4771 = vpop.f32.mrb[0].mxu0
        %v4772 = vadd.f32 %v4546, %v4771
        %v4773 = vpop.f32.mrb[0].mxu0
        %v4774 = vadd.f32 %v4548, %v4773
        %4775 = vmatprep.mubr.f32.mxu0 0.0
        %4776 = vmatmul.mubr.f32.gmra.mrb[0].mxu0 %v3884
        %v4777 = vpop.f32.mrb[0].mxu0
        %v4778 = vadd.f32 %v4552, %v4777
        %v4779 = vpop.f32.mrb[0].mxu0
        %v4780 = vadd.f32 %v4554, %v4779
        %4781 = vmatprep.mubr.f32.mxu0 0.0
        %4782 = vmatmul.mubr.f32.gmra.mrb[0].mxu0 %v3885
        %v4783 = vpop.f32.mrb[0].mxu0
        %v4784 = vadd.f32 %v4558, %v4783
        %v4785 = vpop.f32.mrb[0].mxu0
        %v4786 = vadd.f32 %v4560, %v4785
        %4787 = vmatprep.mubr.f32.mxu0 0.0
        %4788 = vmatmul.mubr.f32.gmra.mrb[0].mxu0 %v3886
        %v4789 = vpop.f32.mrb[0].mxu0
        %v4790 = vadd.f32 %v4564, %v4789
        %v4791 = vpop.f32.mrb[0].mxu0
        %v4792 = vadd.f32 %v4566, %v4791
        %4793 = vdwg.mxu0
        %4794 = vmatprep.subr.mxu0 %v581
        %4795 = vmatpush1.msra.mxu0 %v580
        %4796 = vmatprep.subr.mxu0 %v585
        %4797 = vmatpush1.msra.mxu0 %v584
        %4798 = vmatprep.subr.mxu0 %v589
        %4799 = vmatpush1.msra.mxu0 %v588
        %4800 = vmatprep.subr.mxu0 %v593
        %4801 = vmatpush1.msra.mxu0 %v592
        %4802 = vmatprep.subr.mxu0 %v597
        %4803 = vmatpush1.msra.mxu0 %v596
        %4804 = vmatprep.subr.mxu0 %v601
        %4805 = vmatpush1.msra.mxu0 %v600
        %4806 = vmatprep.subr.mxu0 %v605
        %4807 = vmatpush1.msra.mxu0 %v604
        %4808 = vmatprep.subr.mxu0 %v609
        %4809 = vmatpush1.msra.mxu0 %v608
        %4810 = vmatprep.subr.mxu0 %v613
        %4811 = vmatpush1.msra.mxu0 %v612
        %4812 = vmatprep.subr.mxu0 %v617
        %4813 = vmatpush1.msra.mxu0 %v616
        %4814 = vmatprep.subr.mxu0 %v621
        %4815 = vmatpush1.msra.mxu0 %v620
        %4816 = vmatprep.subr.mxu0 %v625
        %4817 = vmatpush1.msra.mxu0 %v624
        %4818 = vmatprep.subr.mxu0 %v629
        %4819 = vmatpush1.msra.mxu0 %v628
        %4820 = vmatprep.subr.mxu0 %v633
        %4821 = vmatpush1.msra.mxu0 %v632
        %4822 = vmatprep.subr.mxu0 %v637
        %4823 = vmatpush1.msra.mxu0 %v636
        %4824 = vmatprep.subr.mxu0 %v641
        %4825 = vmatpush1.msra.mxu0 %v640
        %4826 = vmatprep.subr.mxu0 0.0
        %4827 = vmatpush1.msra.mxu0 0.0
        %4828 = vmatprep.subr.mxu0 0.0
        %4829 = vmatpush1.msra.mxu0 0.0
        %4830 = vmatprep.subr.mxu0 0.0
        %4831 = vmatpush1.msra.mxu0 0.0
        %4832 = vmatprep.subr.mxu0 0.0
        %4833 = vmatpush1.msra.mxu0 0.0
        %4834 = vmatprep.subr.mxu0 0.0
        %4835 = vmatpush1.msra.mxu0 0.0
        %4836 = vmatprep.subr.mxu0 0.0
        %4837 = vmatpush1.msra.mxu0 0.0
        %4838 = vmatprep.subr.mxu0 0.0
        %4839 = vmatpush1.msra.mxu0 0.0
        %4840 = vmatprep.subr.mxu0 0.0
        %4841 = vmatpush1.msra.mxu0 0.0
        %4842 = vmatprep.subr.mxu0 0.0
        %4843 = vmatpush1.msra.mxu0 0.0
        %4844 = vmatprep.subr.mxu0 0.0
        %4845 = vmatpush1.msra.mxu0 0.0
        %4846 = vmatprep.subr.mxu0 0.0
        %4847 = vmatpush1.msra.mxu0 0.0
        %4848 = vmatprep.subr.mxu0 0.0
        %4849 = vmatpush1.msra.mxu0 0.0
        %4850 = vmatprep.subr.mxu0 0.0
        %4851 = vmatpush1.msra.mxu0 0.0
        %4852 = vmatprep.subr.mxu0 0.0
        %4853 = vmatpush1.msra.mxu0 0.0
        %4854 = vmatprep.subr.mxu0 0.0
        %4855 = vmatpush1.msra.mxu0 0.0
        %4856 = vmatprep.subr.mxu0 0.0
        %4857 = vmatpush1.msra.mxu0 0.0
        %4858 = vmatprep.mubr.f32.mxu0 0.0
        %4859 = vmatmul.mubr.f32.gmra.mrb[0].mxu0 %v3879
        %v4860 = vpop.f32.mrb[0].mxu0
        %v4861 = vadd.f32 %v4635, %v4860
        %v4862 = vpop.f32.mrb[0].mxu0
        %v4863 = vadd.f32 %v4637, %v4862
        %4864 = vmatprep.mubr.f32.mxu0 0.0
        %4865 = vmatmul.mubr.f32.gmra.mrb[0].mxu0 %v3880
        %v4866 = vpop.f32.mrb[0].mxu0
        %v4867 = vadd.f32 %v4641, %v4866
        %v4868 = vpop.f32.mrb[0].mxu0
        %v4869 = vadd.f32 %v4643, %v4868
        %4870 = vmatprep.mubr.f32.mxu0 0.0
        %4871 = vmatmul.mubr.f32.gmra.mrb[0].mxu0 %v3881
        %v4872 = vpop.f32.mrb[0].mxu0
        %v4873 = vadd.f32 %v4647, %v4872
        %v4874 = vpop.f32.mrb[0].mxu0
        %v4875 = vadd.f32 %v4649, %v4874
        %4876 = vmatprep.mubr.f32.mxu0 0.0
        %4877 = vmatmul.mubr.f32.gmra.mrb[0].mxu0 %v3882
        %v4878 = vpop.f32.mrb[0].mxu0
        %v4879 = vadd.f32 %v4653, %v4878
        %v4880 = vpop.f32.mrb[0].mxu0
        %v4881 = vadd.f32 %v4655, %v4880
        %4882 = vmatprep.mubr.f32.mxu0 0.0
        %4883 = vmatmul.mubr.f32.gmra.mrb[0].mxu0 %v3883
        %v4884 = vpop.f32.mrb[0].mxu0
        %v4885 = vadd.f32 %v4659, %v4884
        %v4886 = vpop.f32.mrb[0].mxu0
        %v4887 = vadd.f32 %v4661, %v4886
        %4888 = vmatprep.mubr.f32.mxu0 0.0
        %4889 = vmatmul.mubr.f32.gmra.mrb[0].mxu0 %v3884
        %v4890 = vpop.f32.mrb[0].mxu0
        %v4891 = vadd.f32 %v4665, %v4890
        %v4892 = vpop.f32.mrb[0].mxu0
        %v4893 = vadd.f32 %v4667, %v4892
        %4894 = vmatprep.mubr.f32.mxu0 0.0
        %4895 = vmatmul.mubr.f32.gmra.mrb[0].mxu0 %v3885
        %v4896 = vpop.f32.mrb[0].mxu0
        %v4897 = vadd.f32 %v4671, %v4896
        %v4898 = vpop.f32.mrb[0].mxu0
        %v4899 = vadd.f32 %v4673, %v4898
        %4900 = vmatprep.mubr.f32.mxu0 0.0
        %4901 = vmatmul.mubr.f32.gmra.mrb[0].mxu0 %v3886
        %v4902 = vpop.f32.mrb[0].mxu0
        %v4903 = vadd.f32 %v4677, %v4902
        %v4904 = vpop.f32.mrb[0].mxu0
        %v4905 = vadd.f32 %v4679, %v4904
        %4906 = vdwg.mxu0
        %4907 = vmatprep.subr.mxu0 %v707
        %4908 = vmatpush1.msra.mxu0 %v706
        %4909 = vmatprep.subr.mxu0 %v711
        %4910 = vmatpush1.msra.mxu0 %v710
        %4911 = vmatprep.subr.mxu0 %v715
        %4912 = vmatpush1.msra.mxu0 %v714
        %4913 = vmatprep.subr.mxu0 %v719
        %4914 = vmatpush1.msra.mxu0 %v718
        %4915 = vmatprep.subr.mxu0 %v723
        %4916 = vmatpush1.msra.mxu0 %v722
        %4917 = vmatprep.subr.mxu0 %v727
        %4918 = vmatpush1.msra.mxu0 %v726
        %4919 = vmatprep.subr.mxu0 %v731
        %4920 = vmatpush1.msra.mxu0 %v730
        %4921 = vmatprep.subr.mxu0 %v735
        %4922 = vmatpush1.msra.mxu0 %v734
        %4923 = vmatprep.subr.mxu0 %v739
        %4924 = vmatpush1.msra.mxu0 %v738
        %4925 = vmatprep.subr.mxu0 %v743
        %4926 = vmatpush1.msra.mxu0 %v742
        %4927 = vmatprep.subr.mxu0 %v747
        %4928 = vmatpush1.msra.mxu0 %v746
        %4929 = vmatprep.subr.mxu0 %v751
        %4930 = vmatpush1.msra.mxu0 %v750
        %4931 = vmatprep.subr.mxu0 %v755
        %4932 = vmatpush1.msra.mxu0 %v754
        %4933 = vmatprep.subr.mxu0 %v759
        %4934 = vmatpush1.msra.mxu0 %v758
        %4935 = vmatprep.subr.mxu0 %v763
        %4936 = vmatpush1.msra.mxu0 %v762
        %4937 = vmatprep.subr.mxu0 %v767
        %4938 = vmatpush1.msra.mxu0 %v766
        %4939 = vmatprep.subr.mxu0 0.0
        %4940 = vmatpush1.msra.mxu0 0.0
        %4941 = vmatprep.subr.mxu0 0.0
        %4942 = vmatpush1.msra.mxu0 0.0
        %4943 = vmatprep.subr.mxu0 0.0
        %4944 = vmatpush1.msra.mxu0 0.0
        %4945 = vmatprep.subr.mxu0 0.0
        %4946 = vmatpush1.msra.mxu0 0.0
        %4947 = vmatprep.subr.mxu0 0.0
        %4948 = vmatpush1.msra.mxu0 0.0
        %4949 = vmatprep.subr.mxu0 0.0
        %4950 = vmatpush1.msra.mxu0 0.0
        %4951 = vmatprep.subr.mxu0 0.0
        %4952 = vmatpush1.msra.mxu0 0.0
        %4953 = vmatprep.subr.mxu0 0.0
        %4954 = vmatpush1.msra.mxu0 0.0
        %4955 = vmatprep.subr.mxu0 0.0
        %4956 = vmatpush1.msra.mxu0 0.0
        %4957 = vmatprep.subr.mxu0 0.0
        %4958 = vmatpush1.msra.mxu0 0.0
        %4959 = vmatprep.subr.mxu0 0.0
        %4960 = vmatpush1.msra.mxu0 0.0
        %4961 = vmatprep.subr.mxu0 0.0
        %4962 = vmatpush1.msra.mxu0 0.0
        %4963 = vmatprep.subr.mxu0 0.0
        %4964 = vmatpush1.msra.mxu0 0.0
        %4965 = vmatprep.subr.mxu0 0.0
        %4966 = vmatpush1.msra.mxu0 0.0
        %4967 = vmatprep.subr.mxu0 0.0
        %4968 = vmatpush1.msra.mxu0 0.0
        %4969 = vmatprep.subr.mxu0 0.0
        %4970 = vmatpush1.msra.mxu0 0.0
        %4971 = vmatprep.mubr.f32.mxu0 0.0
        %4972 = vmatmul.mubr.f32.gmra.mrb[0].mxu0 %v3101
        %v4973 = vpop.f32.mrb[0].mxu0
        %v4974 = vadd.f32 0.0, %v4973
        %v4975 = vpop.f32.mrb[0].mxu0
        %v4976 = vadd.f32 0.0, %v4975
        %4977 = vmatprep.mubr.f32.mxu0 0.0
        %4978 = vmatmul.mubr.f32.gmra.mrb[0].mxu0 %v3102
        %v4979 = vpop.f32.mrb[0].mxu0
        %v4980 = vadd.f32 0.0, %v4979
        %v4981 = vpop.f32.mrb[0].mxu0
        %v4982 = vadd.f32 0.0, %v4981
        %4983 = vmatprep.mubr.f32.mxu0 0.0
        %4984 = vmatmul.mubr.f32.gmra.mrb[0].mxu0 %v3103
        %v4985 = vpop.f32.mrb[0].mxu0
        %v4986 = vadd.f32 0.0, %v4985
        %v4987 = vpop.f32.mrb[0].mxu0
        %v4988 = vadd.f32 0.0, %v4987
        %4989 = vmatprep.mubr.f32.mxu0 0.0
        %4990 = vmatmul.mubr.f32.gmra.mrb[0].mxu0 %v3104
        %v4991 = vpop.f32.mrb[0].mxu0
        %v4992 = vadd.f32 0.0, %v4991
        %v4993 = vpop.f32.mrb[0].mxu0
        %v4994 = vadd.f32 0.0, %v4993
        %4995 = vmatprep.mubr.f32.mxu0 0.0
        %4996 = vmatmul.mubr.f32.gmra.mrb[0].mxu0 %v3105
        %v4997 = vpop.f32.mrb[0].mxu0
        %v4998 = vadd.f32 0.0, %v4997
        %v4999 = vpop.f32.mrb[0].mxu0
        %v5000 = vadd.f32 0.0, %v4999
        %5001 = vmatprep.mubr.f32.mxu0 0.0
        %5002 = vmatmul.mubr.f32.gmra.mrb[0].mxu0 %v3106
        %v5003 = vpop.f32.mrb[0].mxu0
        %v5004 = vadd.f32 0.0, %v5003
        %v5005 = vpop.f32.mrb[0].mxu0
        %v5006 = vadd.f32 0.0, %v5005
        %5007 = vmatprep.mubr.f32.mxu0 0.0
        %5008 = vmatmul.mubr.f32.gmra.mrb[0].mxu0 %v3107
        %v5009 = vpop.f32.mrb[0].mxu0
        %v5010 = vadd.f32 0.0, %v5009
        %v5011 = vpop.f32.mrb[0].mxu0
        %v5012 = vadd.f32 0.0, %v5011
        %5013 = vmatprep.mubr.f32.mxu0 0.0
        %5014 = vmatmul.mubr.f32.gmra.mrb[0].mxu0 %v3108
        %v5015 = vpop.f32.mrb[0].mxu0
        %v5016 = vadd.f32 0.0, %v5015
        %v5017 = vpop.f32.mrb[0].mxu0
        %v5018 = vadd.f32 0.0, %v5017
        %5019 = vdwg.mxu0
        %5020 = vmatprep.subr.mxu0 %v709
        %5021 = vmatpush1.msra.mxu0 %v708
        %5022 = vmatprep.subr.mxu0 %v713
        %5023 = vmatpush1.msra.mxu0 %v712
        %5024 = vmatprep.subr.mxu0 %v717
        %5025 = vmatpush1.msra.mxu0 %v716
        %5026 = vmatprep.subr.mxu0 %v721
        %5027 = vmatpush1.msra.mxu0 %v720
        %5028 = vmatprep.subr.mxu0 %v725
        %5029 = vmatpush1.msra.mxu0 %v724
        %5030 = vmatprep.subr.mxu0 %v729
        %5031 = vmatpush1.msra.mxu0 %v728
        %5032 = vmatprep.subr.mxu0 %v733
        %5033 = vmatpush1.msra.mxu0 %v732
        %5034 = vmatprep.subr.mxu0 %v737
        %5035 = vmatpush1.msra.mxu0 %v736
        %5036 = vmatprep.subr.mxu0 %v741
        %5037 = vmatpush1.msra.mxu0 %v740
        %5038 = vmatprep.subr.mxu0 %v745
        %5039 = vmatpush1.msra.mxu0 %v744
        %5040 = vmatprep.subr.mxu0 %v749
        %5041 = vmatpush1.msra.mxu0 %v748
        %5042 = vmatprep.subr.mxu0 %v753
        %5043 = vmatpush1.msra.mxu0 %v752
        %5044 = vmatprep.subr.mxu0 %v757
        %5045 = vmatpush1.msra.mxu0 %v756
        %5046 = vmatprep.subr.mxu0 %v761
        %5047 = vmatpush1.msra.mxu0 %v760
        %5048 = vmatprep.subr.mxu0 %v765
        %5049 = vmatpush1.msra.mxu0 %v764
        %5050 = vmatprep.subr.mxu0 %v769
        %5051 = vmatpush1.msra.mxu0 %v768
        %5052 = vmatprep.subr.mxu0 0.0
        %5053 = vmatpush1.msra.mxu0 0.0
        %5054 = vmatprep.subr.mxu0 0.0
        %5055 = vmatpush1.msra.mxu0 0.0
        %5056 = vmatprep.subr.mxu0 0.0
        %5057 = vmatpush1.msra.mxu0 0.0
        %5058 = vmatprep.subr.mxu0 0.0
        %5059 = vmatpush1.msra.mxu0 0.0
        %5060 = vmatprep.subr.mxu0 0.0
        %5061 = vmatpush1.msra.mxu0 0.0
        %5062 = vmatprep.subr.mxu0 0.0
        %5063 = vmatpush1.msra.mxu0 0.0
        %5064 = vmatprep.subr.mxu0 0.0
        %5065 = vmatpush1.msra.mxu0 0.0
        %5066 = vmatprep.subr.mxu0 0.0
        %5067 = vmatpush1.msra.mxu0 0.0
        %5068 = vmatprep.subr.mxu0 0.0
        %5069 = vmatpush1.msra.mxu0 0.0
        %5070 = vmatprep.subr.mxu0 0.0
        %5071 = vmatpush1.msra.mxu0 0.0
        %5072 = vmatprep.subr.mxu0 0.0
        %5073 = vmatpush1.msra.mxu0 0.0
        %5074 = vmatprep.subr.mxu0 0.0
        %5075 = vmatpush1.msra.mxu0 0.0
        %5076 = vmatprep.subr.mxu0 0.0
        %5077 = vmatpush1.msra.mxu0 0.0
        %5078 = vmatprep.subr.mxu0 0.0
        %5079 = vmatpush1.msra.mxu0 0.0
        %5080 = vmatprep.subr.mxu0 0.0
        %5081 = vmatpush1.msra.mxu0 0.0
        %5082 = vmatprep.subr.mxu0 0.0
        %5083 = vmatpush1.msra.mxu0 0.0
        %5084 = vmatprep.mubr.f32.mxu0 0.0
        %5085 = vmatmul.mubr.f32.gmra.mrb[0].mxu0 %v3101
        %v5086 = vpop.f32.mrb[0].mxu0
        %v5087 = vadd.f32 0.0, %v5086
        %v5088 = vpop.f32.mrb[0].mxu0
        %v5089 = vadd.f32 0.0, %v5088
        %5090 = vmatprep.mubr.f32.mxu0 0.0
        %5091 = vmatmul.mubr.f32.gmra.mrb[0].mxu0 %v3102
        %v5092 = vpop.f32.mrb[0].mxu0
        %v5093 = vadd.f32 0.0, %v5092
        %v5094 = vpop.f32.mrb[0].mxu0
        %v5095 = vadd.f32 0.0, %v5094
        %5096 = vmatprep.mubr.f32.mxu0 0.0
        %5097 = vmatmul.mubr.f32.gmra.mrb[0].mxu0 %v3103
        %v5098 = vpop.f32.mrb[0].mxu0
        %v5099 = vadd.f32 0.0, %v5098
        %v5100 = vpop.f32.mrb[0].mxu0
        %v5101 = vadd.f32 0.0, %v5100
        %5102 = vmatprep.mubr.f32.mxu0 0.0
        %5103 = vmatmul.mubr.f32.gmra.mrb[0].mxu0 %v3104
        %v5104 = vpop.f32.mrb[0].mxu0
        %v5105 = vadd.f32 0.0, %v5104
        %v5106 = vpop.f32.mrb[0].mxu0
        %v5107 = vadd.f32 0.0, %v5106
        %5108 = vmatprep.mubr.f32.mxu0 0.0
        %5109 = vmatmul.mubr.f32.gmra.mrb[0].mxu0 %v3105
        %v5110 = vpop.f32.mrb[0].mxu0
        %v5111 = vadd.f32 0.0, %v5110
        %v5112 = vpop.f32.mrb[0].mxu0
        %v5113 = vadd.f32 0.0, %v5112
        %5114 = vmatprep.mubr.f32.mxu0 0.0
        %5115 = vmatmul.mubr.f32.gmra.mrb[0].mxu0 %v3106
        %v5116 = vpop.f32.mrb[0].mxu0
        %v5117 = vadd.f32 0.0, %v5116
        %v5118 = vpop.f32.mrb[0].mxu0
        %v5119 = vadd.f32 0.0, %v5118
        %5120 = vmatprep.mubr.f32.mxu0 0.0
        %5121 = vmatmul.mubr.f32.gmra.mrb[0].mxu0 %v3107
        %v5122 = vpop.f32.mrb[0].mxu0
        %v5123 = vadd.f32 0.0, %v5122
        %v5124 = vpop.f32.mrb[0].mxu0
        %v5125 = vadd.f32 0.0, %v5124
        %5126 = vmatprep.mubr.f32.mxu0 0.0
        %5127 = vmatmul.mubr.f32.gmra.mrb[0].mxu0 %v3108
        %v5128 = vpop.f32.mrb[0].mxu0
        %v5129 = vadd.f32 0.0, %v5128
        %v5130 = vpop.f32.mrb[0].mxu0
        %v5131 = vadd.f32 0.0, %v5130
        %5132 = vdwg.mxu0
        %v5133 = vadd.f32 %v4748, %v4974
        %v5134 = vadd.f32 %v4750, %v4976
        %v5135 = vadd.f32 %v4861, %v5087
        %v5136 = vadd.f32 %v4863, %v5089
        %v5137 = vadd.f32 %v4754, %v4980
        %v5138 = vadd.f32 %v4756, %v4982
        %v5139 = vadd.f32 %v4867, %v5093
        %v5140 = vadd.f32 %v4869, %v5095
        %v5141 = vadd.f32 %v4760, %v4986
        %v5142 = vadd.f32 %v4762, %v4988
        %v5143 = vadd.f32 %v4873, %v5099
        %v5144 = vadd.f32 %v4875, %v5101
        %v5145 = vadd.f32 %v4766, %v4992
        %v5146 = vadd.f32 %v4768, %v4994
        %v5147 = vadd.f32 %v4879, %v5105
        %v5148 = vadd.f32 %v4881, %v5107
        %v5149 = vadd.f32 %v4772, %v4998
        %v5150 = vadd.f32 %v4774, %v5000
        %v5151 = vadd.f32 %v4885, %v5111
        %v5152 = vadd.f32 %v4887, %v5113
        %v5153 = vadd.f32 %v4778, %v5004
        %v5154 = vadd.f32 %v4780, %v5006
        %v5155 = vadd.f32 %v4891, %v5117
        %v5156 = vadd.f32 %v4893, %v5119
        %v5157 = vadd.f32 %v4784, %v5010
        %v5158 = vadd.f32 %v4786, %v5012
        %v5159 = vadd.f32 %v4897, %v5123
        %v5160 = vadd.f32 %v4899, %v5125
        %v5161 = vadd.f32 %v4790, %v5016
        %v5162 = vadd.f32 %v4792, %v5018
        %v5163 = vadd.f32 %v4903, %v5129
        %v5164 = vadd.f32 %v4905, %v5131
        %v5165 = vadd.f32 %v5133, %v2916
        %v5166 = vadd.f32 %v5134, %v2920
        %v5167 = vadd.f32 %v5135, %v2924
        %v5168 = vadd.f32 %v5136, %v2928
        %v5169 = vadd.f32 %v5137, %v2916
        %v5170 = vadd.f32 %v5138, %v2920
        %v5171 = vadd.f32 %v5139, %v2924
        %v5172 = vadd.f32 %v5140, %v2928
        %v5173 = vadd.f32 %v5141, %v2916
        %v5174 = vadd.f32 %v5142, %v2920
        %v5175 = vadd.f32 %v5143, %v2924
        %v5176 = vadd.f32 %v5144, %v2928
        %v5177 = vadd.f32 %v5145, %v2916
        %v5178 = vadd.f32 %v5146, %v2920
        %v5179 = vadd.f32 %v5147, %v2924
        %v5180 = vadd.f32 %v5148, %v2928
        %v5181 = vadd.f32 %v5149, %v2916
        %v5182 = vadd.f32 %v5150, %v2920
        %v5183 = vadd.f32 %v5151, %v2924
        %v5184 = vadd.f32 %v5152, %v2928
        %v5185 = vadd.f32 %v5153, %v2916
        %v5186 = vadd.f32 %v5154, %v2920
        %v5187 = vadd.f32 %v5155, %v2924
        %v5188 = vadd.f32 %v5156, %v2928
        %v5189 = vadd.f32 %v5157, %v2916
        %v5190 = vadd.f32 %v5158, %v2920
        %v5191 = vadd.f32 %v5159, %v2924
        %v5192 = vadd.f32 %v5160, %v2928
        %v5193 = vadd.f32 %v5161, %v2916
        %v5194 = vadd.f32 %v5162, %v2920
        %v5195 = vadd.f32 %v5163, %v2924
        %v5196 = vadd.f32 %v5164, %v2928
        %v5197 = vxor.u32 %v5165, 2147483648
        %v5198 = vxor.u32 %v5169, 2147483648
        %v5199 = vxor.u32 %v5173, 2147483648
        %v5200 = vxor.u32 %v5177, 2147483648
        %v5201 = vxor.u32 %v5181, 2147483648
        %v5202 = vxor.u32 %v5185, 2147483648
        %v5203 = vxor.u32 %v5189, 2147483648
        %v5204 = vxor.u32 %v5193, 2147483648
        %v5205 = vmul.f32 %v5197, 1.442695
        %v5206 = vpow.pop %v5205
        %v5207 = vmul.f32 %v5198, 1.442695
        %v5208 = vpow.pop %v5207
        %v5209 = vmul.f32 %v5199, 1.442695
        %v5210 = vpow.pop %v5209
        %v5211 = vmul.f32 %v5200, 1.442695
        %v5212 = vpow.pop %v5211
        %v5213 = vmul.f32 %v5201, 1.442695
        %v5214 = vpow.pop %v5213
        %v5215 = vmul.f32 %v5202, 1.442695
        %v5216 = vpow.pop %v5215
        %v5217 = vmul.f32 %v5203, 1.442695
        %v5218 = vpow.pop %v5217
        %v5219 = vmul.f32 %v5204, 1.442695
        %v5220 = vpow.pop %v5219
        %v5221 = vadd.f32 %v5206, 1.0
        %v5222 = vadd.f32 %v5208, 1.0
        %v5223 = vadd.f32 %v5210, 1.0
        %v5224 = vadd.f32 %v5212, 1.0
        %v5225 = vadd.f32 %v5214, 1.0
        %v5226 = vadd.f32 %v5216, 1.0
        %v5227 = vadd.f32 %v5218, 1.0
        %v5228 = vadd.f32 %v5220, 1.0
        %v5229 = vrcp.pop %v5221
        %v5230 = vmul.f32 1.0, %v5229
        %v5231 = vrcp.pop %v5222
        %v5232 = vmul.f32 1.0, %v5231
        %v5233 = vrcp.pop %v5223
        %v5234 = vmul.f32 1.0, %v5233
        %v5235 = vrcp.pop %v5224
        %v5236 = vmul.f32 1.0, %v5235
        %v5237 = vrcp.pop %v5225
        %v5238 = vmul.f32 1.0, %v5237
        %v5239 = vrcp.pop %v5226
        %v5240 = vmul.f32 1.0, %v5239
        %v5241 = vrcp.pop %v5227
        %v5242 = vmul.f32 1.0, %v5241
        %v5243 = vrcp.pop %v5228
        %v5244 = vmul.f32 1.0, %v5243
        %v5245 = vxor.u32 %v5166, 2147483648
        %v5246 = vxor.u32 %v5170, 2147483648
        %v5247 = vxor.u32 %v5174, 2147483648
        %v5248 = vxor.u32 %v5178, 2147483648
        %v5249 = vxor.u32 %v5182, 2147483648
        %v5250 = vxor.u32 %v5186, 2147483648
        %v5251 = vxor.u32 %v5190, 2147483648
        %v5252 = vxor.u32 %v5194, 2147483648
        %v5253 = vmul.f32 %v5245, 1.442695
        %v5254 = vpow.pop %v5253
        %v5255 = vmul.f32 %v5246, 1.442695
        %v5256 = vpow.pop %v5255
        %v5257 = vmul.f32 %v5247, 1.442695
        %v5258 = vpow.pop %v5257
        %v5259 = vmul.f32 %v5248, 1.442695
        %v5260 = vpow.pop %v5259
        %v5261 = vmul.f32 %v5249, 1.442695
        %v5262 = vpow.pop %v5261
        %v5263 = vmul.f32 %v5250, 1.442695
        %v5264 = vpow.pop %v5263
        %v5265 = vmul.f32 %v5251, 1.442695
        %v5266 = vpow.pop %v5265
        %v5267 = vmul.f32 %v5252, 1.442695
        %v5268 = vpow.pop %v5267
        %v5269 = vadd.f32 %v5254, 1.0
        %v5270 = vadd.f32 %v5256, 1.0
        %v5271 = vadd.f32 %v5258, 1.0
        %v5272 = vadd.f32 %v5260, 1.0
        %v5273 = vadd.f32 %v5262, 1.0
        %v5274 = vadd.f32 %v5264, 1.0
        %v5275 = vadd.f32 %v5266, 1.0
        %v5276 = vadd.f32 %v5268, 1.0
        %v5277 = vrcp.pop %v5269
        %v5278 = vmul.f32 1.0, %v5277
        %v5279 = vrcp.pop %v5270
        %v5280 = vmul.f32 1.0, %v5279
        %v5281 = vrcp.pop %v5271
        %v5282 = vmul.f32 1.0, %v5281
        %v5283 = vrcp.pop %v5272
        %v5284 = vmul.f32 1.0, %v5283
        %v5285 = vrcp.pop %v5273
        %v5286 = vmul.f32 1.0, %v5285
        %v5287 = vrcp.pop %v5274
        %v5288 = vmul.f32 1.0, %v5287
        %v5289 = vrcp.pop %v5275
        %v5290 = vmul.f32 1.0, %v5289
        %v5291 = vrcp.pop %v5276
        %v5292 = vmul.f32 1.0, %v5291
        %v5293 = vmul.f32 %v5230, %v5168
        %v5294 = vmul.f32 %v5232, %v5172
        %v5295 = vmul.f32 %v5234, %v5176
        %v5296 = vmul.f32 %v5236, %v5180
        %v5297 = vmul.f32 %v5238, %v5184
        %v5298 = vmul.f32 %v5240, %v5188
        %v5299 = vmul.f32 %v5242, %v5192
        %v5300 = vmul.f32 %v5244, %v5196
        %v5301 = vadd.f32 %v5167, %v5293
        %v5302 = vadd.f32 %v5171, %v5294
        %v5303 = vadd.f32 %v5175, %v5295
        %v5304 = vadd.f32 %v5179, %v5296
        %v5305 = vadd.f32 %v5183, %v5297
        %v5306 = vadd.f32 %v5187, %v5298
        %v5307 = vadd.f32 %v5191, %v5299
        %v5308 = vadd.f32 %v5195, %v5300
        %v5309 = vtanh.pop %v5301
        %v5310 = vtanh.pop %v5302
        %v5311 = vtanh.pop %v5303
        %v5312 = vtanh.pop %v5304
        %v5313 = vtanh.pop %v5305
        %v5314 = vtanh.pop %v5306
        %v5315 = vtanh.pop %v5307
        %v5316 = vtanh.pop %v5308
        %v5317 = vsub.f32 %v3101, %v5309
        %v5318 = vsub.f32 %v3102, %v5310
        %v5319 = vsub.f32 %v3103, %v5311
        %v5320 = vsub.f32 %v3104, %v5312
        %v5321 = vsub.f32 %v3105, %v5313
        %v5322 = vsub.f32 %v3106, %v5314
        %v5323 = vsub.f32 %v3107, %v5315
        %v5324 = vsub.f32 %v3108, %v5316
        %v5325 = vmul.f32 %v5278, %v5317
        %v5326 = vmul.f32 %v5280, %v5318
        %v5327 = vmul.f32 %v5282, %v5319
        %v5328 = vmul.f32 %v5284, %v5320
        %v5329 = vmul.f32 %v5286, %v5321
        %v5330 = vmul.f32 %v5288, %v5322
        %v5331 = vmul.f32 %v5290, %v5323
        %v5332 = vmul.f32 %v5292, %v5324
        %v5333 = vadd.f32 %v5309, %v5325
        %v5334 = vadd.f32 %v5310, %v5326
        %v5335 = vadd.f32 %v5311, %v5327
        %v5336 = vadd.f32 %v5312, %v5328
        %v5337 = vadd.f32 %v5313, %v5329
        %v5338 = vadd.f32 %v5314, %v5330
        %v5339 = vadd.f32 %v5315, %v5331
        %v5340 = vadd.f32 %v5316, %v5332
        %5341 = vst [vmem:[%s510] sm:$0xff] %v5333
        %5342 = vst [vmem:[%s510 + $0x8] sm:$0xff] %v5334
        %5343 = vst [vmem:[%s510 + $0x10] sm:$0xff] %v5335
        %5344 = vst [vmem:[%s510 + $0x18] sm:$0xff] %v5336
        %5345 = vst [vmem:[%s510 + $0x20] sm:$0xff] %v5337
        %5346 = vst [vmem:[%s510 + $0x28] sm:$0xff] %v5338
        %5347 = vst [vmem:[%s510 + $0x30] sm:$0xff] %v5339
        %5348 = vst [vmem:[%s510 + $0x38] sm:$0xff] %v5340
        %s5349 = sand.u32 %s325, 1
        %s5350 = scalar_lea.sflag [#allocation4], %s5349
        %s5351 = sand.u32 %s325, 1
        %s5352 = smul.addr %s5351, 64
        %s5353 = scalar_lea.vmem [#allocation8], %s5352
        // Predicated region
        $region85: #{tpu_custom_call.1} parent=71 // pred_check
          %p5354 = pneg %p335
        $region86: #{tpu_custom_call.1} parent=71 // pred_check_branch
          %5356 = sbr.rel (%p5354) target = $region88
        $region87: #{tpu_custom_call.1} parent=71 // pred_region
          %s5357 = smul.u32 8, %s29
          %s5359 = ssub.s32 1024, 1024
          %5360 = vsyncadd %s5350, %s5359
          %s5361 = smul.addr %s5357, 128
          %s5362 = scalar_lea.hbm %s13, %s5361
          %s5363 = sshll.u32 %s5353, 4
          %s5364 = int_to_ptr.vmem [resolvable:$true] %s5363
          %5369 = dma.vmem_to_hbm [thread:$0]  %s5364, 1024, %s5362, %s5350, 128, 128, 8
        $region88: #{tpu_custom_call.1} parent=71 // pred_fallthru
          _
      $region72: #{tpu_custom_call.1} parent=5 // pred_fallthru
        _
      %p5370 = scmp.le.s32.totalorder 2, %s24
      // Predicated region
      $region89: #{tpu_custom_call.1} parent=5 // pred_check
        %p5371 = pneg %p5370
      $region90: #{tpu_custom_call.1} parent=5 // pred_check_branch
        %5373 = sbr.rel (%p5371) target = $region92
      $region91: #{tpu_custom_call.1} parent=5 // pred_region
        %s5374 = ssub.s32 %s24, 2
        // Predicated region
        $region93: #{tpu_custom_call.1} parent=91 // pred_check
          %p5375 = pneg %p341
        $region94: #{tpu_custom_call.1} parent=91 // pred_check_branch
          %5377 = sbr.rel (%p5375) target = $region96
        $region95: #{tpu_custom_call.1} parent=91 // pred_region
          %s5378 = sand.u32 %s326, 1
          %s5379 = scalar_lea.sflag [#allocation4], %s5378
          %s5380 = sand.u32 %s326, 1
          %s5381 = smul.addr %s5380, 64
          %s5382 = scalar_lea.vmem [#allocation8], %s5381
          %5383 = dma.done %s5379, 1024
        $region96: #{tpu_custom_call.1} parent=91 // pred_fallthru
          _
      $region92: #{tpu_custom_call.1} parent=5 // pred_fallthru
        _
    $region6: #{tpu_custom_call.1} parent=1 // loop_footer
      %s28 = sadd.s32 1, %s24
    $region7: #{tpu_custom_call.1} parent=1 // loop_footer_branch
      %23 = sbr.rel target = $region3
    $region8: #{tpu_custom_call.1} parent=1 // loop_exit
      _
    %5384 = vsyncpa [#allocation3], 1
    %s5385 = scalar_lea.sflag [#allocation3], 1
    %5386 = vsyncpa %s5385, 1
    %5387 = vsyncpa [#allocation6], 1
    %5388 = vsyncpa [#allocation4], 1
    %s5389 = scalar_lea.sflag [#allocation4], 1
    %5390 = vsyncpa %s5389, 1

</llo_original>
